<compile_context>
chip_gen: v7x
topology: tpu7x:2x2x1
jax: 0.10.0
libtpu: 0.0.40
codegen_flags: <defaults>
</compile_context>

<pallas_src>
import jax
import jax.numpy as jnp
from jax.experimental import pallas as pl
from jax.experimental.pallas import tpu as pltpu

EPS = 1e-5


def conv_bn_add_kernel(x_ref, w_ref, skip_ref, gb_ref, o_ref):
    # x_ref:    (Cin, R)   f32, resident across all grid steps (constant index map)
    # w_ref:    (tc, Cin)  f32 tile of the 1x1 conv weight (rows = out channels)
    # skip_ref: (tc, R)    f32 residual tile (x169)
    # gb_ref:   (Cout, 2)  f32, resident; column 0 = gamma, column 1 = beta
    # o_ref:    (tc, R)    f32 output tile
    tc = w_ref.shape[0]
    j = pl.program_id(0)

    # bf16 MXU inputs (cast in-kernel: no extra wrapper HBM pass), f32 accumulation.
    xb = x_ref[...].astype(jnp.bfloat16)
    wb = w_ref[...].astype(jnp.bfloat16)
    y = jnp.dot(wb, xb, preferred_element_type=jnp.float32)        # (tc, R)

    # BatchNorm (training mode): per-channel batch stats over N*H*W, biased variance.
    # Two-pass (centered) variance: free VPU work on this memory-bound kernel,
    # better conditioned than E[y^2] - E[y]^2.
    r = y.shape[1]
    inv_r = 1.0 / r
    mean = jnp.sum(y, axis=1, keepdims=True) * inv_r               # (tc, 1)
    centered = y - mean
    var = jnp.sum(centered * centered, axis=1, keepdims=True) * inv_r
    inv_std = jax.lax.rsqrt(var + EPS)                             # (tc, 1)

    # Slice this step's gamma/beta out of the resident (Cout, 2) block.
    start = pl.multiple_of(j * tc, tc)
    gb = gb_ref[pl.ds(start, tc), :]                               # (tc, 2)
    scale = gb[:, 0:1] * inv_std                                   # gamma * inv_std
    bias = gb[:, 1:2]                                              # beta

    # affine BN + residual add
    o_ref[...] = skip_ref[...] + centered * scale + bias


def conv_bn_add(x181_nchw, x169_nchw, w_oihw, gamma, beta, *, tc=448):
    """Fused Conv2d(1x1, no bias) -> BatchNorm2d(train) -> add.  NCHW in / NCHW out."""
    N, Cin, H, W = x181_nchw.shape
    Cout = w_oihw.shape[0]
    R = N * H * W
    assert Cout % tc == 0 and tc % 8 == 0, "Cout must be divisible by the channel tile"

    # NCHW -> (C, N*H*W).  For N == 1 this is a free dim-1 move.
    def to_cr(t):
        n, c, h, w = t.shape
        return jnp.transpose(t, (1, 0, 2, 3)).reshape(c, n * h * w)

    x = to_cr(x181_nchw).astype(jnp.float32)          # (Cin, R)   f32 (cast to bf16 in-kernel)
    skip = to_cr(x169_nchw).astype(jnp.float32)       # (Cout, R)  f32
    w = w_oihw.reshape(Cout, Cin).astype(jnp.float32) # (Cout, Cin) f32
    gb = jnp.stack([gamma.astype(jnp.float32),
                    beta.astype(jnp.float32)], axis=1)  # (Cout, 2)

    grid = (Cout // tc,)

    cost = pl.CostEstimate(
        flops=2 * R * Cin * Cout,
        transcendentals=Cout,  # one rsqrt per output channel
        bytes_accessed=(x.size + w.size + skip.size + gb.size + Cout * R) * 4,
    )

    out_cr = pl.pallas_call(
        conv_bn_add_kernel,
        out_shape=jax.ShapeDtypeStruct((Cout, R), jnp.float32),
        grid=grid,
        in_specs=[
            pl.BlockSpec((Cin, R), lambda j: (0, 0)),    # x: resident, single DMA
            pl.BlockSpec((tc, Cin), lambda j: (j, 0)),   # weight row tile
            pl.BlockSpec((tc, R), lambda j: (j, 0)),     # residual row tile
            pl.BlockSpec((Cout, 2), lambda j: (0, 0)),   # gamma/beta: resident, single DMA
        ],
        out_specs=pl.BlockSpec((tc, R), lambda j: (j, 0)),
        compiler_params=pltpu.CompilerParams(
            dimension_semantics=("parallel",),           # 1 channel tile per v7x TensorCore
        ),
        cost_estimate=cost,
    )(x, w, skip, gb)

    # (Cout, N*H*W) -> NCHW  (free for N == 1)
    return jnp.transpose(out_cr.reshape(Cout, N, H, W), (1, 0, 2, 3))


def _reference(x181_nchw, x169_nchw, w_oihw, gamma, beta):
    """Pure-JAX f32 reference matching PyTorch forward semantics (training-mode BN)."""
    N, Cin, H, W = x181_nchw.shape
    Cout = w_oihw.shape[0]
    w = w_oihw.reshape(Cout, Cin)
    x = jnp.transpose(x181_nchw, (1, 0, 2, 3)).reshape(Cin, N * H * W)
    y = w @ x                                               # (Cout, R)
    mean = jnp.mean(y, axis=1, keepdims=True)
    var = jnp.mean((y - mean) ** 2, axis=1, keepdims=True)  # biased variance
    y_hat = (y - mean) * jax.lax.rsqrt(var + EPS)
    out = y_hat * gamma.reshape(Cout, 1) + beta.reshape(Cout, 1)
    out = jnp.transpose(out.reshape(Cout, N, H, W), (1, 0, 2, 3))
    return x169_nchw + out


if __name__ == "__main__":
    # Shapes from the module: 1x1 conv 896->896 on (1, 896, 14, 14) inputs.
    N, C, H, W = 1, 896, 14, 14

    key = jax.random.PRNGKey(0)
    k1, k2, k3, k4, k5 = jax.random.split(key, 5)

    x181 = jax.random.normal(k1, (N, C, H, W), dtype=jnp.float32)
    x169 = jax.random.normal(k2, (N, C, H, W), dtype=jnp.float32)

    # Deterministic synthetic parameters (not a checkpoint load).
    w_oihw = jax.random.normal(k3, (C, C, 1, 1), dtype=jnp.float32) * (1.0 / jnp.sqrt(C))
    gamma = 1.0 + 0.1 * jax.random.normal(k4, (C,), dtype=jnp.float32)
    beta = 0.1 * jax.random.normal(k5, (C,), dtype=jnp.float32)

    out = conv_bn_add(x181, x169, w_oihw, gamma, beta)
    out = jax.block_until_ready(out)

    assert out.shape == (N, C, H, W)
    assert jnp.all(jnp.isfinite(out))

    # Loose tolerance: bf16 MXU inputs vs. f32 reference.
    ref = jax.block_until_ready(_reference(x181, x169, w_oihw, gamma, beta))
    max_err = float(jnp.max(jnp.abs(out - ref)))
    assert max_err < 1e-1, f"max abs error {max_err} too large"

    print("KERNEL_OK")
</pallas_src>

<mosaic_0001>
module attributes {stable_mosaic.version = 11 : i64} {
  func.func @conv_bn_add_kernel(%arg0: i32, %arg1: memref<896x196xf32, #tpu.memory_space<vmem>>, %arg2: memref<448x896xf32, #tpu.memory_space<vmem>>, %arg3: memref<448x196xf32, #tpu.memory_space<vmem>>, %arg4: memref<896x2xf32, #tpu.memory_space<vmem>>, %arg5: memref<448x196xf32, #tpu.memory_space<vmem>>) attributes {dimension_semantics = [#tpu.dimension_semantics<parallel>], iteration_bounds = array<i64: 2>, scalar_prefetch = 0 : i64, scratch_operands = 0 : i64, tpu.core_type = #tpu.core_type<tc>, window_params = [{pipeline_mode = #tpu.pipeline_mode<synchronous>, transform_indices = @transform_0, window_bounds = array<i64: 896, 196>}, {transform_indices = @transform_1, window_bounds = array<i64: 448, 896>}, {transform_indices = @transform_2, window_bounds = array<i64: 448, 196>}, {pipeline_mode = #tpu.pipeline_mode<synchronous>, transform_indices = @transform_3, window_bounds = array<i64: 896, 2>}, {transform_indices = @transform_4, window_bounds = array<i64: 448, 196>}]} {
    %c0 = arith.constant 0 : index
    %c0_0 = arith.constant 0 : index
    %0 = vector.load %arg1[%c0, %c0_0] : memref<896x196xf32, #tpu.memory_space<vmem>>, vector<896x196xf32>
    %1 = arith.truncf %0 : vector<896x196xf32> to vector<896x196xbf16>
    %c0_1 = arith.constant 0 : index
    %c0_2 = arith.constant 0 : index
    %2 = vector.load %arg2[%c0_1, %c0_2] : memref<448x896xf32, #tpu.memory_space<vmem>>, vector<448x896xf32>
    %3 = arith.truncf %2 : vector<448x896xf32> to vector<448x896xbf16>
    %cst = arith.constant dense<0.000000e+00> : vector<448x196xf32>
    %4 = tpu.matmul %3, %1, %cst {dimension_numbers = #tpu.dot_dimension_numbers<[1], [0], [0], [1], [0, 0, 1, 1], [], []>} : vector<448x896xbf16>, vector<896x196xbf16>, vector<448x196xf32> -> vector<448x196xf32>
    %cst_3 = arith.constant dense<0.000000e+00> : vector<448xf32>
    %5 = vector.multi_reduction <add>, %4, %cst_3 [1] : vector<448x196xf32> to vector<448xf32>
    %6 = vector.shape_cast %5 : vector<448xf32> to vector<448x1xf32>
    %cst_4 = arith.constant 0.00510204071 : f32
    %7 = vector.broadcast %cst_4 : f32 to vector<448x1xf32>
    %8 = arith.mulf %6, %7 : vector<448x1xf32>
    %9 = vector.broadcast %8 : vector<448x1xf32> to vector<448x196xf32>
    %10 = arith.subf %4, %9 : vector<448x196xf32>
    %11 = arith.mulf %10, %10 : vector<448x196xf32>
    %cst_5 = arith.constant dense<0.000000e+00> : vector<448xf32>
    %12 = vector.multi_reduction <add>, %11, %cst_5 [1] : vector<448x196xf32> to vector<448xf32>
    %13 = vector.shape_cast %12 : vector<448xf32> to vector<448x1xf32>
    %cst_6 = arith.constant 0.00510204071 : f32
    %14 = vector.broadcast %cst_6 : f32 to vector<448x1xf32>
    %15 = arith.mulf %13, %14 : vector<448x1xf32>
    %cst_7 = arith.constant 9.99999974E-6 : f32
    %16 = vector.broadcast %cst_7 : f32 to vector<448x1xf32>
    %17 = arith.addf %15, %16 : vector<448x1xf32>
    %18 = math.rsqrt %17 : vector<448x1xf32>
    %c448_i32 = arith.constant 448 : i32
    %19 = arith.muli %arg0, %c448_i32 : i32
    %20 = tpu.assume_multiple %19, 448 : i32
    %21 = arith.index_cast %20 : i32 to index
    %c0_8 = arith.constant 0 : index
    %22 = vector.load %arg4[%21, %c0_8] : memref<896x2xf32, #tpu.memory_space<vmem>>, vector<448x2xf32>
    %23 = vector.extract_strided_slice %22 {offsets = [0, 0], sizes = [448, 1], strides = [1, 1]} : vector<448x2xf32> to vector<448x1xf32>
    %24 = arith.mulf %23, %18 : vector<448x1xf32>
    %25 = vector.extract_strided_slice %22 {offsets = [0, 1], sizes = [448, 1], strides = [1, 1]} : vector<448x2xf32> to vector<448x1xf32>
    %c0_9 = arith.constant 0 : index
    %c0_10 = arith.constant 0 : index
    %26 = vector.load %arg3[%c0_9, %c0_10] : memref<448x196xf32, #tpu.memory_space<vmem>>, vector<448x196xf32>
    %27 = vector.broadcast %24 : vector<448x1xf32> to vector<448x196xf32>
    %28 = arith.mulf %10, %27 : vector<448x196xf32>
    %29 = arith.addf %26, %28 : vector<448x196xf32>
    %30 = vector.broadcast %25 : vector<448x1xf32> to vector<448x196xf32>
    %31 = arith.addf %29, %30 : vector<448x196xf32>
    %c0_11 = arith.constant 0 : index
    %c0_12 = arith.constant 0 : index
    %32 = vector.load %arg5[%c0_11, %c0_12] : memref<448x196xf32, #tpu.memory_space<vmem>>, vector<448x196xf32>
    tpu.vector_store %arg5[%c0_11, %c0_12], %31 {strides = array<i32>} : memref<448x196xf32, #tpu.memory_space<vmem>>, vector<448x196xf32>,
    return
  }
  func.func @transform_0(%arg0: i32) -> (i32, i32) {
    %c0_i32 = arith.constant 0 : i32
    %c0_i32_0 = arith.constant 0 : i32
    %c0_i32_1 = arith.constant 0 : i32
    return %c0_i32, %c0_i32_0 : i32, i32
  }
  func.func @transform_1(%arg0: i32) -> (i32, i32) {
    %c0_i32 = arith.constant 0 : i32
    %c0_i32_0 = arith.constant 0 : i32
    return %arg0, %c0_i32 : i32, i32
  }
  func.func @transform_2(%arg0: i32) -> (i32, i32) {
    %c0_i32 = arith.constant 0 : i32
    %c0_i32_0 = arith.constant 0 : i32
    return %arg0, %c0_i32 : i32, i32
  }
  func.func @transform_3(%arg0: i32) -> (i32, i32) {
    %c0_i32 = arith.constant 0 : i32
    %c0_i32_0 = arith.constant 0 : i32
    %c0_i32_1 = arith.constant 0 : i32
    return %c0_i32, %c0_i32_0 : i32, i32
  }
  func.func @transform_4(%arg0: i32) -> (i32, i32) {
    %c0_i32 = arith.constant 0 : i32
    %c0_i32_0 = arith.constant 0 : i32
    return %arg0, %c0_i32 : i32, i32
  }
}

</mosaic_0001>

<llo_original>
// kernel: tpu_custom_call.1
$region0: #{tpu_custom_call.1}
  #allocation0 [shape = 'u32[]', space=smem, size = 0x4, offset = 0x4, fixed_abs, tag = 'smem constant byte address 0x4 - core index']
  #allocation1 [shape = 'u32[144,128]{1,0:T(1,128)}', space=vmem, size = 0x12000, scoped, tag = 'internal scratch']
  %s0 = inlined_call_operand.vmem [shape: f32[896,196], index: 0, kind: input, shape index: {}]
  %s1 = inlined_call_operand.vmem [shape: f32[896,896], index: 1, kind: input, shape index: {}]
  %s2 = inlined_call_operand.vmem [shape: f32[896,196], index: 2, kind: input, shape index: {}]
  %s3 = inlined_call_operand.vmem [shape: f32[896,2], index: 3, kind: input, shape index: {}]
  %s4 = inlined_call_operand.vmem [shape: f32[896,196], index: 4, kind: output, shape index: {}]
  %s5 = sld [smem:[#allocation0]]
  $region49: #{tpu_custom_call.1} parent=0
    _
  %s7 = ssub.s32 1, %s5
  %s8 = scalar_select 0, %s7, %s5
  loop: start=0, step=1, limit=4
  $region2: #{tpu_custom_call.1} parent=0 // loop_pre_header
    _
  $region3: #{tpu_custom_call.1} parent=0 // loop_header
    %s10 = sphi 0, %s14
    %p11 = scmp.ge.s32.totalorder %s10, 4
    %s18 = sphi 0, %s18
    %s20 = sphi 0, %s18
    %s21 = sphi 0, %s20
    %s35 = sphi 0, %s21
    %s41 = sphi 0, %s43
    %s44 = sphi 0, %s41
    %s45 = sphi 0, %s44
    %s61 = sphi 0, %s45
    %s67 = sphi 0, %s69
    %s70 = sphi 0, %s67
    %s71 = sphi 0, %s70
    %s87 = sphi 0, %s71
    %s91 = sphi 0, %s91
    %s93 = sphi 0, %s91
    %s94 = sphi 0, %s93
    %s108 = sphi 0, %s94
    %s114 = sphi 0, %s116
    %s117 = sphi 0, %s114
    %s118 = sphi 0, %s117
    %s134 = sphi 0, %s118
  $region4: #{tpu_custom_call.1} parent=0 // loop_header_branch
    %13 = sbr.rel (%p11) target = $region8
  $region5: #{tpu_custom_call.1} parent=0 // loop_body
    %s15 = ssub.s32 %s10, 1
    %s16 = ssub.s32 %s10, 2
    %s17 = sadd.s32 %s10, 1
    %s19 = sadd.s32 %s18, 1
    %p22 = scmp.eq.s32.totalorder %s10, 1
    %p23 = scmp.ne.s32.totalorder %s18, %s20
    %p24 = scmp.eq.s32.totalorder %s10, 0
    %p25 = por %p23, %p24
    %p26 = scmp.ne.s32.totalorder %s18, %s20
    %p27 = scmp.eq.s32.totalorder %s15, 1
    %p28 = por %p26, %p27
    %p29 = scmp.ne.s32.totalorder %s20, %s21
    %p30 = scmp.eq.s32.totalorder %s15, 0
    %p31 = por %p29, %p30
    %p32 = scmp.ne.s32.totalorder %s20, %s21
    %p33 = scmp.eq.s32.totalorder %s16, 1
    %p34 = por %p32, %p33
    %p36 = scmp.ne.s32.totalorder %s21, %s35
    %p37 = scmp.eq.s32.totalorder %s16, 0
    %p38 = por %p36, %p37
    %s39 = ssub.s32 %s10, %s17
    %p40 = scmp.eq.s32.totalorder %s39, 0
    %s42 = sadd.s32 %s41, 1
    %s43 = scalar_select %p40, %s41, %s42
    %p46 = pneg %p40
    %p47 = scmp.eq.s32.totalorder %s10, 1
    %p48 = por %p46, %p47
    %p49 = scmp.ne.s32.totalorder %s41, %s44
    %p50 = scmp.eq.s32.totalorder %s10, 0
    %p51 = por %p49, %p50
    %p52 = scmp.ne.s32.totalorder %s41, %s44
    %p53 = scmp.eq.s32.totalorder %s15, 1
    %p54 = por %p52, %p53
    %p55 = scmp.ne.s32.totalorder %s44, %s45
    %p56 = scmp.eq.s32.totalorder %s15, 0
    %p57 = por %p55, %p56
    %p58 = scmp.ne.s32.totalorder %s44, %s45
    %p59 = scmp.eq.s32.totalorder %s16, 1
    %p60 = por %p58, %p59
    %p62 = scmp.ne.s32.totalorder %s45, %s61
    %p63 = scmp.eq.s32.totalorder %s16, 0
    %p64 = por %p62, %p63
    %s65 = ssub.s32 %s10, %s17
    %p66 = scmp.eq.s32.totalorder %s65, 0
    %s68 = sadd.s32 %s67, 1
    %s69 = scalar_select %p66, %s67, %s68
    %p72 = pneg %p66
    %p73 = scmp.eq.s32.totalorder %s10, 1
    %p74 = por %p72, %p73
    %p75 = scmp.ne.s32.totalorder %s67, %s70
    %p76 = scmp.eq.s32.totalorder %s10, 0
    %p77 = por %p75, %p76
    %p78 = scmp.ne.s32.totalorder %s67, %s70
    %p79 = scmp.eq.s32.totalorder %s15, 1
    %p80 = por %p78, %p79
    %p81 = scmp.ne.s32.totalorder %s70, %s71
    %p82 = scmp.eq.s32.totalorder %s15, 0
    %p83 = por %p81, %p82
    %p84 = scmp.ne.s32.totalorder %s70, %s71
    %p85 = scmp.eq.s32.totalorder %s16, 1
    %p86 = por %p84, %p85
    %p88 = scmp.ne.s32.totalorder %s71, %s87
    %p89 = scmp.eq.s32.totalorder %s16, 0
    %p90 = por %p88, %p89
    %s92 = sadd.s32 %s91, 1
    %p95 = scmp.eq.s32.totalorder %s10, 1
    %p96 = scmp.ne.s32.totalorder %s91, %s93
    %p97 = scmp.eq.s32.totalorder %s10, 0
    %p98 = por %p96, %p97
    %p99 = scmp.ne.s32.totalorder %s91, %s93
    %p100 = scmp.eq.s32.totalorder %s15, 1
    %p101 = por %p99, %p100
    %p102 = scmp.ne.s32.totalorder %s93, %s94
    %p103 = scmp.eq.s32.totalorder %s15, 0
    %p104 = por %p102, %p103
    %p105 = scmp.ne.s32.totalorder %s93, %s94
    %p106 = scmp.eq.s32.totalorder %s16, 1
    %p107 = por %p105, %p106
    %p109 = scmp.ne.s32.totalorder %s94, %s108
    %p110 = scmp.eq.s32.totalorder %s16, 0
    %p111 = por %p109, %p110
    %s112 = ssub.s32 %s10, %s17
    %p113 = scmp.eq.s32.totalorder %s112, 0
    %s115 = sadd.s32 %s114, 1
    %s116 = scalar_select %p113, %s114, %s115
    %p119 = pneg %p113
    %p120 = scmp.eq.s32.totalorder %s10, 1
    %p121 = por %p119, %p120
    %p122 = scmp.ne.s32.totalorder %s114, %s117
    %p123 = scmp.eq.s32.totalorder %s10, 0
    %p124 = por %p122, %p123
    %p125 = scmp.ne.s32.totalorder %s114, %s117
    %p126 = scmp.eq.s32.totalorder %s15, 1
    %p127 = por %p125, %p126
    %p128 = scmp.ne.s32.totalorder %s117, %s118
    %p129 = scmp.eq.s32.totalorder %s15, 0
    %p130 = por %p128, %p129
    %p131 = scmp.ne.s32.totalorder %s117, %s118
    %p132 = scmp.eq.s32.totalorder %s16, 1
    %p133 = por %p131, %p132
    %p135 = scmp.ne.s32.totalorder %s118, %s134
    %p136 = scmp.eq.s32.totalorder %s16, 0
    %p137 = por %p135, %p136
    %p138 = scmp.le.s32.totalorder 1, %s10
    %p139 = scmp.lt.s32.totalorder %s10, 3
    %p140 = pnand %p138, %p139
    %p141 = pneg %p140
    // Predicated region
    $region9: #{tpu_custom_call.1} parent=5 // pred_check
      _
    $region10: #{tpu_custom_call.1} parent=5 // pred_check_branch
      %143 = sbr.rel (%p140) target = $region12
    $region11: #{tpu_custom_call.1} parent=5 // pred_region
      %s144 = ssub.s32 %s10, 1
      // Predicated region
      $region13: #{tpu_custom_call.1} parent=11 // pred_check
        %p145 = pneg %p31
      $region14: #{tpu_custom_call.1} parent=11 // pred_check_branch
        %147 = sbr.rel (%p145) target = $region16
      $region15: #{tpu_custom_call.1} parent=11 // pred_region
        _
      $region16: #{tpu_custom_call.1} parent=11 // pred_fallthru
        _
      // Predicated region
      $region17: #{tpu_custom_call.1} parent=11 // pred_check
        %p148 = pneg %p104
      $region18: #{tpu_custom_call.1} parent=11 // pred_check_branch
        %150 = sbr.rel (%p148) target = $region20
      $region19: #{tpu_custom_call.1} parent=11 // pred_region
        _
      $region20: #{tpu_custom_call.1} parent=11 // pred_fallthru
        _
    $region12: #{tpu_custom_call.1} parent=5 // pred_fallthru
      _
    %p151 = scmp.lt.s32.totalorder %s10, 2
    // Predicated region
    $region21: #{tpu_custom_call.1} parent=5 // pred_check
      %p152 = pneg %p151
    $region22: #{tpu_custom_call.1} parent=5 // pred_check_branch
      %154 = sbr.rel (%p152) target = $region24
    $region23: #{tpu_custom_call.1} parent=5 // pred_region
      // Predicated region
      $region25: #{tpu_custom_call.1} parent=23 // pred_check
        %p155 = pneg %p51
      $region26: #{tpu_custom_call.1} parent=23 // pred_check_branch
        %157 = sbr.rel (%p155) target = $region28
      $region27: #{tpu_custom_call.1} parent=23 // pred_region
        %s158 = smul.u32 56, %s10
        %p159 = scmp.lt.s32.totalorder %s158, 111
        %s160 = scalar_select %p159, %s158, 111
        %s161 = smul.addr %s160, 7
        %s162 = smul.addr %s161, 8
        %s163 = scalar_lea.vmem %s1, %s162
        %s164 = smul.u32 56, %s10
      $region28: #{tpu_custom_call.1} parent=23 // pred_fallthru
        _
      // Predicated region
      $region29: #{tpu_custom_call.1} parent=23 // pred_check
        %p165 = pneg %p77
      $region30: #{tpu_custom_call.1} parent=23 // pred_check_branch
        %167 = sbr.rel (%p165) target = $region32
      $region31: #{tpu_custom_call.1} parent=23 // pred_region
        %s168 = smul.u32 56, %s10
        %p169 = scmp.lt.s32.totalorder %s168, 111
        %s170 = scalar_select %p169, %s168, 111
        %s171 = smul.addr %s170, 2
        %s172 = smul.addr %s171, 8
        %s173 = scalar_lea.vmem %s2, %s172
        %s174 = smul.u32 56, %s10
      $region32: #{tpu_custom_call.1} parent=23 // pred_fallthru
        _
    $region24: #{tpu_custom_call.1} parent=5 // pred_fallthru
      _
    %p175 = scmp.le.s32.totalorder 1, %s10
    %p176 = scmp.lt.s32.totalorder %s10, 3
    %p177 = pnand %p175, %p176
    %p178 = pneg %p177
    // Predicated region
    $region33: #{tpu_custom_call.1} parent=5 // pred_check
      _
    $region34: #{tpu_custom_call.1} parent=5 // pred_check_branch
      %180 = sbr.rel (%p177) target = $region36
    $region35: #{tpu_custom_call.1} parent=5 // pred_region
      %s181 = ssub.s32 %s10, 1
      %p182 = pneg %p31
      %p183 = pneg %p28
      %s184 = smul.u32 56, %s15
      %p185 = scmp.lt.s32.totalorder %s184, 111
      %s186 = scalar_select %p185, %s184, 111
      %s187 = smul.addr %s186, 7
      %s188 = smul.addr %s187, 8
      %s189 = scalar_lea.vmem %s1, %s188
      %p190 = pneg %p57
      %p191 = pneg %p54
      %s192 = smul.u32 56, %s15
      %p193 = scmp.lt.s32.totalorder %s192, 111
      %s194 = scalar_select %p193, %s192, 111
      %s195 = smul.addr %s194, 2
      %s196 = smul.addr %s195, 8
      %s197 = scalar_lea.vmem %s2, %s196
      %p198 = pneg %p83
      %p199 = pneg %p80
      %p200 = pneg %p104
      %p201 = pneg %p101
      %p202 = pneg %p130
      %p203 = pneg %p127
      %s204 = smul.u32 56, %s15
      %p205 = scmp.lt.s32.totalorder %s204, 111
      %s206 = scalar_select %p205, %s204, 111
      %s207 = smul.addr %s206, 2
      %s208 = smul.addr %s207, 8
      %s209 = scalar_lea.vmem %s4, %s208
      %s210 = smul.u32 56, %s15
      %p211 = scmp.lt.s32.totalorder %s210, 111
      %s212 = scalar_select %p211, %s210, 111
      %s213 = smul.addr %s212, 7
      %s214 = smul.addr %s213, 8
      %s215 = scalar_lea.vmem %s1, %s214
      %s216 = smul.u32 56, %s15
      %s217 = smul.u32 56, %s15
      %p218 = scmp.lt.s32.totalorder %s217, 111
      %s219 = scalar_select %p218, %s217, 111
      %s220 = smul.addr %s219, 2
      %s221 = smul.addr %s220, 8
      %s222 = scalar_lea.vmem %s2, %s221
      %s223 = smul.u32 56, %s15
      %s224 = smul.u32 56, %s15
      %p225 = scmp.lt.s32.totalorder %s224, 111
      %s226 = scalar_select %p225, %s224, 111
      %s227 = smul.addr %s226, 2
      %s228 = smul.addr %s227, 8
      %s229 = scalar_lea.vmem %s4, %s228
      %s230 = smul.u32 56, %s15
      %v232 = vld [vmem:[%s0] sm:$0xff]
      %v233 = vld [vmem:[%s0 + $0x8] sm:$0xff]
      %v234 = vld [vmem:[%s0 + $0x10] sm:$0xff]
      %v235 = vld [vmem:[%s0 + $0x18] sm:$0xff]
      %v236 = vld [vmem:[%s0 + $0x20] sm:$0xff]
      %v237 = vld [vmem:[%s0 + $0x28] sm:$0xff]
      %v238 = vld [vmem:[%s0 + $0x30] sm:$0xff]
      %v239 = vld [vmem:[%s0 + $0x38] sm:$0xff]
      %v240 = vld [vmem:[%s0 + $0x40] sm:$0xff]
      %v241 = vld [vmem:[%s0 + $0x48] sm:$0xff]
      %v242 = vld [vmem:[%s0 + $0x50] sm:$0xff]
      %v243 = vld [vmem:[%s0 + $0x58] sm:$0xff]
      %v244 = vld [vmem:[%s0 + $0x60] sm:$0xff]
      %v245 = vld [vmem:[%s0 + $0x68] sm:$0xff]
      %v246 = vld [vmem:[%s0 + $0x70] sm:$0xff]
      %v247 = vld [vmem:[%s0 + $0x78] sm:$0xff]
      %v248 = vld [vmem:[%s0 + $0x80] sm:$0xff]
      %v249 = vld [vmem:[%s0 + $0x88] sm:$0xff]
      %v250 = vld [vmem:[%s0 + $0x90] sm:$0xff]
      %v251 = vld [vmem:[%s0 + $0x98] sm:$0xff]
      %v252 = vld [vmem:[%s0 + $0xa0] sm:$0xff]
      %v253 = vld [vmem:[%s0 + $0xa8] sm:$0xff]
      %v254 = vld [vmem:[%s0 + $0xb0] sm:$0xff]
      %v255 = vld [vmem:[%s0 + $0xb8] sm:$0xff]
      %v256 = vld [vmem:[%s0 + $0xc0] sm:$0xff]
      %v257 = vld [vmem:[%s0 + $0xc8] sm:$0xff]
      %v258 = vld [vmem:[%s0 + $0xd0] sm:$0xff]
      %v259 = vld [vmem:[%s0 + $0xd8] sm:$0xff]
      %v260 = vld [vmem:[%s0 + $0xe0] sm:$0xff]
      %v261 = vld [vmem:[%s0 + $0xe8] sm:$0xff]
      %v262 = vld [vmem:[%s0 + $0xf0] sm:$0xff]
      %v263 = vld [vmem:[%s0 + $0xf8] sm:$0xff]
      %v264 = vld [vmem:[%s0 + $0x100] sm:$0xff]
      %v265 = vld [vmem:[%s0 + $0x108] sm:$0xff]
      %v266 = vld [vmem:[%s0 + $0x110] sm:$0xff]
      %v267 = vld [vmem:[%s0 + $0x118] sm:$0xff]
      %v268 = vld [vmem:[%s0 + $0x120] sm:$0xff]
      %v269 = vld [vmem:[%s0 + $0x128] sm:$0xff]
      %v270 = vld [vmem:[%s0 + $0x130] sm:$0xff]
      %v271 = vld [vmem:[%s0 + $0x138] sm:$0xff]
      %v272 = vld [vmem:[%s0 + $0x140] sm:$0xff]
      %v273 = vld [vmem:[%s0 + $0x148] sm:$0xff]
      %v274 = vld [vmem:[%s0 + $0x150] sm:$0xff]
      %v275 = vld [vmem:[%s0 + $0x158] sm:$0xff]
      %v276 = vld [vmem:[%s0 + $0x160] sm:$0xff]
      %v277 = vld [vmem:[%s0 + $0x168] sm:$0xff]
      %v278 = vld [vmem:[%s0 + $0x170] sm:$0xff]
      %v279 = vld [vmem:[%s0 + $0x178] sm:$0xff]
      %v280 = vld [vmem:[%s0 + $0x180] sm:$0xff]
      %v281 = vld [vmem:[%s0 + $0x188] sm:$0xff]
      %v282 = vld [vmem:[%s0 + $0x190] sm:$0xff]
      %v283 = vld [vmem:[%s0 + $0x198] sm:$0xff]
      %v284 = vld [vmem:[%s0 + $0x1a0] sm:$0xff]
      %v285 = vld [vmem:[%s0 + $0x1a8] sm:$0xff]
      %v286 = vld [vmem:[%s0 + $0x1b0] sm:$0xff]
      %v287 = vld [vmem:[%s0 + $0x1b8] sm:$0xff]
      %v288 = vld [vmem:[%s0 + $0x1c0] sm:$0xff]
      %v289 = vld [vmem:[%s0 + $0x1c8] sm:$0xff]
      %v290 = vld [vmem:[%s0 + $0x1d0] sm:$0xff]
      %v291 = vld [vmem:[%s0 + $0x1d8] sm:$0xff]
      %v292 = vld [vmem:[%s0 + $0x1e0] sm:$0xff]
      %v293 = vld [vmem:[%s0 + $0x1e8] sm:$0xff]
      %v294 = vld [vmem:[%s0 + $0x1f0] sm:$0xff]
      %v295 = vld [vmem:[%s0 + $0x1f8] sm:$0xff]
      %v296 = vld [vmem:[%s0 + $0x200] sm:$0xff]
      %v297 = vld [vmem:[%s0 + $0x208] sm:$0xff]
      %v298 = vld [vmem:[%s0 + $0x210] sm:$0xff]
      %v299 = vld [vmem:[%s0 + $0x218] sm:$0xff]
      %v300 = vld [vmem:[%s0 + $0x220] sm:$0xff]
      %v301 = vld [vmem:[%s0 + $0x228] sm:$0xff]
      %v302 = vld [vmem:[%s0 + $0x230] sm:$0xff]
      %v303 = vld [vmem:[%s0 + $0x238] sm:$0xff]
      %v304 = vld [vmem:[%s0 + $0x240] sm:$0xff]
      %v305 = vld [vmem:[%s0 + $0x248] sm:$0xff]
      %v306 = vld [vmem:[%s0 + $0x250] sm:$0xff]
      %v307 = vld [vmem:[%s0 + $0x258] sm:$0xff]
      %v308 = vld [vmem:[%s0 + $0x260] sm:$0xff]
      %v309 = vld [vmem:[%s0 + $0x268] sm:$0xff]
      %v310 = vld [vmem:[%s0 + $0x270] sm:$0xff]
      %v311 = vld [vmem:[%s0 + $0x278] sm:$0xff]
      %v312 = vld [vmem:[%s0 + $0x280] sm:$0xff]
      %v313 = vld [vmem:[%s0 + $0x288] sm:$0xff]
      %v314 = vld [vmem:[%s0 + $0x290] sm:$0xff]
      %v315 = vld [vmem:[%s0 + $0x298] sm:$0xff]
      %v316 = vld [vmem:[%s0 + $0x2a0] sm:$0xff]
      %v317 = vld [vmem:[%s0 + $0x2a8] sm:$0xff]
      %v318 = vld [vmem:[%s0 + $0x2b0] sm:$0xff]
      %v319 = vld [vmem:[%s0 + $0x2b8] sm:$0xff]
      %v320 = vld [vmem:[%s0 + $0x2c0] sm:$0xff]
      %v321 = vld [vmem:[%s0 + $0x2c8] sm:$0xff]
      %v322 = vld [vmem:[%s0 + $0x2d0] sm:$0xff]
      %v323 = vld [vmem:[%s0 + $0x2d8] sm:$0xff]
      %v324 = vld [vmem:[%s0 + $0x2e0] sm:$0xff]
      %v325 = vld [vmem:[%s0 + $0x2e8] sm:$0xff]
      %v326 = vld [vmem:[%s0 + $0x2f0] sm:$0xff]
      %v327 = vld [vmem:[%s0 + $0x2f8] sm:$0xff]
      %v328 = vld [vmem:[%s0 + $0x300] sm:$0xff]
      %v329 = vld [vmem:[%s0 + $0x308] sm:$0xff]
      %v330 = vld [vmem:[%s0 + $0x310] sm:$0xff]
      %v331 = vld [vmem:[%s0 + $0x318] sm:$0xff]
      %v332 = vld [vmem:[%s0 + $0x320] sm:$0xff]
      %v333 = vld [vmem:[%s0 + $0x328] sm:$0xff]
      %v334 = vld [vmem:[%s0 + $0x330] sm:$0xff]
      %v335 = vld [vmem:[%s0 + $0x338] sm:$0xff]
      %v336 = vld [vmem:[%s0 + $0x340] sm:$0xff]
      %v337 = vld [vmem:[%s0 + $0x348] sm:$0xff]
      %v338 = vld [vmem:[%s0 + $0x350] sm:$0xff]
      %v339 = vld [vmem:[%s0 + $0x358] sm:$0xff]
      %v340 = vld [vmem:[%s0 + $0x360] sm:$0xff]
      %v341 = vld [vmem:[%s0 + $0x368] sm:$0xff]
      %v342 = vld [vmem:[%s0 + $0x370] sm:$0xff]
      %v343 = vld [vmem:[%s0 + $0x378] sm:$0xff]
      %v344 = vld [vmem:[%s0 + $0x380] sm:$0xff]
      %v345 = vld [vmem:[%s0 + $0x388] sm:$0xff]
      %v346 = vld [vmem:[%s0 + $0x390] sm:$0xff]
      %v347 = vld [vmem:[%s0 + $0x398] sm:$0xff]
      %v348 = vld [vmem:[%s0 + $0x3a0] sm:$0xff]
      %v349 = vld [vmem:[%s0 + $0x3a8] sm:$0xff]
      %v350 = vld [vmem:[%s0 + $0x3b0] sm:$0xff]
      %v351 = vld [vmem:[%s0 + $0x3b8] sm:$0xff]
      %v352 = vld [vmem:[%s0 + $0x3c0] sm:$0xff]
      %v353 = vld [vmem:[%s0 + $0x3c8] sm:$0xff]
      %v354 = vld [vmem:[%s0 + $0x3d0] sm:$0xff]
      %v355 = vld [vmem:[%s0 + $0x3d8] sm:$0xff]
      %v356 = vld [vmem:[%s0 + $0x3e0] sm:$0xff]
      %v357 = vld [vmem:[%s0 + $0x3e8] sm:$0xff]
      %v358 = vld [vmem:[%s0 + $0x3f0] sm:$0xff]
      %v359 = vld [vmem:[%s0 + $0x3f8] sm:$0xff]
      %v360 = vld [vmem:[%s0 + $0x400] sm:$0xff]
      %v361 = vld [vmem:[%s0 + $0x408] sm:$0xff]
      %v362 = vld [vmem:[%s0 + $0x410] sm:$0xff]
      %v363 = vld [vmem:[%s0 + $0x418] sm:$0xff]
      %v364 = vld [vmem:[%s0 + $0x420] sm:$0xff]
      %v365 = vld [vmem:[%s0 + $0x428] sm:$0xff]
      %v366 = vld [vmem:[%s0 + $0x430] sm:$0xff]
      %v367 = vld [vmem:[%s0 + $0x438] sm:$0xff]
      %v368 = vld [vmem:[%s0 + $0x440] sm:$0xff]
      %v369 = vld [vmem:[%s0 + $0x448] sm:$0xff]
      %v370 = vld [vmem:[%s0 + $0x450] sm:$0xff]
      %v371 = vld [vmem:[%s0 + $0x458] sm:$0xff]
      %v372 = vld [vmem:[%s0 + $0x460] sm:$0xff]
      %v373 = vld [vmem:[%s0 + $0x468] sm:$0xff]
      %v374 = vld [vmem:[%s0 + $0x470] sm:$0xff]
      %v375 = vld [vmem:[%s0 + $0x478] sm:$0xff]
      %v376 = vld [vmem:[%s0 + $0x480] sm:$0xff]
      %v377 = vld [vmem:[%s0 + $0x488] sm:$0xff]
      %v378 = vld [vmem:[%s0 + $0x490] sm:$0xff]
      %v379 = vld [vmem:[%s0 + $0x498] sm:$0xff]
      %v380 = vld [vmem:[%s0 + $0x4a0] sm:$0xff]
      %v381 = vld [vmem:[%s0 + $0x4a8] sm:$0xff]
      %v382 = vld [vmem:[%s0 + $0x4b0] sm:$0xff]
      %v383 = vld [vmem:[%s0 + $0x4b8] sm:$0xff]
      %v384 = vld [vmem:[%s0 + $0x4c0] sm:$0xff]
      %v385 = vld [vmem:[%s0 + $0x4c8] sm:$0xff]
      %v386 = vld [vmem:[%s0 + $0x4d0] sm:$0xff]
      %v387 = vld [vmem:[%s0 + $0x4d8] sm:$0xff]
      %v388 = vld [vmem:[%s0 + $0x4e0] sm:$0xff]
      %v389 = vld [vmem:[%s0 + $0x4e8] sm:$0xff]
      %v390 = vld [vmem:[%s0 + $0x4f0] sm:$0xff]
      %v391 = vld [vmem:[%s0 + $0x4f8] sm:$0xff]
      %v392 = vld [vmem:[%s0 + $0x500] sm:$0xff]
      %v393 = vld [vmem:[%s0 + $0x508] sm:$0xff]
      %v394 = vld [vmem:[%s0 + $0x510] sm:$0xff]
      %v395 = vld [vmem:[%s0 + $0x518] sm:$0xff]
      %v396 = vld [vmem:[%s0 + $0x520] sm:$0xff]
      %v397 = vld [vmem:[%s0 + $0x528] sm:$0xff]
      %v398 = vld [vmem:[%s0 + $0x530] sm:$0xff]
      %v399 = vld [vmem:[%s0 + $0x538] sm:$0xff]
      %v400 = vld [vmem:[%s0 + $0x540] sm:$0xff]
      %v401 = vld [vmem:[%s0 + $0x548] sm:$0xff]
      %v402 = vld [vmem:[%s0 + $0x550] sm:$0xff]
      %v403 = vld [vmem:[%s0 + $0x558] sm:$0xff]
      %v404 = vld [vmem:[%s0 + $0x560] sm:$0xff]
      %v405 = vld [vmem:[%s0 + $0x568] sm:$0xff]
      %v406 = vld [vmem:[%s0 + $0x570] sm:$0xff]
      %v407 = vld [vmem:[%s0 + $0x578] sm:$0xff]
      %v408 = vld [vmem:[%s0 + $0x580] sm:$0xff]
      %v409 = vld [vmem:[%s0 + $0x588] sm:$0xff]
      %v410 = vld [vmem:[%s0 + $0x590] sm:$0xff]
      %v411 = vld [vmem:[%s0 + $0x598] sm:$0xff]
      %v412 = vld [vmem:[%s0 + $0x5a0] sm:$0xff]
      %v413 = vld [vmem:[%s0 + $0x5a8] sm:$0xff]
      %v414 = vld [vmem:[%s0 + $0x5b0] sm:$0xff]
      %v415 = vld [vmem:[%s0 + $0x5b8] sm:$0xff]
      %v416 = vld [vmem:[%s0 + $0x5c0] sm:$0xff]
      %v417 = vld [vmem:[%s0 + $0x5c8] sm:$0xff]
      %v418 = vld [vmem:[%s0 + $0x5d0] sm:$0xff]
      %v419 = vld [vmem:[%s0 + $0x5d8] sm:$0xff]
      %v420 = vld [vmem:[%s0 + $0x5e0] sm:$0xff]
      %v421 = vld [vmem:[%s0 + $0x5e8] sm:$0xff]
      %v422 = vld [vmem:[%s0 + $0x5f0] sm:$0xff]
      %v423 = vld [vmem:[%s0 + $0x5f8] sm:$0xff]
      %v424 = vld [vmem:[%s0 + $0x600] sm:$0xff]
      %v425 = vld [vmem:[%s0 + $0x608] sm:$0xff]
      %v426 = vld [vmem:[%s0 + $0x610] sm:$0xff]
      %v427 = vld [vmem:[%s0 + $0x618] sm:$0xff]
      %v428 = vld [vmem:[%s0 + $0x620] sm:$0xff]
      %v429 = vld [vmem:[%s0 + $0x628] sm:$0xff]
      %v430 = vld [vmem:[%s0 + $0x630] sm:$0xff]
      %v431 = vld [vmem:[%s0 + $0x638] sm:$0xff]
      %v432 = vld [vmem:[%s0 + $0x640] sm:$0xff]
      %v433 = vld [vmem:[%s0 + $0x648] sm:$0xff]
      %v434 = vld [vmem:[%s0 + $0x650] sm:$0xff]
      %v435 = vld [vmem:[%s0 + $0x658] sm:$0xff]
      %v436 = vld [vmem:[%s0 + $0x660] sm:$0xff]
      %v437 = vld [vmem:[%s0 + $0x668] sm:$0xff]
      %v438 = vld [vmem:[%s0 + $0x670] sm:$0xff]
      %v439 = vld [vmem:[%s0 + $0x678] sm:$0xff]
      %v440 = vld [vmem:[%s0 + $0x680] sm:$0xff]
      %v441 = vld [vmem:[%s0 + $0x688] sm:$0xff]
      %v442 = vld [vmem:[%s0 + $0x690] sm:$0xff]
      %v443 = vld [vmem:[%s0 + $0x698] sm:$0xff]
      %v444 = vld [vmem:[%s0 + $0x6a0] sm:$0xff]
      %v445 = vld [vmem:[%s0 + $0x6a8] sm:$0xff]
      %v446 = vld [vmem:[%s0 + $0x6b0] sm:$0xff]
      %v447 = vld [vmem:[%s0 + $0x6b8] sm:$0xff]
      %v448 = vld [vmem:[%s0 + $0x6c0] sm:$0xff]
      %v449 = vld [vmem:[%s0 + $0x6c8] sm:$0xff]
      %v450 = vld [vmem:[%s0 + $0x6d0] sm:$0xff]
      %v451 = vld [vmem:[%s0 + $0x6d8] sm:$0xff]
      %v452 = vld [vmem:[%s0 + $0x6e0] sm:$0xff]
      %v453 = vld [vmem:[%s0 + $0x6e8] sm:$0xff]
      %v454 = vld [vmem:[%s0 + $0x6f0] sm:$0xff]
      %v455 = vld [vmem:[%s0 + $0x6f8] sm:$0xff]
      %v456 = vpack.c.bf16 %v234, %v232
      %v457 = vpack.c.bf16 %v235, %v233
      %v458 = vpack.c.bf16 %v238, %v236
      %v459 = vpack.c.bf16 %v239, %v237
      %v460 = vpack.c.bf16 %v242, %v240
      %v461 = vpack.c.bf16 %v243, %v241
      %v462 = vpack.c.bf16 %v246, %v244
      %v463 = vpack.c.bf16 %v247, %v245
      %v464 = vpack.c.bf16 %v250, %v248
      %v465 = vpack.c.bf16 %v251, %v249
      %v466 = vpack.c.bf16 %v254, %v252
      %v467 = vpack.c.bf16 %v255, %v253
      %v468 = vpack.c.bf16 %v258, %v256
      %v469 = vpack.c.bf16 %v259, %v257
      %v470 = vpack.c.bf16 %v262, %v260
      %v471 = vpack.c.bf16 %v263, %v261
      %v472 = vpack.c.bf16 %v266, %v264
      %v473 = vpack.c.bf16 %v267, %v265
      %v474 = vpack.c.bf16 %v270, %v268
      %v475 = vpack.c.bf16 %v271, %v269
      %v476 = vpack.c.bf16 %v274, %v272
      %v477 = vpack.c.bf16 %v275, %v273
      %v478 = vpack.c.bf16 %v278, %v276
      %v479 = vpack.c.bf16 %v279, %v277
      %v480 = vpack.c.bf16 %v282, %v280
      %v481 = vpack.c.bf16 %v283, %v281
      %v482 = vpack.c.bf16 %v286, %v284
      %v483 = vpack.c.bf16 %v287, %v285
      %v484 = vpack.c.bf16 %v290, %v288
      %v485 = vpack.c.bf16 %v291, %v289
      %v486 = vpack.c.bf16 %v294, %v292
      %v487 = vpack.c.bf16 %v295, %v293
      %v488 = vpack.c.bf16 %v298, %v296
      %v489 = vpack.c.bf16 %v299, %v297
      %v490 = vpack.c.bf16 %v302, %v300
      %v491 = vpack.c.bf16 %v303, %v301
      %v492 = vpack.c.bf16 %v306, %v304
      %v493 = vpack.c.bf16 %v307, %v305
      %v494 = vpack.c.bf16 %v310, %v308
      %v495 = vpack.c.bf16 %v311, %v309
      %v496 = vpack.c.bf16 %v314, %v312
      %v497 = vpack.c.bf16 %v315, %v313
      %v498 = vpack.c.bf16 %v318, %v316
      %v499 = vpack.c.bf16 %v319, %v317
      %v500 = vpack.c.bf16 %v322, %v320
      %v501 = vpack.c.bf16 %v323, %v321
      %v502 = vpack.c.bf16 %v326, %v324
      %v503 = vpack.c.bf16 %v327, %v325
      %v504 = vpack.c.bf16 %v330, %v328
      %v505 = vpack.c.bf16 %v331, %v329
      %v506 = vpack.c.bf16 %v334, %v332
      %v507 = vpack.c.bf16 %v335, %v333
      %v508 = vpack.c.bf16 %v338, %v336
      %v509 = vpack.c.bf16 %v339, %v337
      %v510 = vpack.c.bf16 %v342, %v340
      %v511 = vpack.c.bf16 %v343, %v341
      %v512 = vpack.c.bf16 %v346, %v344
      %v513 = vpack.c.bf16 %v347, %v345
      %v514 = vpack.c.bf16 %v350, %v348
      %v515 = vpack.c.bf16 %v351, %v349
      %v516 = vpack.c.bf16 %v354, %v352
      %v517 = vpack.c.bf16 %v355, %v353
      %v518 = vpack.c.bf16 %v358, %v356
      %v519 = vpack.c.bf16 %v359, %v357
      %v520 = vpack.c.bf16 %v362, %v360
      %v521 = vpack.c.bf16 %v363, %v361
      %v522 = vpack.c.bf16 %v366, %v364
      %v523 = vpack.c.bf16 %v367, %v365
      %v524 = vpack.c.bf16 %v370, %v368
      %v525 = vpack.c.bf16 %v371, %v369
      %v526 = vpack.c.bf16 %v374, %v372
      %v527 = vpack.c.bf16 %v375, %v373
      %v528 = vpack.c.bf16 %v378, %v376
      %v529 = vpack.c.bf16 %v379, %v377
      %v530 = vpack.c.bf16 %v382, %v380
      %v531 = vpack.c.bf16 %v383, %v381
      %v532 = vpack.c.bf16 %v386, %v384
      %v533 = vpack.c.bf16 %v387, %v385
      %v534 = vpack.c.bf16 %v390, %v388
      %v535 = vpack.c.bf16 %v391, %v389
      %v536 = vpack.c.bf16 %v394, %v392
      %v537 = vpack.c.bf16 %v395, %v393
      %v538 = vpack.c.bf16 %v398, %v396
      %v539 = vpack.c.bf16 %v399, %v397
      %v540 = vpack.c.bf16 %v402, %v400
      %v541 = vpack.c.bf16 %v403, %v401
      %v542 = vpack.c.bf16 %v406, %v404
      %v543 = vpack.c.bf16 %v407, %v405
      %v544 = vpack.c.bf16 %v410, %v408
      %v545 = vpack.c.bf16 %v411, %v409
      %v546 = vpack.c.bf16 %v414, %v412
      %v547 = vpack.c.bf16 %v415, %v413
      %v548 = vpack.c.bf16 %v418, %v416
      %v549 = vpack.c.bf16 %v419, %v417
      %v550 = vpack.c.bf16 %v422, %v420
      %v551 = vpack.c.bf16 %v423, %v421
      %v552 = vpack.c.bf16 %v426, %v424
      %v553 = vpack.c.bf16 %v427, %v425
      %v554 = vpack.c.bf16 %v430, %v428
      %v555 = vpack.c.bf16 %v431, %v429
      %v556 = vpack.c.bf16 %v434, %v432
      %v557 = vpack.c.bf16 %v435, %v433
      %v558 = vpack.c.bf16 %v438, %v436
      %v559 = vpack.c.bf16 %v439, %v437
      %v560 = vpack.c.bf16 %v442, %v440
      %v561 = vpack.c.bf16 %v443, %v441
      %v562 = vpack.c.bf16 %v446, %v444
      %v563 = vpack.c.bf16 %v447, %v445
      %v564 = vpack.c.bf16 %v450, %v448
      %v565 = vpack.c.bf16 %v451, %v449
      %v566 = vpack.c.bf16 %v454, %v452
      %v567 = vpack.c.bf16 %v455, %v453
      %v568 = vld [vmem:[%s215] sm:$0xff]
      %v569 = vld [vmem:[%s215 + $0x8] sm:$0xff]
      %v570 = vld [vmem:[%s215 + $0x10] sm:$0xff]
      %v571 = vld [vmem:[%s215 + $0x18] sm:$0xff]
      %v572 = vld [vmem:[%s215 + $0x20] sm:$0xff]
      %v573 = vld [vmem:[%s215 + $0x28] sm:$0xff]
      %v574 = vld [vmem:[%s215 + $0x30] sm:$0xff]
      %v575 = vld [vmem:[%s215 + $0x38] sm:$0xff]
      %v576 = vld [vmem:[%s215 + $0x40] sm:$0xff]
      %v577 = vld [vmem:[%s215 + $0x48] sm:$0xff]
      %v578 = vld [vmem:[%s215 + $0x50] sm:$0xff]
      %v579 = vld [vmem:[%s215 + $0x58] sm:$0xff]
      %v580 = vld [vmem:[%s215 + $0x60] sm:$0xff]
      %v581 = vld [vmem:[%s215 + $0x68] sm:$0xff]
      %v582 = vld [vmem:[%s215 + $0x70] sm:$0xff]
      %v583 = vld [vmem:[%s215 + $0x78] sm:$0xff]
      %v584 = vld [vmem:[%s215 + $0x80] sm:$0xff]
      %v585 = vld [vmem:[%s215 + $0x88] sm:$0xff]
      %v586 = vld [vmem:[%s215 + $0x90] sm:$0xff]
      %v587 = vld [vmem:[%s215 + $0x98] sm:$0xff]
      %v588 = vld [vmem:[%s215 + $0xa0] sm:$0xff]
      %v589 = vld [vmem:[%s215 + $0xa8] sm:$0xff]
      %v590 = vld [vmem:[%s215 + $0xb0] sm:$0xff]
      %v591 = vld [vmem:[%s215 + $0xb8] sm:$0xff]
      %v592 = vld [vmem:[%s215 + $0xc0] sm:$0xff]
      %v593 = vld [vmem:[%s215 + $0xc8] sm:$0xff]
      %v594 = vld [vmem:[%s215 + $0xd0] sm:$0xff]
      %v595 = vld [vmem:[%s215 + $0xd8] sm:$0xff]
      %v596 = vld [vmem:[%s215 + $0xe0] sm:$0xff]
      %v597 = vld [vmem:[%s215 + $0xe8] sm:$0xff]
      %v598 = vld [vmem:[%s215 + $0xf0] sm:$0xff]
      %v599 = vld [vmem:[%s215 + $0xf8] sm:$0xff]
      %v600 = vld [vmem:[%s215 + $0x100] sm:$0xff]
      %v601 = vld [vmem:[%s215 + $0x108] sm:$0xff]
      %v602 = vld [vmem:[%s215 + $0x110] sm:$0xff]
      %v603 = vld [vmem:[%s215 + $0x118] sm:$0xff]
      %v604 = vld [vmem:[%s215 + $0x120] sm:$0xff]
      %v605 = vld [vmem:[%s215 + $0x128] sm:$0xff]
      %v606 = vld [vmem:[%s215 + $0x130] sm:$0xff]
      %v607 = vld [vmem:[%s215 + $0x138] sm:$0xff]
      %v608 = vld [vmem:[%s215 + $0x140] sm:$0xff]
      %v609 = vld [vmem:[%s215 + $0x148] sm:$0xff]
      %v610 = vld [vmem:[%s215 + $0x150] sm:$0xff]
      %v611 = vld [vmem:[%s215 + $0x158] sm:$0xff]
      %v612 = vld [vmem:[%s215 + $0x160] sm:$0xff]
      %v613 = vld [vmem:[%s215 + $0x168] sm:$0xff]
      %v614 = vld [vmem:[%s215 + $0x170] sm:$0xff]
      %v615 = vld [vmem:[%s215 + $0x178] sm:$0xff]
      %v616 = vld [vmem:[%s215 + $0x180] sm:$0xff]
      %v617 = vld [vmem:[%s215 + $0x188] sm:$0xff]
      %v618 = vld [vmem:[%s215 + $0x190] sm:$0xff]
      %v619 = vld [vmem:[%s215 + $0x198] sm:$0xff]
      %v620 = vld [vmem:[%s215 + $0x1a0] sm:$0xff]
      %v621 = vld [vmem:[%s215 + $0x1a8] sm:$0xff]
      %v622 = vld [vmem:[%s215 + $0x1b0] sm:$0xff]
      %v623 = vld [vmem:[%s215 + $0x1b8] sm:$0xff]
      %v624 = vld [vmem:[%s215 + $0x1c0] sm:$0xff]
      %v625 = vld [vmem:[%s215 + $0x1c8] sm:$0xff]
      %v626 = vld [vmem:[%s215 + $0x1d0] sm:$0xff]
      %v627 = vld [vmem:[%s215 + $0x1d8] sm:$0xff]
      %v628 = vld [vmem:[%s215 + $0x1e0] sm:$0xff]
      %v629 = vld [vmem:[%s215 + $0x1e8] sm:$0xff]
      %v630 = vld [vmem:[%s215 + $0x1f0] sm:$0xff]
      %v631 = vld [vmem:[%s215 + $0x1f8] sm:$0xff]
      %v632 = vld [vmem:[%s215 + $0x200] sm:$0xff]
      %v633 = vld [vmem:[%s215 + $0x208] sm:$0xff]
      %v634 = vld [vmem:[%s215 + $0x210] sm:$0xff]
      %v635 = vld [vmem:[%s215 + $0x218] sm:$0xff]
      %v636 = vld [vmem:[%s215 + $0x220] sm:$0xff]
      %v637 = vld [vmem:[%s215 + $0x228] sm:$0xff]
      %v638 = vld [vmem:[%s215 + $0x230] sm:$0xff]
      %v639 = vld [vmem:[%s215 + $0x238] sm:$0xff]
      %v640 = vld [vmem:[%s215 + $0x240] sm:$0xff]
      %v641 = vld [vmem:[%s215 + $0x248] sm:$0xff]
      %v642 = vld [vmem:[%s215 + $0x250] sm:$0xff]
      %v643 = vld [vmem:[%s215 + $0x258] sm:$0xff]
      %v644 = vld [vmem:[%s215 + $0x260] sm:$0xff]
      %v645 = vld [vmem:[%s215 + $0x268] sm:$0xff]
      %v646 = vld [vmem:[%s215 + $0x270] sm:$0xff]
      %v647 = vld [vmem:[%s215 + $0x278] sm:$0xff]
      %v648 = vld [vmem:[%s215 + $0x280] sm:$0xff]
      %v649 = vld [vmem:[%s215 + $0x288] sm:$0xff]
      %v650 = vld [vmem:[%s215 + $0x290] sm:$0xff]
      %v651 = vld [vmem:[%s215 + $0x298] sm:$0xff]
      %v652 = vld [vmem:[%s215 + $0x2a0] sm:$0xff]
      %v653 = vld [vmem:[%s215 + $0x2a8] sm:$0xff]
      %v654 = vld [vmem:[%s215 + $0x2b0] sm:$0xff]
      %v655 = vld [vmem:[%s215 + $0x2b8] sm:$0xff]
      %v656 = vld [vmem:[%s215 + $0x2c0] sm:$0xff]
      %v657 = vld [vmem:[%s215 + $0x2c8] sm:$0xff]
      %v658 = vld [vmem:[%s215 + $0x2d0] sm:$0xff]
      %v659 = vld [vmem:[%s215 + $0x2d8] sm:$0xff]
      %v660 = vld [vmem:[%s215 + $0x2e0] sm:$0xff]
      %v661 = vld [vmem:[%s215 + $0x2e8] sm:$0xff]
      %v662 = vld [vmem:[%s215 + $0x2f0] sm:$0xff]
      %v663 = vld [vmem:[%s215 + $0x2f8] sm:$0xff]
      %v664 = vld [vmem:[%s215 + $0x300] sm:$0xff]
      %v665 = vld [vmem:[%s215 + $0x308] sm:$0xff]
      %v666 = vld [vmem:[%s215 + $0x310] sm:$0xff]
      %v667 = vld [vmem:[%s215 + $0x318] sm:$0xff]
      %v668 = vld [vmem:[%s215 + $0x320] sm:$0xff]
      %v669 = vld [vmem:[%s215 + $0x328] sm:$0xff]
      %v670 = vld [vmem:[%s215 + $0x330] sm:$0xff]
      %v671 = vld [vmem:[%s215 + $0x338] sm:$0xff]
      %v672 = vld [vmem:[%s215 + $0x340] sm:$0xff]
      %v673 = vld [vmem:[%s215 + $0x348] sm:$0xff]
      %v674 = vld [vmem:[%s215 + $0x350] sm:$0xff]
      %v675 = vld [vmem:[%s215 + $0x358] sm:$0xff]
      %v676 = vld [vmem:[%s215 + $0x360] sm:$0xff]
      %v677 = vld [vmem:[%s215 + $0x368] sm:$0xff]
      %v678 = vld [vmem:[%s215 + $0x370] sm:$0xff]
      %v679 = vld [vmem:[%s215 + $0x378] sm:$0xff]
      %v680 = vld [vmem:[%s215 + $0x380] sm:$0xff]
      %v681 = vld [vmem:[%s215 + $0x388] sm:$0xff]
      %v682 = vld [vmem:[%s215 + $0x390] sm:$0xff]
      %v683 = vld [vmem:[%s215 + $0x398] sm:$0xff]
      %v684 = vld [vmem:[%s215 + $0x3a0] sm:$0xff]
      %v685 = vld [vmem:[%s215 + $0x3a8] sm:$0xff]
      %v686 = vld [vmem:[%s215 + $0x3b0] sm:$0xff]
      %v687 = vld [vmem:[%s215 + $0x3b8] sm:$0xff]
      %v688 = vld [vmem:[%s215 + $0x3c0] sm:$0xff]
      %v689 = vld [vmem:[%s215 + $0x3c8] sm:$0xff]
      %v690 = vld [vmem:[%s215 + $0x3d0] sm:$0xff]
      %v691 = vld [vmem:[%s215 + $0x3d8] sm:$0xff]
      %v692 = vld [vmem:[%s215 + $0x3e0] sm:$0xff]
      %v693 = vld [vmem:[%s215 + $0x3e8] sm:$0xff]
      %v694 = vld [vmem:[%s215 + $0x3f0] sm:$0xff]
      %v695 = vld [vmem:[%s215 + $0x3f8] sm:$0xff]
      %v696 = vld [vmem:[%s215 + $0x400] sm:$0xff]
      %v697 = vld [vmem:[%s215 + $0x408] sm:$0xff]
      %v698 = vld [vmem:[%s215 + $0x410] sm:$0xff]
      %v699 = vld [vmem:[%s215 + $0x418] sm:$0xff]
      %v700 = vld [vmem:[%s215 + $0x420] sm:$0xff]
      %v701 = vld [vmem:[%s215 + $0x428] sm:$0xff]
      %v702 = vld [vmem:[%s215 + $0x430] sm:$0xff]
      %v703 = vld [vmem:[%s215 + $0x438] sm:$0xff]
      %v704 = vld [vmem:[%s215 + $0x440] sm:$0xff]
      %v705 = vld [vmem:[%s215 + $0x448] sm:$0xff]
      %v706 = vld [vmem:[%s215 + $0x450] sm:$0xff]
      %v707 = vld [vmem:[%s215 + $0x458] sm:$0xff]
      %v708 = vld [vmem:[%s215 + $0x460] sm:$0xff]
      %v709 = vld [vmem:[%s215 + $0x468] sm:$0xff]
      %v710 = vld [vmem:[%s215 + $0x470] sm:$0xff]
      %v711 = vld [vmem:[%s215 + $0x478] sm:$0xff]
      %v712 = vld [vmem:[%s215 + $0x480] sm:$0xff]
      %v713 = vld [vmem:[%s215 + $0x488] sm:$0xff]
      %v714 = vld [vmem:[%s215 + $0x490] sm:$0xff]
      %v715 = vld [vmem:[%s215 + $0x498] sm:$0xff]
      %v716 = vld [vmem:[%s215 + $0x4a0] sm:$0xff]
      %v717 = vld [vmem:[%s215 + $0x4a8] sm:$0xff]
      %v718 = vld [vmem:[%s215 + $0x4b0] sm:$0xff]
      %v719 = vld [vmem:[%s215 + $0x4b8] sm:$0xff]
      %v720 = vld [vmem:[%s215 + $0x4c0] sm:$0xff]
      %v721 = vld [vmem:[%s215 + $0x4c8] sm:$0xff]
      %v722 = vld [vmem:[%s215 + $0x4d0] sm:$0xff]
      %v723 = vld [vmem:[%s215 + $0x4d8] sm:$0xff]
      %v724 = vld [vmem:[%s215 + $0x4e0] sm:$0xff]
      %v725 = vld [vmem:[%s215 + $0x4e8] sm:$0xff]
      %v726 = vld [vmem:[%s215 + $0x4f0] sm:$0xff]
      %v727 = vld [vmem:[%s215 + $0x4f8] sm:$0xff]
      %v728 = vld [vmem:[%s215 + $0x500] sm:$0xff]
      %v729 = vld [vmem:[%s215 + $0x508] sm:$0xff]
      %v730 = vld [vmem:[%s215 + $0x510] sm:$0xff]
      %v731 = vld [vmem:[%s215 + $0x518] sm:$0xff]
      %v732 = vld [vmem:[%s215 + $0x520] sm:$0xff]
      %v733 = vld [vmem:[%s215 + $0x528] sm:$0xff]
      %v734 = vld [vmem:[%s215 + $0x530] sm:$0xff]
      %v735 = vld [vmem:[%s215 + $0x538] sm:$0xff]
      %v736 = vld [vmem:[%s215 + $0x540] sm:$0xff]
      %v737 = vld [vmem:[%s215 + $0x548] sm:$0xff]
      %v738 = vld [vmem:[%s215 + $0x550] sm:$0xff]
      %v739 = vld [vmem:[%s215 + $0x558] sm:$0xff]
      %v740 = vld [vmem:[%s215 + $0x560] sm:$0xff]
      %v741 = vld [vmem:[%s215 + $0x568] sm:$0xff]
      %v742 = vld [vmem:[%s215 + $0x570] sm:$0xff]
      %v743 = vld [vmem:[%s215 + $0x578] sm:$0xff]
      %v744 = vld [vmem:[%s215 + $0x580] sm:$0xff]
      %v745 = vld [vmem:[%s215 + $0x588] sm:$0xff]
      %v746 = vld [vmem:[%s215 + $0x590] sm:$0xff]
      %v747 = vld [vmem:[%s215 + $0x598] sm:$0xff]
      %v748 = vld [vmem:[%s215 + $0x5a0] sm:$0xff]
      %v749 = vld [vmem:[%s215 + $0x5a8] sm:$0xff]
      %v750 = vld [vmem:[%s215 + $0x5b0] sm:$0xff]
      %v751 = vld [vmem:[%s215 + $0x5b8] sm:$0xff]
      %v752 = vld [vmem:[%s215 + $0x5c0] sm:$0xff]
      %v753 = vld [vmem:[%s215 + $0x5c8] sm:$0xff]
      %v754 = vld [vmem:[%s215 + $0x5d0] sm:$0xff]
      %v755 = vld [vmem:[%s215 + $0x5d8] sm:$0xff]
      %v756 = vld [vmem:[%s215 + $0x5e0] sm:$0xff]
      %v757 = vld [vmem:[%s215 + $0x5e8] sm:$0xff]
      %v758 = vld [vmem:[%s215 + $0x5f0] sm:$0xff]
      %v759 = vld [vmem:[%s215 + $0x5f8] sm:$0xff]
      %v760 = vld [vmem:[%s215 + $0x600] sm:$0xff]
      %v761 = vld [vmem:[%s215 + $0x608] sm:$0xff]
      %v762 = vld [vmem:[%s215 + $0x610] sm:$0xff]
      %v763 = vld [vmem:[%s215 + $0x618] sm:$0xff]
      %v764 = vld [vmem:[%s215 + $0x620] sm:$0xff]
      %v765 = vld [vmem:[%s215 + $0x628] sm:$0xff]
      %v766 = vld [vmem:[%s215 + $0x630] sm:$0xff]
      %v767 = vld [vmem:[%s215 + $0x638] sm:$0xff]
      %v768 = vld [vmem:[%s215 + $0x640] sm:$0xff]
      %v769 = vld [vmem:[%s215 + $0x648] sm:$0xff]
      %v770 = vld [vmem:[%s215 + $0x650] sm:$0xff]
      %v771 = vld [vmem:[%s215 + $0x658] sm:$0xff]
      %v772 = vld [vmem:[%s215 + $0x660] sm:$0xff]
      %v773 = vld [vmem:[%s215 + $0x668] sm:$0xff]
      %v774 = vld [vmem:[%s215 + $0x670] sm:$0xff]
      %v775 = vld [vmem:[%s215 + $0x678] sm:$0xff]
      %v776 = vld [vmem:[%s215 + $0x680] sm:$0xff]
      %v777 = vld [vmem:[%s215 + $0x688] sm:$0xff]
      %v778 = vld [vmem:[%s215 + $0x690] sm:$0xff]
      %v779 = vld [vmem:[%s215 + $0x698] sm:$0xff]
      %v780 = vld [vmem:[%s215 + $0x6a0] sm:$0xff]
      %v781 = vld [vmem:[%s215 + $0x6a8] sm:$0xff]
      %v782 = vld [vmem:[%s215 + $0x6b0] sm:$0xff]
      %v783 = vld [vmem:[%s215 + $0x6b8] sm:$0xff]
      %v784 = vld [vmem:[%s215 + $0x6c0] sm:$0xff]
      %v785 = vld [vmem:[%s215 + $0x6c8] sm:$0xff]
      %v786 = vld [vmem:[%s215 + $0x6d0] sm:$0xff]
      %v787 = vld [vmem:[%s215 + $0x6d8] sm:$0xff]
      %v788 = vld [vmem:[%s215 + $0x6e0] sm:$0xff]
      %v789 = vld [vmem:[%s215 + $0x6e8] sm:$0xff]
      %v790 = vld [vmem:[%s215 + $0x6f0] sm:$0xff]
      %v791 = vld [vmem:[%s215 + $0x6f8] sm:$0xff]
      %v792 = vld [vmem:[%s215 + $0x700] sm:$0xff]
      %v793 = vld [vmem:[%s215 + $0x708] sm:$0xff]
      %v794 = vld [vmem:[%s215 + $0x710] sm:$0xff]
      %v795 = vld [vmem:[%s215 + $0x718] sm:$0xff]
      %v796 = vld [vmem:[%s215 + $0x720] sm:$0xff]
      %v797 = vld [vmem:[%s215 + $0x728] sm:$0xff]
      %v798 = vld [vmem:[%s215 + $0x730] sm:$0xff]
      %v799 = vld [vmem:[%s215 + $0x738] sm:$0xff]
      %v800 = vld [vmem:[%s215 + $0x740] sm:$0xff]
      %v801 = vld [vmem:[%s215 + $0x748] sm:$0xff]
      %v802 = vld [vmem:[%s215 + $0x750] sm:$0xff]
      %v803 = vld [vmem:[%s215 + $0x758] sm:$0xff]
      %v804 = vld [vmem:[%s215 + $0x760] sm:$0xff]
      %v805 = vld [vmem:[%s215 + $0x768] sm:$0xff]
      %v806 = vld [vmem:[%s215 + $0x770] sm:$0xff]
      %v807 = vld [vmem:[%s215 + $0x778] sm:$0xff]
      %v808 = vld [vmem:[%s215 + $0x780] sm:$0xff]
      %v809 = vld [vmem:[%s215 + $0x788] sm:$0xff]
      %v810 = vld [vmem:[%s215 + $0x790] sm:$0xff]
      %v811 = vld [vmem:[%s215 + $0x798] sm:$0xff]
      %v812 = vld [vmem:[%s215 + $0x7a0] sm:$0xff]
      %v813 = vld [vmem:[%s215 + $0x7a8] sm:$0xff]
      %v814 = vld [vmem:[%s215 + $0x7b0] sm:$0xff]
      %v815 = vld [vmem:[%s215 + $0x7b8] sm:$0xff]
      %v816 = vld [vmem:[%s215 + $0x7c0] sm:$0xff]
      %v817 = vld [vmem:[%s215 + $0x7c8] sm:$0xff]
      %v818 = vld [vmem:[%s215 + $0x7d0] sm:$0xff]
      %v819 = vld [vmem:[%s215 + $0x7d8] sm:$0xff]
      %v820 = vld [vmem:[%s215 + $0x7e0] sm:$0xff]
      %v821 = vld [vmem:[%s215 + $0x7e8] sm:$0xff]
      %v822 = vld [vmem:[%s215 + $0x7f0] sm:$0xff]
      %v823 = vld [vmem:[%s215 + $0x7f8] sm:$0xff]
      %v824 = vld [vmem:[%s215 + $0x800] sm:$0xff]
      %v825 = vld [vmem:[%s215 + $0x808] sm:$0xff]
      %v826 = vld [vmem:[%s215 + $0x810] sm:$0xff]
      %v827 = vld [vmem:[%s215 + $0x818] sm:$0xff]
      %v828 = vld [vmem:[%s215 + $0x820] sm:$0xff]
      %v829 = vld [vmem:[%s215 + $0x828] sm:$0xff]
      %v830 = vld [vmem:[%s215 + $0x830] sm:$0xff]
      %v831 = vld [vmem:[%s215 + $0x838] sm:$0xff]
      %v832 = vld [vmem:[%s215 + $0x840] sm:$0xff]
      %v833 = vld [vmem:[%s215 + $0x848] sm:$0xff]
      %v834 = vld [vmem:[%s215 + $0x850] sm:$0xff]
      %v835 = vld [vmem:[%s215 + $0x858] sm:$0xff]
      %v836 = vld [vmem:[%s215 + $0x860] sm:$0xff]
      %v837 = vld [vmem:[%s215 + $0x868] sm:$0xff]
      %v838 = vld [vmem:[%s215 + $0x870] sm:$0xff]
      %v839 = vld [vmem:[%s215 + $0x878] sm:$0xff]
      %v840 = vld [vmem:[%s215 + $0x880] sm:$0xff]
      %v841 = vld [vmem:[%s215 + $0x888] sm:$0xff]
      %v842 = vld [vmem:[%s215 + $0x890] sm:$0xff]
      %v843 = vld [vmem:[%s215 + $0x898] sm:$0xff]
      %v844 = vld [vmem:[%s215 + $0x8a0] sm:$0xff]
      %v845 = vld [vmem:[%s215 + $0x8a8] sm:$0xff]
      %v846 = vld [vmem:[%s215 + $0x8b0] sm:$0xff]
      %v847 = vld [vmem:[%s215 + $0x8b8] sm:$0xff]
      %v848 = vld [vmem:[%s215 + $0x8c0] sm:$0xff]
      %v849 = vld [vmem:[%s215 + $0x8c8] sm:$0xff]
      %v850 = vld [vmem:[%s215 + $0x8d0] sm:$0xff]
      %v851 = vld [vmem:[%s215 + $0x8d8] sm:$0xff]
      %v852 = vld [vmem:[%s215 + $0x8e0] sm:$0xff]
      %v853 = vld [vmem:[%s215 + $0x8e8] sm:$0xff]
      %v854 = vld [vmem:[%s215 + $0x8f0] sm:$0xff]
      %v855 = vld [vmem:[%s215 + $0x8f8] sm:$0xff]
      %v856 = vld [vmem:[%s215 + $0x900] sm:$0xff]
      %v857 = vld [vmem:[%s215 + $0x908] sm:$0xff]
      %v858 = vld [vmem:[%s215 + $0x910] sm:$0xff]
      %v859 = vld [vmem:[%s215 + $0x918] sm:$0xff]
      %v860 = vld [vmem:[%s215 + $0x920] sm:$0xff]
      %v861 = vld [vmem:[%s215 + $0x928] sm:$0xff]
      %v862 = vld [vmem:[%s215 + $0x930] sm:$0xff]
      %v863 = vld [vmem:[%s215 + $0x938] sm:$0xff]
      %v864 = vld [vmem:[%s215 + $0x940] sm:$0xff]
      %v865 = vld [vmem:[%s215 + $0x948] sm:$0xff]
      %v866 = vld [vmem:[%s215 + $0x950] sm:$0xff]
      %v867 = vld [vmem:[%s215 + $0x958] sm:$0xff]
      %v868 = vld [vmem:[%s215 + $0x960] sm:$0xff]
      %v869 = vld [vmem:[%s215 + $0x968] sm:$0xff]
      %v870 = vld [vmem:[%s215 + $0x970] sm:$0xff]
      %v871 = vld [vmem:[%s215 + $0x978] sm:$0xff]
      %v872 = vld [vmem:[%s215 + $0x980] sm:$0xff]
      %v873 = vld [vmem:[%s215 + $0x988] sm:$0xff]
      %v874 = vld [vmem:[%s215 + $0x990] sm:$0xff]
      %v875 = vld [vmem:[%s215 + $0x998] sm:$0xff]
      %v876 = vld [vmem:[%s215 + $0x9a0] sm:$0xff]
      %v877 = vld [vmem:[%s215 + $0x9a8] sm:$0xff]
      %v878 = vld [vmem:[%s215 + $0x9b0] sm:$0xff]
      %v879 = vld [vmem:[%s215 + $0x9b8] sm:$0xff]
      %v880 = vld [vmem:[%s215 + $0x9c0] sm:$0xff]
      %v881 = vld [vmem:[%s215 + $0x9c8] sm:$0xff]
      %v882 = vld [vmem:[%s215 + $0x9d0] sm:$0xff]
      %v883 = vld [vmem:[%s215 + $0x9d8] sm:$0xff]
      %v884 = vld [vmem:[%s215 + $0x9e0] sm:$0xff]
      %v885 = vld [vmem:[%s215 + $0x9e8] sm:$0xff]
      %v886 = vld [vmem:[%s215 + $0x9f0] sm:$0xff]
      %v887 = vld [vmem:[%s215 + $0x9f8] sm:$0xff]
      %v888 = vld [vmem:[%s215 + $0xa00] sm:$0xff]
      %v889 = vld [vmem:[%s215 + $0xa08] sm:$0xff]
      %v890 = vld [vmem:[%s215 + $0xa10] sm:$0xff]
      %v891 = vld [vmem:[%s215 + $0xa18] sm:$0xff]
      %v892 = vld [vmem:[%s215 + $0xa20] sm:$0xff]
      %v893 = vld [vmem:[%s215 + $0xa28] sm:$0xff]
      %v894 = vld [vmem:[%s215 + $0xa30] sm:$0xff]
      %v895 = vld [vmem:[%s215 + $0xa38] sm:$0xff]
      %v896 = vld [vmem:[%s215 + $0xa40] sm:$0xff]
      %v897 = vld [vmem:[%s215 + $0xa48] sm:$0xff]
      %v898 = vld [vmem:[%s215 + $0xa50] sm:$0xff]
      %v899 = vld [vmem:[%s215 + $0xa58] sm:$0xff]
      %v900 = vld [vmem:[%s215 + $0xa60] sm:$0xff]
      %v901 = vld [vmem:[%s215 + $0xa68] sm:$0xff]
      %v902 = vld [vmem:[%s215 + $0xa70] sm:$0xff]
      %v903 = vld [vmem:[%s215 + $0xa78] sm:$0xff]
      %v904 = vld [vmem:[%s215 + $0xa80] sm:$0xff]
      %v905 = vld [vmem:[%s215 + $0xa88] sm:$0xff]
      %v906 = vld [vmem:[%s215 + $0xa90] sm:$0xff]
      %v907 = vld [vmem:[%s215 + $0xa98] sm:$0xff]
      %v908 = vld [vmem:[%s215 + $0xaa0] sm:$0xff]
      %v909 = vld [vmem:[%s215 + $0xaa8] sm:$0xff]
      %v910 = vld [vmem:[%s215 + $0xab0] sm:$0xff]
      %v911 = vld [vmem:[%s215 + $0xab8] sm:$0xff]
      %v912 = vld [vmem:[%s215 + $0xac0] sm:$0xff]
      %v913 = vld [vmem:[%s215 + $0xac8] sm:$0xff]
      %v914 = vld [vmem:[%s215 + $0xad0] sm:$0xff]
      %v915 = vld [vmem:[%s215 + $0xad8] sm:$0xff]
      %v916 = vld [vmem:[%s215 + $0xae0] sm:$0xff]
      %v917 = vld [vmem:[%s215 + $0xae8] sm:$0xff]
      %v918 = vld [vmem:[%s215 + $0xaf0] sm:$0xff]
      %v919 = vld [vmem:[%s215 + $0xaf8] sm:$0xff]
      %v920 = vld [vmem:[%s215 + $0xb00] sm:$0xff]
      %v921 = vld [vmem:[%s215 + $0xb08] sm:$0xff]
      %v922 = vld [vmem:[%s215 + $0xb10] sm:$0xff]
      %v923 = vld [vmem:[%s215 + $0xb18] sm:$0xff]
      %v924 = vld [vmem:[%s215 + $0xb20] sm:$0xff]
      %v925 = vld [vmem:[%s215 + $0xb28] sm:$0xff]
      %v926 = vld [vmem:[%s215 + $0xb30] sm:$0xff]
      %v927 = vld [vmem:[%s215 + $0xb38] sm:$0xff]
      %v928 = vld [vmem:[%s215 + $0xb40] sm:$0xff]
      %v929 = vld [vmem:[%s215 + $0xb48] sm:$0xff]
      %v930 = vld [vmem:[%s215 + $0xb50] sm:$0xff]
      %v931 = vld [vmem:[%s215 + $0xb58] sm:$0xff]
      %v932 = vld [vmem:[%s215 + $0xb60] sm:$0xff]
      %v933 = vld [vmem:[%s215 + $0xb68] sm:$0xff]
      %v934 = vld [vmem:[%s215 + $0xb70] sm:$0xff]
      %v935 = vld [vmem:[%s215 + $0xb78] sm:$0xff]
      %v936 = vld [vmem:[%s215 + $0xb80] sm:$0xff]
      %v937 = vld [vmem:[%s215 + $0xb88] sm:$0xff]
      %v938 = vld [vmem:[%s215 + $0xb90] sm:$0xff]
      %v939 = vld [vmem:[%s215 + $0xb98] sm:$0xff]
      %v940 = vld [vmem:[%s215 + $0xba0] sm:$0xff]
      %v941 = vld [vmem:[%s215 + $0xba8] sm:$0xff]
      %v942 = vld [vmem:[%s215 + $0xbb0] sm:$0xff]
      %v943 = vld [vmem:[%s215 + $0xbb8] sm:$0xff]
      %v944 = vld [vmem:[%s215 + $0xbc0] sm:$0xff]
      %v945 = vld [vmem:[%s215 + $0xbc8] sm:$0xff]
      %v946 = vld [vmem:[%s215 + $0xbd0] sm:$0xff]
      %v947 = vld [vmem:[%s215 + $0xbd8] sm:$0xff]
      %v948 = vld [vmem:[%s215 + $0xbe0] sm:$0xff]
      %v949 = vld [vmem:[%s215 + $0xbe8] sm:$0xff]
      %v950 = vld [vmem:[%s215 + $0xbf0] sm:$0xff]
      %v951 = vld [vmem:[%s215 + $0xbf8] sm:$0xff]
      %v952 = vld [vmem:[%s215 + $0xc00] sm:$0xff]
      %v953 = vld [vmem:[%s215 + $0xc08] sm:$0xff]
      %v954 = vld [vmem:[%s215 + $0xc10] sm:$0xff]
      %v955 = vld [vmem:[%s215 + $0xc18] sm:$0xff]
      %v956 = vld [vmem:[%s215 + $0xc20] sm:$0xff]
      %v957 = vld [vmem:[%s215 + $0xc28] sm:$0xff]
      %v958 = vld [vmem:[%s215 + $0xc30] sm:$0xff]
      %v959 = vld [vmem:[%s215 + $0xc38] sm:$0xff]
      %v960 = vpack.c.bf16 %v575, %v568
      %v961 = vpack.c.bf16 %v576, %v569
      %v962 = vpack.c.bf16 %v577, %v570
      %v963 = vpack.c.bf16 %v578, %v571
      %v964 = vpack.c.bf16 %v579, %v572
      %v965 = vpack.c.bf16 %v580, %v573
      %v966 = vpack.c.bf16 %v581, %v574
      %v967 = vpack.c.bf16 %v589, %v582
      %v968 = vpack.c.bf16 %v590, %v583
      %v969 = vpack.c.bf16 %v591, %v584
      %v970 = vpack.c.bf16 %v592, %v585
      %v971 = vpack.c.bf16 %v593, %v586
      %v972 = vpack.c.bf16 %v594, %v587
      %v973 = vpack.c.bf16 %v595, %v588
      %v974 = vpack.c.bf16 %v603, %v596
      %v975 = vpack.c.bf16 %v604, %v597
      %v976 = vpack.c.bf16 %v605, %v598
      %v977 = vpack.c.bf16 %v606, %v599
      %v978 = vpack.c.bf16 %v607, %v600
      %v979 = vpack.c.bf16 %v608, %v601
      %v980 = vpack.c.bf16 %v609, %v602
      %v981 = vpack.c.bf16 %v617, %v610
      %v982 = vpack.c.bf16 %v618, %v611
      %v983 = vpack.c.bf16 %v619, %v612
      %v984 = vpack.c.bf16 %v620, %v613
      %v985 = vpack.c.bf16 %v621, %v614
      %v986 = vpack.c.bf16 %v622, %v615
      %v987 = vpack.c.bf16 %v623, %v616
      %v988 = vpack.c.bf16 %v631, %v624
      %v989 = vpack.c.bf16 %v632, %v625
      %v990 = vpack.c.bf16 %v633, %v626
      %v991 = vpack.c.bf16 %v634, %v627
      %v992 = vpack.c.bf16 %v635, %v628
      %v993 = vpack.c.bf16 %v636, %v629
      %v994 = vpack.c.bf16 %v637, %v630
      %v995 = vpack.c.bf16 %v645, %v638
      %v996 = vpack.c.bf16 %v646, %v639
      %v997 = vpack.c.bf16 %v647, %v640
      %v998 = vpack.c.bf16 %v648, %v641
      %v999 = vpack.c.bf16 %v649, %v642
      %v1000 = vpack.c.bf16 %v650, %v643
      %v1001 = vpack.c.bf16 %v651, %v644
      %v1002 = vpack.c.bf16 %v659, %v652
      %v1003 = vpack.c.bf16 %v660, %v653
      %v1004 = vpack.c.bf16 %v661, %v654
      %v1005 = vpack.c.bf16 %v662, %v655
      %v1006 = vpack.c.bf16 %v663, %v656
      %v1007 = vpack.c.bf16 %v664, %v657
      %v1008 = vpack.c.bf16 %v665, %v658
      %v1009 = vpack.c.bf16 %v673, %v666
      %v1010 = vpack.c.bf16 %v674, %v667
      %v1011 = vpack.c.bf16 %v675, %v668
      %v1012 = vpack.c.bf16 %v676, %v669
      %v1013 = vpack.c.bf16 %v677, %v670
      %v1014 = vpack.c.bf16 %v678, %v671
      %v1015 = vpack.c.bf16 %v679, %v672
      %v1016 = vpack.c.bf16 %v687, %v680
      %v1017 = vpack.c.bf16 %v688, %v681
      %v1018 = vpack.c.bf16 %v689, %v682
      %v1019 = vpack.c.bf16 %v690, %v683
      %v1020 = vpack.c.bf16 %v691, %v684
      %v1021 = vpack.c.bf16 %v692, %v685
      %v1022 = vpack.c.bf16 %v693, %v686
      %v1023 = vpack.c.bf16 %v701, %v694
      %v1024 = vpack.c.bf16 %v702, %v695
      %v1025 = vpack.c.bf16 %v703, %v696
      %v1026 = vpack.c.bf16 %v704, %v697
      %v1027 = vpack.c.bf16 %v705, %v698
      %v1028 = vpack.c.bf16 %v706, %v699
      %v1029 = vpack.c.bf16 %v707, %v700
      %v1030 = vpack.c.bf16 %v715, %v708
      %v1031 = vpack.c.bf16 %v716, %v709
      %v1032 = vpack.c.bf16 %v717, %v710
      %v1033 = vpack.c.bf16 %v718, %v711
      %v1034 = vpack.c.bf16 %v719, %v712
      %v1035 = vpack.c.bf16 %v720, %v713
      %v1036 = vpack.c.bf16 %v721, %v714
      %v1037 = vpack.c.bf16 %v729, %v722
      %v1038 = vpack.c.bf16 %v730, %v723
      %v1039 = vpack.c.bf16 %v731, %v724
      %v1040 = vpack.c.bf16 %v732, %v725
      %v1041 = vpack.c.bf16 %v733, %v726
      %v1042 = vpack.c.bf16 %v734, %v727
      %v1043 = vpack.c.bf16 %v735, %v728
      %v1044 = vpack.c.bf16 %v743, %v736
      %v1045 = vpack.c.bf16 %v744, %v737
      %v1046 = vpack.c.bf16 %v745, %v738
      %v1047 = vpack.c.bf16 %v746, %v739
      %v1048 = vpack.c.bf16 %v747, %v740
      %v1049 = vpack.c.bf16 %v748, %v741
      %v1050 = vpack.c.bf16 %v749, %v742
      %v1051 = vpack.c.bf16 %v757, %v750
      %v1052 = vpack.c.bf16 %v758, %v751
      %v1053 = vpack.c.bf16 %v759, %v752
      %v1054 = vpack.c.bf16 %v760, %v753
      %v1055 = vpack.c.bf16 %v761, %v754
      %v1056 = vpack.c.bf16 %v762, %v755
      %v1057 = vpack.c.bf16 %v763, %v756
      %v1058 = vpack.c.bf16 %v771, %v764
      %v1059 = vpack.c.bf16 %v772, %v765
      %v1060 = vpack.c.bf16 %v773, %v766
      %v1061 = vpack.c.bf16 %v774, %v767
      %v1062 = vpack.c.bf16 %v775, %v768
      %v1063 = vpack.c.bf16 %v776, %v769
      %v1064 = vpack.c.bf16 %v777, %v770
      %v1065 = vpack.c.bf16 %v785, %v778
      %v1066 = vpack.c.bf16 %v786, %v779
      %v1067 = vpack.c.bf16 %v787, %v780
      %v1068 = vpack.c.bf16 %v788, %v781
      %v1069 = vpack.c.bf16 %v789, %v782
      %v1070 = vpack.c.bf16 %v790, %v783
      %v1071 = vpack.c.bf16 %v791, %v784
      %v1072 = vpack.c.bf16 %v799, %v792
      %v1073 = vpack.c.bf16 %v800, %v793
      %v1074 = vpack.c.bf16 %v801, %v794
      %v1075 = vpack.c.bf16 %v802, %v795
      %v1076 = vpack.c.bf16 %v803, %v796
      %v1077 = vpack.c.bf16 %v804, %v797
      %v1078 = vpack.c.bf16 %v805, %v798
      %v1079 = vpack.c.bf16 %v813, %v806
      %v1080 = vpack.c.bf16 %v814, %v807
      %v1081 = vpack.c.bf16 %v815, %v808
      %v1082 = vpack.c.bf16 %v816, %v809
      %v1083 = vpack.c.bf16 %v817, %v810
      %v1084 = vpack.c.bf16 %v818, %v811
      %v1085 = vpack.c.bf16 %v819, %v812
      %v1086 = vpack.c.bf16 %v827, %v820
      %v1087 = vpack.c.bf16 %v828, %v821
      %v1088 = vpack.c.bf16 %v829, %v822
      %v1089 = vpack.c.bf16 %v830, %v823
      %v1090 = vpack.c.bf16 %v831, %v824
      %v1091 = vpack.c.bf16 %v832, %v825
      %v1092 = vpack.c.bf16 %v833, %v826
      %v1093 = vpack.c.bf16 %v841, %v834
      %v1094 = vpack.c.bf16 %v842, %v835
      %v1095 = vpack.c.bf16 %v843, %v836
      %v1096 = vpack.c.bf16 %v844, %v837
      %v1097 = vpack.c.bf16 %v845, %v838
      %v1098 = vpack.c.bf16 %v846, %v839
      %v1099 = vpack.c.bf16 %v847, %v840
      %v1100 = vpack.c.bf16 %v855, %v848
      %v1101 = vpack.c.bf16 %v856, %v849
      %v1102 = vpack.c.bf16 %v857, %v850
      %v1103 = vpack.c.bf16 %v858, %v851
      %v1104 = vpack.c.bf16 %v859, %v852
      %v1105 = vpack.c.bf16 %v860, %v853
      %v1106 = vpack.c.bf16 %v861, %v854
      %v1107 = vpack.c.bf16 %v869, %v862
      %v1108 = vpack.c.bf16 %v870, %v863
      %v1109 = vpack.c.bf16 %v871, %v864
      %v1110 = vpack.c.bf16 %v872, %v865
      %v1111 = vpack.c.bf16 %v873, %v866
      %v1112 = vpack.c.bf16 %v874, %v867
      %v1113 = vpack.c.bf16 %v875, %v868
      %v1114 = vpack.c.bf16 %v883, %v876
      %v1115 = vpack.c.bf16 %v884, %v877
      %v1116 = vpack.c.bf16 %v885, %v878
      %v1117 = vpack.c.bf16 %v886, %v879
      %v1118 = vpack.c.bf16 %v887, %v880
      %v1119 = vpack.c.bf16 %v888, %v881
      %v1120 = vpack.c.bf16 %v889, %v882
      %v1121 = vpack.c.bf16 %v897, %v890
      %v1122 = vpack.c.bf16 %v898, %v891
      %v1123 = vpack.c.bf16 %v899, %v892
      %v1124 = vpack.c.bf16 %v900, %v893
      %v1125 = vpack.c.bf16 %v901, %v894
      %v1126 = vpack.c.bf16 %v902, %v895
      %v1127 = vpack.c.bf16 %v903, %v896
      %v1128 = vpack.c.bf16 %v911, %v904
      %v1129 = vpack.c.bf16 %v912, %v905
      %v1130 = vpack.c.bf16 %v913, %v906
      %v1131 = vpack.c.bf16 %v914, %v907
      %v1132 = vpack.c.bf16 %v915, %v908
      %v1133 = vpack.c.bf16 %v916, %v909
      %v1134 = vpack.c.bf16 %v917, %v910
      %v1135 = vpack.c.bf16 %v925, %v918
      %v1136 = vpack.c.bf16 %v926, %v919
      %v1137 = vpack.c.bf16 %v927, %v920
      %v1138 = vpack.c.bf16 %v928, %v921
      %v1139 = vpack.c.bf16 %v929, %v922
      %v1140 = vpack.c.bf16 %v930, %v923
      %v1141 = vpack.c.bf16 %v931, %v924
      %v1142 = vpack.c.bf16 %v939, %v932
      %v1143 = vpack.c.bf16 %v940, %v933
      %v1144 = vpack.c.bf16 %v941, %v934
      %v1145 = vpack.c.bf16 %v942, %v935
      %v1146 = vpack.c.bf16 %v943, %v936
      %v1147 = vpack.c.bf16 %v944, %v937
      %v1148 = vpack.c.bf16 %v945, %v938
      %v1149 = vpack.c.bf16 %v953, %v946
      %v1150 = vpack.c.bf16 %v954, %v947
      %v1151 = vpack.c.bf16 %v955, %v948
      %v1152 = vpack.c.bf16 %v956, %v949
      %v1153 = vpack.c.bf16 %v957, %v950
      %v1154 = vpack.c.bf16 %v958, %v951
      %v1155 = vpack.c.bf16 %v959, %v952
      %1156 = vmatprep.subr.bf16.mxu0 %v457
      %1157 = vmatpush1.bf16.msra.mxu0 %v456
      %1158 = vmatprep.subr.bf16.mxu0 %v459
      %1159 = vmatpush1.bf16.msra.mxu0 %v458
      %1160 = vmatprep.subr.bf16.mxu0 %v461
      %1161 = vmatpush1.bf16.msra.mxu0 %v460
      %1162 = vmatprep.subr.bf16.mxu0 %v463
      %1163 = vmatpush1.bf16.msra.mxu0 %v462
      %1164 = vmatprep.subr.bf16.mxu0 %v465
      %1165 = vmatpush1.bf16.msra.mxu0 %v464
      %1166 = vmatprep.subr.bf16.mxu0 %v467
      %1167 = vmatpush1.bf16.msra.mxu0 %v466
      %1168 = vmatprep.subr.bf16.mxu0 %v469
      %1169 = vmatpush1.bf16.msra.mxu0 %v468
      %1170 = vmatprep.subr.bf16.mxu0 %v471
      %1171 = vmatpush1.bf16.msra.mxu0 %v470
      %1172 = vmatprep.subr.bf16.mxu0 %v473
      %1173 = vmatpush1.bf16.msra.mxu0 %v472
      %1174 = vmatprep.subr.bf16.mxu0 %v475
      %1175 = vmatpush1.bf16.msra.mxu0 %v474
      %1176 = vmatprep.subr.bf16.mxu0 %v477
      %1177 = vmatpush1.bf16.msra.mxu0 %v476
      %1178 = vmatprep.subr.bf16.mxu0 %v479
      %1179 = vmatpush1.bf16.msra.mxu0 %v478
      %1180 = vmatprep.subr.bf16.mxu0 %v481
      %1181 = vmatpush1.bf16.msra.mxu0 %v480
      %1182 = vmatprep.subr.bf16.mxu0 %v483
      %1183 = vmatpush1.bf16.msra.mxu0 %v482
      %1184 = vmatprep.subr.bf16.mxu0 %v485
      %1185 = vmatpush1.bf16.msra.mxu0 %v484
      %1186 = vmatprep.subr.bf16.mxu0 %v487
      %1187 = vmatpush1.bf16.msra.mxu0 %v486
      %1188 = vmatprep.mubr.bf16.mxu0 %v961
      %1189 = vmatmul.mubr.bf16.gmra.mrb[0].mxu0 %v960
      %v1190 = vpop.f32.mrb[0].mxu0
      %v1191 = vadd.f32 0.0, %v1190
      %v1192 = vpop.f32.mrb[0].mxu0
      %v1193 = vadd.f32 0.0, %v1192
      %v1194 = vpop.f32.mrb[0].mxu0
      %v1195 = vadd.f32 0.0, %v1194
      %v1196 = vpop.f32.mrb[0].mxu0
      %v1197 = vadd.f32 0.0, %v1196
      %1198 = vmatprep.mubr.bf16.mxu0 %v968
      %1199 = vmatmul.mubr.bf16.gmra.mrb[0].mxu0 %v967
      %v1200 = vpop.f32.mrb[0].mxu0
      %v1201 = vadd.f32 0.0, %v1200
      %v1202 = vpop.f32.mrb[0].mxu0
      %v1203 = vadd.f32 0.0, %v1202
      %v1204 = vpop.f32.mrb[0].mxu0
      %v1205 = vadd.f32 0.0, %v1204
      %v1206 = vpop.f32.mrb[0].mxu0
      %v1207 = vadd.f32 0.0, %v1206
      %1208 = vmatprep.mubr.bf16.mxu0 %v975
      %1209 = vmatmul.mubr.bf16.gmra.mrb[0].mxu0 %v974
      %v1210 = vpop.f32.mrb[0].mxu0
      %v1211 = vadd.f32 0.0, %v1210
      %v1212 = vpop.f32.mrb[0].mxu0
      %v1213 = vadd.f32 0.0, %v1212
      %v1214 = vpop.f32.mrb[0].mxu0
      %v1215 = vadd.f32 0.0, %v1214
      %v1216 = vpop.f32.mrb[0].mxu0
      %v1217 = vadd.f32 0.0, %v1216
      %1218 = vmatprep.mubr.bf16.mxu0 %v982
      %1219 = vmatmul.mubr.bf16.gmra.mrb[0].mxu0 %v981
      %v1220 = vpop.f32.mrb[0].mxu0
      %v1221 = vadd.f32 0.0, %v1220
      %v1222 = vpop.f32.mrb[0].mxu0
      %v1223 = vadd.f32 0.0, %v1222
      %v1224 = vpop.f32.mrb[0].mxu0
      %v1225 = vadd.f32 0.0, %v1224
      %v1226 = vpop.f32.mrb[0].mxu0
      %v1227 = vadd.f32 0.0, %v1226
      %1228 = vmatprep.mubr.bf16.mxu0 %v989
      %1229 = vmatmul.mubr.bf16.gmra.mrb[0].mxu0 %v988
      %v1230 = vpop.f32.mrb[0].mxu0
      %v1231 = vadd.f32 0.0, %v1230
      %v1232 = vpop.f32.mrb[0].mxu0
      %v1233 = vadd.f32 0.0, %v1232
      %v1234 = vpop.f32.mrb[0].mxu0
      %v1235 = vadd.f32 0.0, %v1234
      %v1236 = vpop.f32.mrb[0].mxu0
      %v1237 = vadd.f32 0.0, %v1236
      %1238 = vmatprep.mubr.bf16.mxu0 %v996
      %1239 = vmatmul.mubr.bf16.gmra.mrb[0].mxu0 %v995
      %v1240 = vpop.f32.mrb[0].mxu0
      %v1241 = vadd.f32 0.0, %v1240
      %v1242 = vpop.f32.mrb[0].mxu0
      %v1243 = vadd.f32 0.0, %v1242
      %v1244 = vpop.f32.mrb[0].mxu0
      %v1245 = vadd.f32 0.0, %v1244
      %v1246 = vpop.f32.mrb[0].mxu0
      %v1247 = vadd.f32 0.0, %v1246
      %1248 = vmatprep.mubr.bf16.mxu0 %v1003
      %1249 = vmatmul.mubr.bf16.gmra.mrb[0].mxu0 %v1002
      %v1250 = vpop.f32.mrb[0].mxu0
      %v1251 = vadd.f32 0.0, %v1250
      %v1252 = vpop.f32.mrb[0].mxu0
      %v1253 = vadd.f32 0.0, %v1252
      %v1254 = vpop.f32.mrb[0].mxu0
      %v1255 = vadd.f32 0.0, %v1254
      %v1256 = vpop.f32.mrb[0].mxu0
      %v1257 = vadd.f32 0.0, %v1256
      %1258 = vmatprep.mubr.bf16.mxu0 %v1010
      %1259 = vmatmul.mubr.bf16.gmra.mrb[0].mxu0 %v1009
      %v1260 = vpop.f32.mrb[0].mxu0
      %v1261 = vadd.f32 0.0, %v1260
      %v1262 = vpop.f32.mrb[0].mxu0
      %v1263 = vadd.f32 0.0, %v1262
      %v1264 = vpop.f32.mrb[0].mxu0
      %v1265 = vadd.f32 0.0, %v1264
      %v1266 = vpop.f32.mrb[0].mxu0
      %v1267 = vadd.f32 0.0, %v1266
      %1268 = vmatprep.mubr.bf16.mxu0 %v1017
      %1269 = vmatmul.mubr.bf16.gmra.mrb[0].mxu0 %v1016
      %v1270 = vpop.f32.mrb[0].mxu0
      %v1271 = vadd.f32 0.0, %v1270
      %v1272 = vpop.f32.mrb[0].mxu0
      %v1273 = vadd.f32 0.0, %v1272
      %v1274 = vpop.f32.mrb[0].mxu0
      %v1275 = vadd.f32 0.0, %v1274
      %v1276 = vpop.f32.mrb[0].mxu0
      %v1277 = vadd.f32 0.0, %v1276
      %1278 = vmatprep.mubr.bf16.mxu0 %v1024
      %1279 = vmatmul.mubr.bf16.gmra.mrb[0].mxu0 %v1023
      %v1280 = vpop.f32.mrb[0].mxu0
      %v1281 = vadd.f32 0.0, %v1280
      %v1282 = vpop.f32.mrb[0].mxu0
      %v1283 = vadd.f32 0.0, %v1282
      %v1284 = vpop.f32.mrb[0].mxu0
      %v1285 = vadd.f32 0.0, %v1284
      %v1286 = vpop.f32.mrb[0].mxu0
      %v1287 = vadd.f32 0.0, %v1286
      %1288 = vmatprep.mubr.bf16.mxu0 %v1031
      %1289 = vmatmul.mubr.bf16.gmra.mrb[0].mxu0 %v1030
      %v1290 = vpop.f32.mrb[0].mxu0
      %v1291 = vadd.f32 0.0, %v1290
      %v1292 = vpop.f32.mrb[0].mxu0
      %v1293 = vadd.f32 0.0, %v1292
      %v1294 = vpop.f32.mrb[0].mxu0
      %v1295 = vadd.f32 0.0, %v1294
      %v1296 = vpop.f32.mrb[0].mxu0
      %v1297 = vadd.f32 0.0, %v1296
      %1298 = vmatprep.mubr.bf16.mxu0 %v1038
      %1299 = vmatmul.mubr.bf16.gmra.mrb[0].mxu0 %v1037
      %v1300 = vpop.f32.mrb[0].mxu0
      %v1301 = vadd.f32 0.0, %v1300
      %v1302 = vpop.f32.mrb[0].mxu0
      %v1303 = vadd.f32 0.0, %v1302
      %v1304 = vpop.f32.mrb[0].mxu0
      %v1305 = vadd.f32 0.0, %v1304
      %v1306 = vpop.f32.mrb[0].mxu0
      %v1307 = vadd.f32 0.0, %v1306
      %1308 = vmatprep.mubr.bf16.mxu0 %v1045
      %1309 = vmatmul.mubr.bf16.gmra.mrb[0].mxu0 %v1044
      %v1310 = vpop.f32.mrb[0].mxu0
      %v1311 = vadd.f32 0.0, %v1310
      %v1312 = vpop.f32.mrb[0].mxu0
      %v1313 = vadd.f32 0.0, %v1312
      %v1314 = vpop.f32.mrb[0].mxu0
      %v1315 = vadd.f32 0.0, %v1314
      %v1316 = vpop.f32.mrb[0].mxu0
      %v1317 = vadd.f32 0.0, %v1316
      %1318 = vmatprep.mubr.bf16.mxu0 %v1052
      %1319 = vmatmul.mubr.bf16.gmra.mrb[0].mxu0 %v1051
      %v1320 = vpop.f32.mrb[0].mxu0
      %v1321 = vadd.f32 0.0, %v1320
      %v1322 = vpop.f32.mrb[0].mxu0
      %v1323 = vadd.f32 0.0, %v1322
      %v1324 = vpop.f32.mrb[0].mxu0
      %v1325 = vadd.f32 0.0, %v1324
      %v1326 = vpop.f32.mrb[0].mxu0
      %v1327 = vadd.f32 0.0, %v1326
      %1328 = vmatprep.mubr.bf16.mxu0 %v1059
      %1329 = vmatmul.mubr.bf16.gmra.mrb[0].mxu0 %v1058
      %v1330 = vpop.f32.mrb[0].mxu0
      %v1331 = vadd.f32 0.0, %v1330
      %v1332 = vpop.f32.mrb[0].mxu0
      %v1333 = vadd.f32 0.0, %v1332
      %v1334 = vpop.f32.mrb[0].mxu0
      %v1335 = vadd.f32 0.0, %v1334
      %v1336 = vpop.f32.mrb[0].mxu0
      %v1337 = vadd.f32 0.0, %v1336
      %1338 = vmatprep.mubr.bf16.mxu0 %v1066
      %1339 = vmatmul.mubr.bf16.gmra.mrb[0].mxu0 %v1065
      %v1340 = vpop.f32.mrb[0].mxu0
      %v1341 = vadd.f32 0.0, %v1340
      %v1342 = vpop.f32.mrb[0].mxu0
      %v1343 = vadd.f32 0.0, %v1342
      %v1344 = vpop.f32.mrb[0].mxu0
      %v1345 = vadd.f32 0.0, %v1344
      %v1346 = vpop.f32.mrb[0].mxu0
      %v1347 = vadd.f32 0.0, %v1346
      %1348 = vmatprep.mubr.bf16.mxu0 %v1073
      %1349 = vmatmul.mubr.bf16.gmra.mrb[0].mxu0 %v1072
      %v1350 = vpop.f32.mrb[0].mxu0
      %v1351 = vadd.f32 0.0, %v1350
      %v1352 = vpop.f32.mrb[0].mxu0
      %v1353 = vadd.f32 0.0, %v1352
      %v1354 = vpop.f32.mrb[0].mxu0
      %v1355 = vadd.f32 0.0, %v1354
      %v1356 = vpop.f32.mrb[0].mxu0
      %v1357 = vadd.f32 0.0, %v1356
      %1358 = vmatprep.mubr.bf16.mxu0 %v1080
      %1359 = vmatmul.mubr.bf16.gmra.mrb[0].mxu0 %v1079
      %v1360 = vpop.f32.mrb[0].mxu0
      %v1361 = vadd.f32 0.0, %v1360
      %v1362 = vpop.f32.mrb[0].mxu0
      %v1363 = vadd.f32 0.0, %v1362
      %v1364 = vpop.f32.mrb[0].mxu0
      %v1365 = vadd.f32 0.0, %v1364
      %v1366 = vpop.f32.mrb[0].mxu0
      %v1367 = vadd.f32 0.0, %v1366
      %1368 = vmatprep.mubr.bf16.mxu0 %v1087
      %1369 = vmatmul.mubr.bf16.gmra.mrb[0].mxu0 %v1086
      %v1370 = vpop.f32.mrb[0].mxu0
      %v1371 = vadd.f32 0.0, %v1370
      %v1372 = vpop.f32.mrb[0].mxu0
      %v1373 = vadd.f32 0.0, %v1372
      %v1374 = vpop.f32.mrb[0].mxu0
      %v1375 = vadd.f32 0.0, %v1374
      %v1376 = vpop.f32.mrb[0].mxu0
      %v1377 = vadd.f32 0.0, %v1376
      %1378 = vmatprep.mubr.bf16.mxu0 %v1094
      %1379 = vmatmul.mubr.bf16.gmra.mrb[0].mxu0 %v1093
      %v1380 = vpop.f32.mrb[0].mxu0
      %v1381 = vadd.f32 0.0, %v1380
      %v1382 = vpop.f32.mrb[0].mxu0
      %v1383 = vadd.f32 0.0, %v1382
      %v1384 = vpop.f32.mrb[0].mxu0
      %v1385 = vadd.f32 0.0, %v1384
      %v1386 = vpop.f32.mrb[0].mxu0
      %v1387 = vadd.f32 0.0, %v1386
      %1388 = vmatprep.mubr.bf16.mxu0 %v1101
      %1389 = vmatmul.mubr.bf16.gmra.mrb[0].mxu0 %v1100
      %v1390 = vpop.f32.mrb[0].mxu0
      %v1391 = vadd.f32 0.0, %v1390
      %v1392 = vpop.f32.mrb[0].mxu0
      %v1393 = vadd.f32 0.0, %v1392
      %v1394 = vpop.f32.mrb[0].mxu0
      %v1395 = vadd.f32 0.0, %v1394
      %v1396 = vpop.f32.mrb[0].mxu0
      %v1397 = vadd.f32 0.0, %v1396
      %1398 = vmatprep.mubr.bf16.mxu0 %v1108
      %1399 = vmatmul.mubr.bf16.gmra.mrb[0].mxu0 %v1107
      %v1400 = vpop.f32.mrb[0].mxu0
      %v1401 = vadd.f32 0.0, %v1400
      %v1402 = vpop.f32.mrb[0].mxu0
      %v1403 = vadd.f32 0.0, %v1402
      %v1404 = vpop.f32.mrb[0].mxu0
      %v1405 = vadd.f32 0.0, %v1404
      %v1406 = vpop.f32.mrb[0].mxu0
      %v1407 = vadd.f32 0.0, %v1406
      %1408 = vmatprep.mubr.bf16.mxu0 %v1115
      %1409 = vmatmul.mubr.bf16.gmra.mrb[0].mxu0 %v1114
      %v1410 = vpop.f32.mrb[0].mxu0
      %v1411 = vadd.f32 0.0, %v1410
      %v1412 = vpop.f32.mrb[0].mxu0
      %v1413 = vadd.f32 0.0, %v1412
      %v1414 = vpop.f32.mrb[0].mxu0
      %v1415 = vadd.f32 0.0, %v1414
      %v1416 = vpop.f32.mrb[0].mxu0
      %v1417 = vadd.f32 0.0, %v1416
      %1418 = vmatprep.mubr.bf16.mxu0 %v1122
      %1419 = vmatmul.mubr.bf16.gmra.mrb[0].mxu0 %v1121
      %v1420 = vpop.f32.mrb[0].mxu0
      %v1421 = vadd.f32 0.0, %v1420
      %v1422 = vpop.f32.mrb[0].mxu0
      %v1423 = vadd.f32 0.0, %v1422
      %v1424 = vpop.f32.mrb[0].mxu0
      %v1425 = vadd.f32 0.0, %v1424
      %v1426 = vpop.f32.mrb[0].mxu0
      %v1427 = vadd.f32 0.0, %v1426
      %1428 = vmatprep.mubr.bf16.mxu0 %v1129
      %1429 = vmatmul.mubr.bf16.gmra.mrb[0].mxu0 %v1128
      %v1430 = vpop.f32.mrb[0].mxu0
      %v1431 = vadd.f32 0.0, %v1430
      %v1432 = vpop.f32.mrb[0].mxu0
      %v1433 = vadd.f32 0.0, %v1432
      %v1434 = vpop.f32.mrb[0].mxu0
      %v1435 = vadd.f32 0.0, %v1434
      %v1436 = vpop.f32.mrb[0].mxu0
      %v1437 = vadd.f32 0.0, %v1436
      %1438 = vmatprep.mubr.bf16.mxu0 %v1136
      %1439 = vmatmul.mubr.bf16.gmra.mrb[0].mxu0 %v1135
      %v1440 = vpop.f32.mrb[0].mxu0
      %v1441 = vadd.f32 0.0, %v1440
      %v1442 = vpop.f32.mrb[0].mxu0
      %v1443 = vadd.f32 0.0, %v1442
      %v1444 = vpop.f32.mrb[0].mxu0
      %v1445 = vadd.f32 0.0, %v1444
      %v1446 = vpop.f32.mrb[0].mxu0
      %v1447 = vadd.f32 0.0, %v1446
      %1448 = vmatprep.mubr.bf16.mxu0 %v1143
      %1449 = vmatmul.mubr.bf16.gmra.mrb[0].mxu0 %v1142
      %v1450 = vpop.f32.mrb[0].mxu0
      %v1451 = vadd.f32 0.0, %v1450
      %v1452 = vpop.f32.mrb[0].mxu0
      %v1453 = vadd.f32 0.0, %v1452
      %v1454 = vpop.f32.mrb[0].mxu0
      %v1455 = vadd.f32 0.0, %v1454
      %v1456 = vpop.f32.mrb[0].mxu0
      %v1457 = vadd.f32 0.0, %v1456
      %1458 = vmatprep.mubr.bf16.mxu0 %v1150
      %1459 = vmatmul.mubr.bf16.gmra.mrb[0].mxu0 %v1149
      %v1460 = vpop.f32.mrb[0].mxu0
      %v1461 = vadd.f32 0.0, %v1460
      %v1462 = vpop.f32.mrb[0].mxu0
      %v1463 = vadd.f32 0.0, %v1462
      %v1464 = vpop.f32.mrb[0].mxu0
      %v1465 = vadd.f32 0.0, %v1464
      %v1466 = vpop.f32.mrb[0].mxu0
      %v1467 = vadd.f32 0.0, %v1466
      %1468 = vdwg.mxu0
      %1469 = vmatprep.subr.bf16.mxu0 %v489
      %1470 = vmatpush1.bf16.msra.mxu0 %v488
      %1471 = vmatprep.subr.bf16.mxu0 %v491
      %1472 = vmatpush1.bf16.msra.mxu0 %v490
      %1473 = vmatprep.subr.bf16.mxu0 %v493
      %1474 = vmatpush1.bf16.msra.mxu0 %v492
      %1475 = vmatprep.subr.bf16.mxu0 %v495
      %1476 = vmatpush1.bf16.msra.mxu0 %v494
      %1477 = vmatprep.subr.bf16.mxu0 %v497
      %1478 = vmatpush1.bf16.msra.mxu0 %v496
      %1479 = vmatprep.subr.bf16.mxu0 %v499
      %1480 = vmatpush1.bf16.msra.mxu0 %v498
      %1481 = vmatprep.subr.bf16.mxu0 %v501
      %1482 = vmatpush1.bf16.msra.mxu0 %v500
      %1483 = vmatprep.subr.bf16.mxu0 %v503
      %1484 = vmatpush1.bf16.msra.mxu0 %v502
      %1485 = vmatprep.subr.bf16.mxu0 %v505
      %1486 = vmatpush1.bf16.msra.mxu0 %v504
      %1487 = vmatprep.subr.bf16.mxu0 %v507
      %1488 = vmatpush1.bf16.msra.mxu0 %v506
      %1489 = vmatprep.subr.bf16.mxu0 %v509
      %1490 = vmatpush1.bf16.msra.mxu0 %v508
      %1491 = vmatprep.subr.bf16.mxu0 %v511
      %1492 = vmatpush1.bf16.msra.mxu0 %v510
      %1493 = vmatprep.subr.bf16.mxu0 %v513
      %1494 = vmatpush1.bf16.msra.mxu0 %v512
      %1495 = vmatprep.subr.bf16.mxu0 %v515
      %1496 = vmatpush1.bf16.msra.mxu0 %v514
      %1497 = vmatprep.subr.bf16.mxu0 %v517
      %1498 = vmatpush1.bf16.msra.mxu0 %v516
      %1499 = vmatprep.subr.bf16.mxu0 %v519
      %1500 = vmatpush1.bf16.msra.mxu0 %v518
      %1501 = vmatprep.mubr.bf16.mxu0 %v963
      %1502 = vmatmul.mubr.bf16.gmra.mrb[0].mxu0 %v962
      %v1503 = vpop.f32.mrb[0].mxu0
      %v1504 = vadd.f32 %v1191, %v1503
      %v1505 = vpop.f32.mrb[0].mxu0
      %v1506 = vadd.f32 %v1193, %v1505
      %v1507 = vpop.f32.mrb[0].mxu0
      %v1508 = vadd.f32 %v1195, %v1507
      %v1509 = vpop.f32.mrb[0].mxu0
      %v1510 = vadd.f32 %v1197, %v1509
      %1511 = vmatprep.mubr.bf16.mxu0 %v970
      %1512 = vmatmul.mubr.bf16.gmra.mrb[0].mxu0 %v969
      %v1513 = vpop.f32.mrb[0].mxu0
      %v1514 = vadd.f32 %v1201, %v1513
      %v1515 = vpop.f32.mrb[0].mxu0
      %v1516 = vadd.f32 %v1203, %v1515
      %v1517 = vpop.f32.mrb[0].mxu0
      %v1518 = vadd.f32 %v1205, %v1517
      %v1519 = vpop.f32.mrb[0].mxu0
      %v1520 = vadd.f32 %v1207, %v1519
      %1521 = vmatprep.mubr.bf16.mxu0 %v977
      %1522 = vmatmul.mubr.bf16.gmra.mrb[0].mxu0 %v976
      %v1523 = vpop.f32.mrb[0].mxu0
      %v1524 = vadd.f32 %v1211, %v1523
      %v1525 = vpop.f32.mrb[0].mxu0
      %v1526 = vadd.f32 %v1213, %v1525
      %v1527 = vpop.f32.mrb[0].mxu0
      %v1528 = vadd.f32 %v1215, %v1527
      %v1529 = vpop.f32.mrb[0].mxu0
      %v1530 = vadd.f32 %v1217, %v1529
      %1531 = vmatprep.mubr.bf16.mxu0 %v984
      %1532 = vmatmul.mubr.bf16.gmra.mrb[0].mxu0 %v983
      %v1533 = vpop.f32.mrb[0].mxu0
      %v1534 = vadd.f32 %v1221, %v1533
      %v1535 = vpop.f32.mrb[0].mxu0
      %v1536 = vadd.f32 %v1223, %v1535
      %v1537 = vpop.f32.mrb[0].mxu0
      %v1538 = vadd.f32 %v1225, %v1537
      %v1539 = vpop.f32.mrb[0].mxu0
      %v1540 = vadd.f32 %v1227, %v1539
      %1541 = vmatprep.mubr.bf16.mxu0 %v991
      %1542 = vmatmul.mubr.bf16.gmra.mrb[0].mxu0 %v990
      %v1543 = vpop.f32.mrb[0].mxu0
      %v1544 = vadd.f32 %v1231, %v1543
      %v1545 = vpop.f32.mrb[0].mxu0
      %v1546 = vadd.f32 %v1233, %v1545
      %v1547 = vpop.f32.mrb[0].mxu0
      %v1548 = vadd.f32 %v1235, %v1547
      %v1549 = vpop.f32.mrb[0].mxu0
      %v1550 = vadd.f32 %v1237, %v1549
      %1551 = vmatprep.mubr.bf16.mxu0 %v998
      %1552 = vmatmul.mubr.bf16.gmra.mrb[0].mxu0 %v997
      %v1553 = vpop.f32.mrb[0].mxu0
      %v1554 = vadd.f32 %v1241, %v1553
      %v1555 = vpop.f32.mrb[0].mxu0
      %v1556 = vadd.f32 %v1243, %v1555
      %v1557 = vpop.f32.mrb[0].mxu0
      %v1558 = vadd.f32 %v1245, %v1557
      %v1559 = vpop.f32.mrb[0].mxu0
      %v1560 = vadd.f32 %v1247, %v1559
      %1561 = vmatprep.mubr.bf16.mxu0 %v1005
      %1562 = vmatmul.mubr.bf16.gmra.mrb[0].mxu0 %v1004
      %v1563 = vpop.f32.mrb[0].mxu0
      %v1564 = vadd.f32 %v1251, %v1563
      %v1565 = vpop.f32.mrb[0].mxu0
      %v1566 = vadd.f32 %v1253, %v1565
      %v1567 = vpop.f32.mrb[0].mxu0
      %v1568 = vadd.f32 %v1255, %v1567
      %v1569 = vpop.f32.mrb[0].mxu0
      %v1570 = vadd.f32 %v1257, %v1569
      %1571 = vmatprep.mubr.bf16.mxu0 %v1012
      %1572 = vmatmul.mubr.bf16.gmra.mrb[0].mxu0 %v1011
      %v1573 = vpop.f32.mrb[0].mxu0
      %v1574 = vadd.f32 %v1261, %v1573
      %v1575 = vpop.f32.mrb[0].mxu0
      %v1576 = vadd.f32 %v1263, %v1575
      %v1577 = vpop.f32.mrb[0].mxu0
      %v1578 = vadd.f32 %v1265, %v1577
      %v1579 = vpop.f32.mrb[0].mxu0
      %v1580 = vadd.f32 %v1267, %v1579
      %1581 = vmatprep.mubr.bf16.mxu0 %v1019
      %1582 = vmatmul.mubr.bf16.gmra.mrb[0].mxu0 %v1018
      %v1583 = vpop.f32.mrb[0].mxu0
      %v1584 = vadd.f32 %v1271, %v1583
      %v1585 = vpop.f32.mrb[0].mxu0
      %v1586 = vadd.f32 %v1273, %v1585
      %v1587 = vpop.f32.mrb[0].mxu0
      %v1588 = vadd.f32 %v1275, %v1587
      %v1589 = vpop.f32.mrb[0].mxu0
      %v1590 = vadd.f32 %v1277, %v1589
      %1591 = vmatprep.mubr.bf16.mxu0 %v1026
      %1592 = vmatmul.mubr.bf16.gmra.mrb[0].mxu0 %v1025
      %v1593 = vpop.f32.mrb[0].mxu0
      %v1594 = vadd.f32 %v1281, %v1593
      %v1595 = vpop.f32.mrb[0].mxu0
      %v1596 = vadd.f32 %v1283, %v1595
      %v1597 = vpop.f32.mrb[0].mxu0
      %v1598 = vadd.f32 %v1285, %v1597
      %v1599 = vpop.f32.mrb[0].mxu0
      %v1600 = vadd.f32 %v1287, %v1599
      %1601 = vmatprep.mubr.bf16.mxu0 %v1033
      %1602 = vmatmul.mubr.bf16.gmra.mrb[0].mxu0 %v1032
      %v1603 = vpop.f32.mrb[0].mxu0
      %v1604 = vadd.f32 %v1291, %v1603
      %v1605 = vpop.f32.mrb[0].mxu0
      %v1606 = vadd.f32 %v1293, %v1605
      %v1607 = vpop.f32.mrb[0].mxu0
      %v1608 = vadd.f32 %v1295, %v1607
      %v1609 = vpop.f32.mrb[0].mxu0
      %v1610 = vadd.f32 %v1297, %v1609
      %1611 = vmatprep.mubr.bf16.mxu0 %v1040
      %1612 = vmatmul.mubr.bf16.gmra.mrb[0].mxu0 %v1039
      %v1613 = vpop.f32.mrb[0].mxu0
      %v1614 = vadd.f32 %v1301, %v1613
      %v1615 = vpop.f32.mrb[0].mxu0
      %v1616 = vadd.f32 %v1303, %v1615
      %v1617 = vpop.f32.mrb[0].mxu0
      %v1618 = vadd.f32 %v1305, %v1617
      %v1619 = vpop.f32.mrb[0].mxu0
      %v1620 = vadd.f32 %v1307, %v1619
      %1621 = vmatprep.mubr.bf16.mxu0 %v1047
      %1622 = vmatmul.mubr.bf16.gmra.mrb[0].mxu0 %v1046
      %v1623 = vpop.f32.mrb[0].mxu0
      %v1624 = vadd.f32 %v1311, %v1623
      %v1625 = vpop.f32.mrb[0].mxu0
      %v1626 = vadd.f32 %v1313, %v1625
      %v1627 = vpop.f32.mrb[0].mxu0
      %v1628 = vadd.f32 %v1315, %v1627
      %v1629 = vpop.f32.mrb[0].mxu0
      %v1630 = vadd.f32 %v1317, %v1629
      %1631 = vmatprep.mubr.bf16.mxu0 %v1054
      %1632 = vmatmul.mubr.bf16.gmra.mrb[0].mxu0 %v1053
      %v1633 = vpop.f32.mrb[0].mxu0
      %v1634 = vadd.f32 %v1321, %v1633
      %v1635 = vpop.f32.mrb[0].mxu0
      %v1636 = vadd.f32 %v1323, %v1635
      %v1637 = vpop.f32.mrb[0].mxu0
      %v1638 = vadd.f32 %v1325, %v1637
      %v1639 = vpop.f32.mrb[0].mxu0
      %v1640 = vadd.f32 %v1327, %v1639
      %1641 = vmatprep.mubr.bf16.mxu0 %v1061
      %1642 = vmatmul.mubr.bf16.gmra.mrb[0].mxu0 %v1060
      %v1643 = vpop.f32.mrb[0].mxu0
      %v1644 = vadd.f32 %v1331, %v1643
      %v1645 = vpop.f32.mrb[0].mxu0
      %v1646 = vadd.f32 %v1333, %v1645
      %v1647 = vpop.f32.mrb[0].mxu0
      %v1648 = vadd.f32 %v1335, %v1647
      %v1649 = vpop.f32.mrb[0].mxu0
      %v1650 = vadd.f32 %v1337, %v1649
      %1651 = vmatprep.mubr.bf16.mxu0 %v1068
      %1652 = vmatmul.mubr.bf16.gmra.mrb[0].mxu0 %v1067
      %v1653 = vpop.f32.mrb[0].mxu0
      %v1654 = vadd.f32 %v1341, %v1653
      %v1655 = vpop.f32.mrb[0].mxu0
      %v1656 = vadd.f32 %v1343, %v1655
      %v1657 = vpop.f32.mrb[0].mxu0
      %v1658 = vadd.f32 %v1345, %v1657
      %v1659 = vpop.f32.mrb[0].mxu0
      %v1660 = vadd.f32 %v1347, %v1659
      %1661 = vmatprep.mubr.bf16.mxu0 %v1075
      %1662 = vmatmul.mubr.bf16.gmra.mrb[0].mxu0 %v1074
      %v1663 = vpop.f32.mrb[0].mxu0
      %v1664 = vadd.f32 %v1351, %v1663
      %v1665 = vpop.f32.mrb[0].mxu0
      %v1666 = vadd.f32 %v1353, %v1665
      %v1667 = vpop.f32.mrb[0].mxu0
      %v1668 = vadd.f32 %v1355, %v1667
      %v1669 = vpop.f32.mrb[0].mxu0
      %v1670 = vadd.f32 %v1357, %v1669
      %1671 = vmatprep.mubr.bf16.mxu0 %v1082
      %1672 = vmatmul.mubr.bf16.gmra.mrb[0].mxu0 %v1081
      %v1673 = vpop.f32.mrb[0].mxu0
      %v1674 = vadd.f32 %v1361, %v1673
      %v1675 = vpop.f32.mrb[0].mxu0
      %v1676 = vadd.f32 %v1363, %v1675
      %v1677 = vpop.f32.mrb[0].mxu0
      %v1678 = vadd.f32 %v1365, %v1677
      %v1679 = vpop.f32.mrb[0].mxu0
      %v1680 = vadd.f32 %v1367, %v1679
      %1681 = vmatprep.mubr.bf16.mxu0 %v1089
      %1682 = vmatmul.mubr.bf16.gmra.mrb[0].mxu0 %v1088
      %v1683 = vpop.f32.mrb[0].mxu0
      %v1684 = vadd.f32 %v1371, %v1683
      %v1685 = vpop.f32.mrb[0].mxu0
      %v1686 = vadd.f32 %v1373, %v1685
      %v1687 = vpop.f32.mrb[0].mxu0
      %v1688 = vadd.f32 %v1375, %v1687
      %v1689 = vpop.f32.mrb[0].mxu0
      %v1690 = vadd.f32 %v1377, %v1689
      %1691 = vmatprep.mubr.bf16.mxu0 %v1096
      %1692 = vmatmul.mubr.bf16.gmra.mrb[0].mxu0 %v1095
      %v1693 = vpop.f32.mrb[0].mxu0
      %v1694 = vadd.f32 %v1381, %v1693
      %v1695 = vpop.f32.mrb[0].mxu0
      %v1696 = vadd.f32 %v1383, %v1695
      %v1697 = vpop.f32.mrb[0].mxu0
      %v1698 = vadd.f32 %v1385, %v1697
      %v1699 = vpop.f32.mrb[0].mxu0
      %v1700 = vadd.f32 %v1387, %v1699
      %1701 = vmatprep.mubr.bf16.mxu0 %v1103
      %1702 = vmatmul.mubr.bf16.gmra.mrb[0].mxu0 %v1102
      %v1703 = vpop.f32.mrb[0].mxu0
      %v1704 = vadd.f32 %v1391, %v1703
      %v1705 = vpop.f32.mrb[0].mxu0
      %v1706 = vadd.f32 %v1393, %v1705
      %v1707 = vpop.f32.mrb[0].mxu0
      %v1708 = vadd.f32 %v1395, %v1707
      %v1709 = vpop.f32.mrb[0].mxu0
      %v1710 = vadd.f32 %v1397, %v1709
      %1711 = vmatprep.mubr.bf16.mxu0 %v1110
      %1712 = vmatmul.mubr.bf16.gmra.mrb[0].mxu0 %v1109
      %v1713 = vpop.f32.mrb[0].mxu0
      %v1714 = vadd.f32 %v1401, %v1713
      %v1715 = vpop.f32.mrb[0].mxu0
      %v1716 = vadd.f32 %v1403, %v1715
      %v1717 = vpop.f32.mrb[0].mxu0
      %v1718 = vadd.f32 %v1405, %v1717
      %v1719 = vpop.f32.mrb[0].mxu0
      %v1720 = vadd.f32 %v1407, %v1719
      %1721 = vmatprep.mubr.bf16.mxu0 %v1117
      %1722 = vmatmul.mubr.bf16.gmra.mrb[0].mxu0 %v1116
      %v1723 = vpop.f32.mrb[0].mxu0
      %v1724 = vadd.f32 %v1411, %v1723
      %v1725 = vpop.f32.mrb[0].mxu0
      %v1726 = vadd.f32 %v1413, %v1725
      %v1727 = vpop.f32.mrb[0].mxu0
      %v1728 = vadd.f32 %v1415, %v1727
      %v1729 = vpop.f32.mrb[0].mxu0
      %v1730 = vadd.f32 %v1417, %v1729
      %1731 = vmatprep.mubr.bf16.mxu0 %v1124
      %1732 = vmatmul.mubr.bf16.gmra.mrb[0].mxu0 %v1123
      %v1733 = vpop.f32.mrb[0].mxu0
      %v1734 = vadd.f32 %v1421, %v1733
      %v1735 = vpop.f32.mrb[0].mxu0
      %v1736 = vadd.f32 %v1423, %v1735
      %v1737 = vpop.f32.mrb[0].mxu0
      %v1738 = vadd.f32 %v1425, %v1737
      %v1739 = vpop.f32.mrb[0].mxu0
      %v1740 = vadd.f32 %v1427, %v1739
      %1741 = vmatprep.mubr.bf16.mxu0 %v1131
      %1742 = vmatmul.mubr.bf16.gmra.mrb[0].mxu0 %v1130
      %v1743 = vpop.f32.mrb[0].mxu0
      %v1744 = vadd.f32 %v1431, %v1743
      %v1745 = vpop.f32.mrb[0].mxu0
      %v1746 = vadd.f32 %v1433, %v1745
      %v1747 = vpop.f32.mrb[0].mxu0
      %v1748 = vadd.f32 %v1435, %v1747
      %v1749 = vpop.f32.mrb[0].mxu0
      %v1750 = vadd.f32 %v1437, %v1749
      %1751 = vmatprep.mubr.bf16.mxu0 %v1138
      %1752 = vmatmul.mubr.bf16.gmra.mrb[0].mxu0 %v1137
      %v1753 = vpop.f32.mrb[0].mxu0
      %v1754 = vadd.f32 %v1441, %v1753
      %v1755 = vpop.f32.mrb[0].mxu0
      %v1756 = vadd.f32 %v1443, %v1755
      %v1757 = vpop.f32.mrb[0].mxu0
      %v1758 = vadd.f32 %v1445, %v1757
      %v1759 = vpop.f32.mrb[0].mxu0
      %v1760 = vadd.f32 %v1447, %v1759
      %1761 = vmatprep.mubr.bf16.mxu0 %v1145
      %1762 = vmatmul.mubr.bf16.gmra.mrb[0].mxu0 %v1144
      %v1763 = vpop.f32.mrb[0].mxu0
      %v1764 = vadd.f32 %v1451, %v1763
      %v1765 = vpop.f32.mrb[0].mxu0
      %v1766 = vadd.f32 %v1453, %v1765
      %v1767 = vpop.f32.mrb[0].mxu0
      %v1768 = vadd.f32 %v1455, %v1767
      %v1769 = vpop.f32.mrb[0].mxu0
      %v1770 = vadd.f32 %v1457, %v1769
      %1771 = vmatprep.mubr.bf16.mxu0 %v1152
      %1772 = vmatmul.mubr.bf16.gmra.mrb[0].mxu0 %v1151
      %v1773 = vpop.f32.mrb[0].mxu0
      %v1774 = vadd.f32 %v1461, %v1773
      %v1775 = vpop.f32.mrb[0].mxu0
      %v1776 = vadd.f32 %v1463, %v1775
      %v1777 = vpop.f32.mrb[0].mxu0
      %v1778 = vadd.f32 %v1465, %v1777
      %v1779 = vpop.f32.mrb[0].mxu0
      %v1780 = vadd.f32 %v1467, %v1779
      %1781 = vdwg.mxu0
      %1782 = vmatprep.subr.bf16.mxu0 %v521
      %1783 = vmatpush1.bf16.msra.mxu0 %v520
      %1784 = vmatprep.subr.bf16.mxu0 %v523
      %1785 = vmatpush1.bf16.msra.mxu0 %v522
      %1786 = vmatprep.subr.bf16.mxu0 %v525
      %1787 = vmatpush1.bf16.msra.mxu0 %v524
      %1788 = vmatprep.subr.bf16.mxu0 %v527
      %1789 = vmatpush1.bf16.msra.mxu0 %v526
      %1790 = vmatprep.subr.bf16.mxu0 %v529
      %1791 = vmatpush1.bf16.msra.mxu0 %v528
      %1792 = vmatprep.subr.bf16.mxu0 %v531
      %1793 = vmatpush1.bf16.msra.mxu0 %v530
      %1794 = vmatprep.subr.bf16.mxu0 %v533
      %1795 = vmatpush1.bf16.msra.mxu0 %v532
      %1796 = vmatprep.subr.bf16.mxu0 %v535
      %1797 = vmatpush1.bf16.msra.mxu0 %v534
      %1798 = vmatprep.subr.bf16.mxu0 %v537
      %1799 = vmatpush1.bf16.msra.mxu0 %v536
      %1800 = vmatprep.subr.bf16.mxu0 %v539
      %1801 = vmatpush1.bf16.msra.mxu0 %v538
      %1802 = vmatprep.subr.bf16.mxu0 %v541
      %1803 = vmatpush1.bf16.msra.mxu0 %v540
      %1804 = vmatprep.subr.bf16.mxu0 %v543
      %1805 = vmatpush1.bf16.msra.mxu0 %v542
      %1806 = vmatprep.subr.bf16.mxu0 %v545
      %1807 = vmatpush1.bf16.msra.mxu0 %v544
      %1808 = vmatprep.subr.bf16.mxu0 %v547
      %1809 = vmatpush1.bf16.msra.mxu0 %v546
      %1810 = vmatprep.subr.bf16.mxu0 %v549
      %1811 = vmatpush1.bf16.msra.mxu0 %v548
      %1812 = vmatprep.subr.bf16.mxu0 %v551
      %1813 = vmatpush1.bf16.msra.mxu0 %v550
      %1814 = vmatprep.mubr.bf16.mxu0 %v965
      %1815 = vmatmul.mubr.bf16.gmra.mrb[0].mxu0 %v964
      %v1816 = vpop.f32.mrb[0].mxu0
      %v1817 = vadd.f32 %v1504, %v1816
      %v1818 = vpop.f32.mrb[0].mxu0
      %v1819 = vadd.f32 %v1506, %v1818
      %v1820 = vpop.f32.mrb[0].mxu0
      %v1821 = vadd.f32 %v1508, %v1820
      %v1822 = vpop.f32.mrb[0].mxu0
      %v1823 = vadd.f32 %v1510, %v1822
      %1824 = vmatprep.mubr.bf16.mxu0 %v972
      %1825 = vmatmul.mubr.bf16.gmra.mrb[0].mxu0 %v971
      %v1826 = vpop.f32.mrb[0].mxu0
      %v1827 = vadd.f32 %v1514, %v1826
      %v1828 = vpop.f32.mrb[0].mxu0
      %v1829 = vadd.f32 %v1516, %v1828
      %v1830 = vpop.f32.mrb[0].mxu0
      %v1831 = vadd.f32 %v1518, %v1830
      %v1832 = vpop.f32.mrb[0].mxu0
      %v1833 = vadd.f32 %v1520, %v1832
      %1834 = vmatprep.mubr.bf16.mxu0 %v979
      %1835 = vmatmul.mubr.bf16.gmra.mrb[0].mxu0 %v978
      %v1836 = vpop.f32.mrb[0].mxu0
      %v1837 = vadd.f32 %v1524, %v1836
      %v1838 = vpop.f32.mrb[0].mxu0
      %v1839 = vadd.f32 %v1526, %v1838
      %v1840 = vpop.f32.mrb[0].mxu0
      %v1841 = vadd.f32 %v1528, %v1840
      %v1842 = vpop.f32.mrb[0].mxu0
      %v1843 = vadd.f32 %v1530, %v1842
      %1844 = vmatprep.mubr.bf16.mxu0 %v986
      %1845 = vmatmul.mubr.bf16.gmra.mrb[0].mxu0 %v985
      %v1846 = vpop.f32.mrb[0].mxu0
      %v1847 = vadd.f32 %v1534, %v1846
      %v1848 = vpop.f32.mrb[0].mxu0
      %v1849 = vadd.f32 %v1536, %v1848
      %v1850 = vpop.f32.mrb[0].mxu0
      %v1851 = vadd.f32 %v1538, %v1850
      %v1852 = vpop.f32.mrb[0].mxu0
      %v1853 = vadd.f32 %v1540, %v1852
      %1854 = vmatprep.mubr.bf16.mxu0 %v993
      %1855 = vmatmul.mubr.bf16.gmra.mrb[0].mxu0 %v992
      %v1856 = vpop.f32.mrb[0].mxu0
      %v1857 = vadd.f32 %v1544, %v1856
      %v1858 = vpop.f32.mrb[0].mxu0
      %v1859 = vadd.f32 %v1546, %v1858
      %v1860 = vpop.f32.mrb[0].mxu0
      %v1861 = vadd.f32 %v1548, %v1860
      %v1862 = vpop.f32.mrb[0].mxu0
      %v1863 = vadd.f32 %v1550, %v1862
      %1864 = vmatprep.mubr.bf16.mxu0 %v1000
      %1865 = vmatmul.mubr.bf16.gmra.mrb[0].mxu0 %v999
      %v1866 = vpop.f32.mrb[0].mxu0
      %v1867 = vadd.f32 %v1554, %v1866
      %v1868 = vpop.f32.mrb[0].mxu0
      %v1869 = vadd.f32 %v1556, %v1868
      %v1870 = vpop.f32.mrb[0].mxu0
      %v1871 = vadd.f32 %v1558, %v1870
      %v1872 = vpop.f32.mrb[0].mxu0
      %v1873 = vadd.f32 %v1560, %v1872
      %1874 = vmatprep.mubr.bf16.mxu0 %v1007
      %1875 = vmatmul.mubr.bf16.gmra.mrb[0].mxu0 %v1006
      %v1876 = vpop.f32.mrb[0].mxu0
      %v1877 = vadd.f32 %v1564, %v1876
      %v1878 = vpop.f32.mrb[0].mxu0
      %v1879 = vadd.f32 %v1566, %v1878
      %v1880 = vpop.f32.mrb[0].mxu0
      %v1881 = vadd.f32 %v1568, %v1880
      %v1882 = vpop.f32.mrb[0].mxu0
      %v1883 = vadd.f32 %v1570, %v1882
      %1884 = vmatprep.mubr.bf16.mxu0 %v1014
      %1885 = vmatmul.mubr.bf16.gmra.mrb[0].mxu0 %v1013
      %v1886 = vpop.f32.mrb[0].mxu0
      %v1887 = vadd.f32 %v1574, %v1886
      %v1888 = vpop.f32.mrb[0].mxu0
      %v1889 = vadd.f32 %v1576, %v1888
      %v1890 = vpop.f32.mrb[0].mxu0
      %v1891 = vadd.f32 %v1578, %v1890
      %v1892 = vpop.f32.mrb[0].mxu0
      %v1893 = vadd.f32 %v1580, %v1892
      %1894 = vmatprep.mubr.bf16.mxu0 %v1021
      %1895 = vmatmul.mubr.bf16.gmra.mrb[0].mxu0 %v1020
      %v1896 = vpop.f32.mrb[0].mxu0
      %v1897 = vadd.f32 %v1584, %v1896
      %v1898 = vpop.f32.mrb[0].mxu0
      %v1899 = vadd.f32 %v1586, %v1898
      %v1900 = vpop.f32.mrb[0].mxu0
      %v1901 = vadd.f32 %v1588, %v1900
      %v1902 = vpop.f32.mrb[0].mxu0
      %v1903 = vadd.f32 %v1590, %v1902
      %1904 = vmatprep.mubr.bf16.mxu0 %v1028
      %1905 = vmatmul.mubr.bf16.gmra.mrb[0].mxu0 %v1027
      %v1906 = vpop.f32.mrb[0].mxu0
      %v1907 = vadd.f32 %v1594, %v1906
      %v1908 = vpop.f32.mrb[0].mxu0
      %v1909 = vadd.f32 %v1596, %v1908
      %v1910 = vpop.f32.mrb[0].mxu0
      %v1911 = vadd.f32 %v1598, %v1910
      %v1912 = vpop.f32.mrb[0].mxu0
      %v1913 = vadd.f32 %v1600, %v1912
      %1914 = vmatprep.mubr.bf16.mxu0 %v1035
      %1915 = vmatmul.mubr.bf16.gmra.mrb[0].mxu0 %v1034
      %v1916 = vpop.f32.mrb[0].mxu0
      %v1917 = vadd.f32 %v1604, %v1916
      %v1918 = vpop.f32.mrb[0].mxu0
      %v1919 = vadd.f32 %v1606, %v1918
      %v1920 = vpop.f32.mrb[0].mxu0
      %v1921 = vadd.f32 %v1608, %v1920
      %v1922 = vpop.f32.mrb[0].mxu0
      %v1923 = vadd.f32 %v1610, %v1922
      %1924 = vmatprep.mubr.bf16.mxu0 %v1042
      %1925 = vmatmul.mubr.bf16.gmra.mrb[0].mxu0 %v1041
      %v1926 = vpop.f32.mrb[0].mxu0
      %v1927 = vadd.f32 %v1614, %v1926
      %v1928 = vpop.f32.mrb[0].mxu0
      %v1929 = vadd.f32 %v1616, %v1928
      %v1930 = vpop.f32.mrb[0].mxu0
      %v1931 = vadd.f32 %v1618, %v1930
      %v1932 = vpop.f32.mrb[0].mxu0
      %v1933 = vadd.f32 %v1620, %v1932
      %1934 = vmatprep.mubr.bf16.mxu0 %v1049
      %1935 = vmatmul.mubr.bf16.gmra.mrb[0].mxu0 %v1048
      %v1936 = vpop.f32.mrb[0].mxu0
      %v1937 = vadd.f32 %v1624, %v1936
      %v1938 = vpop.f32.mrb[0].mxu0
      %v1939 = vadd.f32 %v1626, %v1938
      %v1940 = vpop.f32.mrb[0].mxu0
      %v1941 = vadd.f32 %v1628, %v1940
      %v1942 = vpop.f32.mrb[0].mxu0
      %v1943 = vadd.f32 %v1630, %v1942
      %1944 = vmatprep.mubr.bf16.mxu0 %v1056
      %1945 = vmatmul.mubr.bf16.gmra.mrb[0].mxu0 %v1055
      %v1946 = vpop.f32.mrb[0].mxu0
      %v1947 = vadd.f32 %v1634, %v1946
      %v1948 = vpop.f32.mrb[0].mxu0
      %v1949 = vadd.f32 %v1636, %v1948
      %v1950 = vpop.f32.mrb[0].mxu0
      %v1951 = vadd.f32 %v1638, %v1950
      %v1952 = vpop.f32.mrb[0].mxu0
      %v1953 = vadd.f32 %v1640, %v1952
      %1954 = vmatprep.mubr.bf16.mxu0 %v1063
      %1955 = vmatmul.mubr.bf16.gmra.mrb[0].mxu0 %v1062
      %v1956 = vpop.f32.mrb[0].mxu0
      %v1957 = vadd.f32 %v1644, %v1956
      %v1958 = vpop.f32.mrb[0].mxu0
      %v1959 = vadd.f32 %v1646, %v1958
      %v1960 = vpop.f32.mrb[0].mxu0
      %v1961 = vadd.f32 %v1648, %v1960
      %v1962 = vpop.f32.mrb[0].mxu0
      %v1963 = vadd.f32 %v1650, %v1962
      %1964 = vmatprep.mubr.bf16.mxu0 %v1070
      %1965 = vmatmul.mubr.bf16.gmra.mrb[0].mxu0 %v1069
      %v1966 = vpop.f32.mrb[0].mxu0
      %v1967 = vadd.f32 %v1654, %v1966
      %v1968 = vpop.f32.mrb[0].mxu0
      %v1969 = vadd.f32 %v1656, %v1968
      %v1970 = vpop.f32.mrb[0].mxu0
      %v1971 = vadd.f32 %v1658, %v1970
      %v1972 = vpop.f32.mrb[0].mxu0
      %v1973 = vadd.f32 %v1660, %v1972
      %1974 = vmatprep.mubr.bf16.mxu0 %v1077
      %1975 = vmatmul.mubr.bf16.gmra.mrb[0].mxu0 %v1076
      %v1976 = vpop.f32.mrb[0].mxu0
      %v1977 = vadd.f32 %v1664, %v1976
      %v1978 = vpop.f32.mrb[0].mxu0
      %v1979 = vadd.f32 %v1666, %v1978
      %v1980 = vpop.f32.mrb[0].mxu0
      %v1981 = vadd.f32 %v1668, %v1980
      %v1982 = vpop.f32.mrb[0].mxu0
      %v1983 = vadd.f32 %v1670, %v1982
      %1984 = vmatprep.mubr.bf16.mxu0 %v1084
      %1985 = vmatmul.mubr.bf16.gmra.mrb[0].mxu0 %v1083
      %v1986 = vpop.f32.mrb[0].mxu0
      %v1987 = vadd.f32 %v1674, %v1986
      %v1988 = vpop.f32.mrb[0].mxu0
      %v1989 = vadd.f32 %v1676, %v1988
      %v1990 = vpop.f32.mrb[0].mxu0
      %v1991 = vadd.f32 %v1678, %v1990
      %v1992 = vpop.f32.mrb[0].mxu0
      %v1993 = vadd.f32 %v1680, %v1992
      %1994 = vmatprep.mubr.bf16.mxu0 %v1091
      %1995 = vmatmul.mubr.bf16.gmra.mrb[0].mxu0 %v1090
      %v1996 = vpop.f32.mrb[0].mxu0
      %v1997 = vadd.f32 %v1684, %v1996
      %v1998 = vpop.f32.mrb[0].mxu0
      %v1999 = vadd.f32 %v1686, %v1998
      %v2000 = vpop.f32.mrb[0].mxu0
      %v2001 = vadd.f32 %v1688, %v2000
      %v2002 = vpop.f32.mrb[0].mxu0
      %v2003 = vadd.f32 %v1690, %v2002
      %2004 = vmatprep.mubr.bf16.mxu0 %v1098
      %2005 = vmatmul.mubr.bf16.gmra.mrb[0].mxu0 %v1097
      %v2006 = vpop.f32.mrb[0].mxu0
      %v2007 = vadd.f32 %v1694, %v2006
      %v2008 = vpop.f32.mrb[0].mxu0
      %v2009 = vadd.f32 %v1696, %v2008
      %v2010 = vpop.f32.mrb[0].mxu0
      %v2011 = vadd.f32 %v1698, %v2010
      %v2012 = vpop.f32.mrb[0].mxu0
      %v2013 = vadd.f32 %v1700, %v2012
      %2014 = vmatprep.mubr.bf16.mxu0 %v1105
      %2015 = vmatmul.mubr.bf16.gmra.mrb[0].mxu0 %v1104
      %v2016 = vpop.f32.mrb[0].mxu0
      %v2017 = vadd.f32 %v1704, %v2016
      %v2018 = vpop.f32.mrb[0].mxu0
      %v2019 = vadd.f32 %v1706, %v2018
      %v2020 = vpop.f32.mrb[0].mxu0
      %v2021 = vadd.f32 %v1708, %v2020
      %v2022 = vpop.f32.mrb[0].mxu0
      %v2023 = vadd.f32 %v1710, %v2022
      %2024 = vmatprep.mubr.bf16.mxu0 %v1112
      %2025 = vmatmul.mubr.bf16.gmra.mrb[0].mxu0 %v1111
      %v2026 = vpop.f32.mrb[0].mxu0
      %v2027 = vadd.f32 %v1714, %v2026
      %v2028 = vpop.f32.mrb[0].mxu0
      %v2029 = vadd.f32 %v1716, %v2028
      %v2030 = vpop.f32.mrb[0].mxu0
      %v2031 = vadd.f32 %v1718, %v2030
      %v2032 = vpop.f32.mrb[0].mxu0
      %v2033 = vadd.f32 %v1720, %v2032
      %2034 = vmatprep.mubr.bf16.mxu0 %v1119
      %2035 = vmatmul.mubr.bf16.gmra.mrb[0].mxu0 %v1118
      %v2036 = vpop.f32.mrb[0].mxu0
      %v2037 = vadd.f32 %v1724, %v2036
      %v2038 = vpop.f32.mrb[0].mxu0
      %v2039 = vadd.f32 %v1726, %v2038
      %v2040 = vpop.f32.mrb[0].mxu0
      %v2041 = vadd.f32 %v1728, %v2040
      %v2042 = vpop.f32.mrb[0].mxu0
      %v2043 = vadd.f32 %v1730, %v2042
      %2044 = vmatprep.mubr.bf16.mxu0 %v1126
      %2045 = vmatmul.mubr.bf16.gmra.mrb[0].mxu0 %v1125
      %v2046 = vpop.f32.mrb[0].mxu0
      %v2047 = vadd.f32 %v1734, %v2046
      %v2048 = vpop.f32.mrb[0].mxu0
      %v2049 = vadd.f32 %v1736, %v2048
      %v2050 = vpop.f32.mrb[0].mxu0
      %v2051 = vadd.f32 %v1738, %v2050
      %v2052 = vpop.f32.mrb[0].mxu0
      %v2053 = vadd.f32 %v1740, %v2052
      %2054 = vmatprep.mubr.bf16.mxu0 %v1133
      %2055 = vmatmul.mubr.bf16.gmra.mrb[0].mxu0 %v1132
      %v2056 = vpop.f32.mrb[0].mxu0
      %v2057 = vadd.f32 %v1744, %v2056
      %v2058 = vpop.f32.mrb[0].mxu0
      %v2059 = vadd.f32 %v1746, %v2058
      %v2060 = vpop.f32.mrb[0].mxu0
      %v2061 = vadd.f32 %v1748, %v2060
      %v2062 = vpop.f32.mrb[0].mxu0
      %v2063 = vadd.f32 %v1750, %v2062
      %2064 = vmatprep.mubr.bf16.mxu0 %v1140
      %2065 = vmatmul.mubr.bf16.gmra.mrb[0].mxu0 %v1139
      %v2066 = vpop.f32.mrb[0].mxu0
      %v2067 = vadd.f32 %v1754, %v2066
      %v2068 = vpop.f32.mrb[0].mxu0
      %v2069 = vadd.f32 %v1756, %v2068
      %v2070 = vpop.f32.mrb[0].mxu0
      %v2071 = vadd.f32 %v1758, %v2070
      %v2072 = vpop.f32.mrb[0].mxu0
      %v2073 = vadd.f32 %v1760, %v2072
      %2074 = vmatprep.mubr.bf16.mxu0 %v1147
      %2075 = vmatmul.mubr.bf16.gmra.mrb[0].mxu0 %v1146
      %v2076 = vpop.f32.mrb[0].mxu0
      %v2077 = vadd.f32 %v1764, %v2076
      %v2078 = vpop.f32.mrb[0].mxu0
      %v2079 = vadd.f32 %v1766, %v2078
      %v2080 = vpop.f32.mrb[0].mxu0
      %v2081 = vadd.f32 %v1768, %v2080
      %v2082 = vpop.f32.mrb[0].mxu0
      %v2083 = vadd.f32 %v1770, %v2082
      %2084 = vmatprep.mubr.bf16.mxu0 %v1154
      %2085 = vmatmul.mubr.bf16.gmra.mrb[0].mxu0 %v1153
      %v2086 = vpop.f32.mrb[0].mxu0
      %v2087 = vadd.f32 %v1774, %v2086
      %v2088 = vpop.f32.mrb[0].mxu0
      %v2089 = vadd.f32 %v1776, %v2088
      %v2090 = vpop.f32.mrb[0].mxu0
      %v2091 = vadd.f32 %v1778, %v2090
      %v2092 = vpop.f32.mrb[0].mxu0
      %v2093 = vadd.f32 %v1780, %v2092
      %2094 = vdwg.mxu0
      %2095 = vmatprep.subr.bf16.mxu0 %v553
      %2096 = vmatpush1.bf16.msra.mxu0 %v552
      %2097 = vmatprep.subr.bf16.mxu0 %v555
      %2098 = vmatpush1.bf16.msra.mxu0 %v554
      %2099 = vmatprep.subr.bf16.mxu0 %v557
      %2100 = vmatpush1.bf16.msra.mxu0 %v556
      %2101 = vmatprep.subr.bf16.mxu0 %v559
      %2102 = vmatpush1.bf16.msra.mxu0 %v558
      %2103 = vmatprep.subr.bf16.mxu0 %v561
      %2104 = vmatpush1.bf16.msra.mxu0 %v560
      %2105 = vmatprep.subr.bf16.mxu0 %v563
      %2106 = vmatpush1.bf16.msra.mxu0 %v562
      %2107 = vmatprep.subr.bf16.mxu0 %v565
      %2108 = vmatpush1.bf16.msra.mxu0 %v564
      %2109 = vmatprep.subr.bf16.mxu0 %v567
      %2110 = vmatpush1.bf16.msra.mxu0 %v566
      %2111 = vmatprep.subr.bf16.mxu0 0
      %2112 = vmatpush1.bf16.msra.mxu0 0
      %2113 = vmatprep.subr.bf16.mxu0 0
      %2114 = vmatpush1.bf16.msra.mxu0 0
      %2115 = vmatprep.subr.bf16.mxu0 0
      %2116 = vmatpush1.bf16.msra.mxu0 0
      %2117 = vmatprep.subr.bf16.mxu0 0
      %2118 = vmatpush1.bf16.msra.mxu0 0
      %2119 = vmatprep.subr.bf16.mxu0 0
      %2120 = vmatpush1.bf16.msra.mxu0 0
      %2121 = vmatprep.subr.bf16.mxu0 0
      %2122 = vmatpush1.bf16.msra.mxu0 0
      %2123 = vmatprep.subr.bf16.mxu0 0
      %2124 = vmatpush1.bf16.msra.mxu0 0
      %2125 = vmatprep.subr.bf16.mxu0 0
      %2126 = vmatpush1.bf16.msra.mxu0 0
      %2127 = vmatprep.mubr.bf16.mxu0 0
      %2128 = vmatmul.mubr.bf16.gmra.mrb[0].mxu0 %v966
      %v2129 = vpop.f32.mrb[0].mxu0
      %v2130 = vadd.f32 %v1817, %v2129
      %v2131 = vpop.f32.mrb[0].mxu0
      %v2132 = vadd.f32 %v1819, %v2131
      %v2133 = vpop.f32.mrb[0].mxu0
      %v2134 = vadd.f32 %v1821, %v2133
      %v2135 = vpop.f32.mrb[0].mxu0
      %v2136 = vadd.f32 %v1823, %v2135
      %2137 = vmatprep.mubr.bf16.mxu0 0
      %2138 = vmatmul.mubr.bf16.gmra.mrb[0].mxu0 %v973
      %v2139 = vpop.f32.mrb[0].mxu0
      %v2140 = vadd.f32 %v1827, %v2139
      %v2141 = vpop.f32.mrb[0].mxu0
      %v2142 = vadd.f32 %v1829, %v2141
      %v2143 = vpop.f32.mrb[0].mxu0
      %v2144 = vadd.f32 %v1831, %v2143
      %v2145 = vpop.f32.mrb[0].mxu0
      %v2146 = vadd.f32 %v1833, %v2145
      %2147 = vmatprep.mubr.bf16.mxu0 0
      %2148 = vmatmul.mubr.bf16.gmra.mrb[0].mxu0 %v980
      %v2149 = vpop.f32.mrb[0].mxu0
      %v2150 = vadd.f32 %v1837, %v2149
      %v2151 = vpop.f32.mrb[0].mxu0
      %v2152 = vadd.f32 %v1839, %v2151
      %v2153 = vpop.f32.mrb[0].mxu0
      %v2154 = vadd.f32 %v1841, %v2153
      %v2155 = vpop.f32.mrb[0].mxu0
      %v2156 = vadd.f32 %v1843, %v2155
      %2157 = vmatprep.mubr.bf16.mxu0 0
      %2158 = vmatmul.mubr.bf16.gmra.mrb[0].mxu0 %v987
      %v2159 = vpop.f32.mrb[0].mxu0
      %v2160 = vadd.f32 %v1847, %v2159
      %v2161 = vpop.f32.mrb[0].mxu0
      %v2162 = vadd.f32 %v1849, %v2161
      %v2163 = vpop.f32.mrb[0].mxu0
      %v2164 = vadd.f32 %v1851, %v2163
      %v2165 = vpop.f32.mrb[0].mxu0
      %v2166 = vadd.f32 %v1853, %v2165
      %2167 = vmatprep.mubr.bf16.mxu0 0
      %2168 = vmatmul.mubr.bf16.gmra.mrb[0].mxu0 %v994
      %v2169 = vpop.f32.mrb[0].mxu0
      %v2170 = vadd.f32 %v1857, %v2169
      %v2171 = vpop.f32.mrb[0].mxu0
      %v2172 = vadd.f32 %v1859, %v2171
      %v2173 = vpop.f32.mrb[0].mxu0
      %v2174 = vadd.f32 %v1861, %v2173
      %v2175 = vpop.f32.mrb[0].mxu0
      %v2176 = vadd.f32 %v1863, %v2175
      %2177 = vmatprep.mubr.bf16.mxu0 0
      %2178 = vmatmul.mubr.bf16.gmra.mrb[0].mxu0 %v1001
      %v2179 = vpop.f32.mrb[0].mxu0
      %v2180 = vadd.f32 %v1867, %v2179
      %v2181 = vpop.f32.mrb[0].mxu0
      %v2182 = vadd.f32 %v1869, %v2181
      %v2183 = vpop.f32.mrb[0].mxu0
      %v2184 = vadd.f32 %v1871, %v2183
      %v2185 = vpop.f32.mrb[0].mxu0
      %v2186 = vadd.f32 %v1873, %v2185
      %2187 = vmatprep.mubr.bf16.mxu0 0
      %2188 = vmatmul.mubr.bf16.gmra.mrb[0].mxu0 %v1008
      %v2189 = vpop.f32.mrb[0].mxu0
      %v2190 = vadd.f32 %v1877, %v2189
      %v2191 = vpop.f32.mrb[0].mxu0
      %v2192 = vadd.f32 %v1879, %v2191
      %v2193 = vpop.f32.mrb[0].mxu0
      %v2194 = vadd.f32 %v1881, %v2193
      %v2195 = vpop.f32.mrb[0].mxu0
      %v2196 = vadd.f32 %v1883, %v2195
      %2197 = vmatprep.mubr.bf16.mxu0 0
      %2198 = vmatmul.mubr.bf16.gmra.mrb[0].mxu0 %v1015
      %v2199 = vpop.f32.mrb[0].mxu0
      %v2200 = vadd.f32 %v1887, %v2199
      %v2201 = vpop.f32.mrb[0].mxu0
      %v2202 = vadd.f32 %v1889, %v2201
      %v2203 = vpop.f32.mrb[0].mxu0
      %v2204 = vadd.f32 %v1891, %v2203
      %v2205 = vpop.f32.mrb[0].mxu0
      %v2206 = vadd.f32 %v1893, %v2205
      %2207 = vmatprep.mubr.bf16.mxu0 0
      %2208 = vmatmul.mubr.bf16.gmra.mrb[0].mxu0 %v1022
      %v2209 = vpop.f32.mrb[0].mxu0
      %v2210 = vadd.f32 %v1897, %v2209
      %v2211 = vpop.f32.mrb[0].mxu0
      %v2212 = vadd.f32 %v1899, %v2211
      %v2213 = vpop.f32.mrb[0].mxu0
      %v2214 = vadd.f32 %v1901, %v2213
      %v2215 = vpop.f32.mrb[0].mxu0
      %v2216 = vadd.f32 %v1903, %v2215
      %2217 = vmatprep.mubr.bf16.mxu0 0
      %2218 = vmatmul.mubr.bf16.gmra.mrb[0].mxu0 %v1029
      %v2219 = vpop.f32.mrb[0].mxu0
      %v2220 = vadd.f32 %v1907, %v2219
      %v2221 = vpop.f32.mrb[0].mxu0
      %v2222 = vadd.f32 %v1909, %v2221
      %v2223 = vpop.f32.mrb[0].mxu0
      %v2224 = vadd.f32 %v1911, %v2223
      %v2225 = vpop.f32.mrb[0].mxu0
      %v2226 = vadd.f32 %v1913, %v2225
      %2227 = vmatprep.mubr.bf16.mxu0 0
      %2228 = vmatmul.mubr.bf16.gmra.mrb[0].mxu0 %v1036
      %v2229 = vpop.f32.mrb[0].mxu0
      %v2230 = vadd.f32 %v1917, %v2229
      %v2231 = vpop.f32.mrb[0].mxu0
      %v2232 = vadd.f32 %v1919, %v2231
      %v2233 = vpop.f32.mrb[0].mxu0
      %v2234 = vadd.f32 %v1921, %v2233
      %v2235 = vpop.f32.mrb[0].mxu0
      %v2236 = vadd.f32 %v1923, %v2235
      %2237 = vmatprep.mubr.bf16.mxu0 0
      %2238 = vmatmul.mubr.bf16.gmra.mrb[0].mxu0 %v1043
      %v2239 = vpop.f32.mrb[0].mxu0
      %v2240 = vadd.f32 %v1927, %v2239
      %v2241 = vpop.f32.mrb[0].mxu0
      %v2242 = vadd.f32 %v1929, %v2241
      %v2243 = vpop.f32.mrb[0].mxu0
      %v2244 = vadd.f32 %v1931, %v2243
      %v2245 = vpop.f32.mrb[0].mxu0
      %v2246 = vadd.f32 %v1933, %v2245
      %2247 = vmatprep.mubr.bf16.mxu0 0
      %2248 = vmatmul.mubr.bf16.gmra.mrb[0].mxu0 %v1050
      %v2249 = vpop.f32.mrb[0].mxu0
      %v2250 = vadd.f32 %v1937, %v2249
      %v2251 = vpop.f32.mrb[0].mxu0
      %v2252 = vadd.f32 %v1939, %v2251
      %v2253 = vpop.f32.mrb[0].mxu0
      %v2254 = vadd.f32 %v1941, %v2253
      %v2255 = vpop.f32.mrb[0].mxu0
      %v2256 = vadd.f32 %v1943, %v2255
      %2257 = vmatprep.mubr.bf16.mxu0 0
      %2258 = vmatmul.mubr.bf16.gmra.mrb[0].mxu0 %v1057
      %v2259 = vpop.f32.mrb[0].mxu0
      %v2260 = vadd.f32 %v1947, %v2259
      %v2261 = vpop.f32.mrb[0].mxu0
      %v2262 = vadd.f32 %v1949, %v2261
      %v2263 = vpop.f32.mrb[0].mxu0
      %v2264 = vadd.f32 %v1951, %v2263
      %v2265 = vpop.f32.mrb[0].mxu0
      %v2266 = vadd.f32 %v1953, %v2265
      %2267 = vmatprep.mubr.bf16.mxu0 0
      %2268 = vmatmul.mubr.bf16.gmra.mrb[0].mxu0 %v1064
      %v2269 = vpop.f32.mrb[0].mxu0
      %v2270 = vadd.f32 %v1957, %v2269
      %v2271 = vpop.f32.mrb[0].mxu0
      %v2272 = vadd.f32 %v1959, %v2271
      %v2273 = vpop.f32.mrb[0].mxu0
      %v2274 = vadd.f32 %v1961, %v2273
      %v2275 = vpop.f32.mrb[0].mxu0
      %v2276 = vadd.f32 %v1963, %v2275
      %2277 = vmatprep.mubr.bf16.mxu0 0
      %2278 = vmatmul.mubr.bf16.gmra.mrb[0].mxu0 %v1071
      %v2279 = vpop.f32.mrb[0].mxu0
      %v2280 = vadd.f32 %v1967, %v2279
      %v2281 = vpop.f32.mrb[0].mxu0
      %v2282 = vadd.f32 %v1969, %v2281
      %v2283 = vpop.f32.mrb[0].mxu0
      %v2284 = vadd.f32 %v1971, %v2283
      %v2285 = vpop.f32.mrb[0].mxu0
      %v2286 = vadd.f32 %v1973, %v2285
      %2287 = vmatprep.mubr.bf16.mxu0 0
      %2288 = vmatmul.mubr.bf16.gmra.mrb[0].mxu0 %v1078
      %v2289 = vpop.f32.mrb[0].mxu0
      %v2290 = vadd.f32 %v1977, %v2289
      %v2291 = vpop.f32.mrb[0].mxu0
      %v2292 = vadd.f32 %v1979, %v2291
      %v2293 = vpop.f32.mrb[0].mxu0
      %v2294 = vadd.f32 %v1981, %v2293
      %v2295 = vpop.f32.mrb[0].mxu0
      %v2296 = vadd.f32 %v1983, %v2295
      %2297 = vmatprep.mubr.bf16.mxu0 0
      %2298 = vmatmul.mubr.bf16.gmra.mrb[0].mxu0 %v1085
      %v2299 = vpop.f32.mrb[0].mxu0
      %v2300 = vadd.f32 %v1987, %v2299
      %v2301 = vpop.f32.mrb[0].mxu0
      %v2302 = vadd.f32 %v1989, %v2301
      %v2303 = vpop.f32.mrb[0].mxu0
      %v2304 = vadd.f32 %v1991, %v2303
      %v2305 = vpop.f32.mrb[0].mxu0
      %v2306 = vadd.f32 %v1993, %v2305
      %2307 = vmatprep.mubr.bf16.mxu0 0
      %2308 = vmatmul.mubr.bf16.gmra.mrb[0].mxu0 %v1092
      %v2309 = vpop.f32.mrb[0].mxu0
      %v2310 = vadd.f32 %v1997, %v2309
      %v2311 = vpop.f32.mrb[0].mxu0
      %v2312 = vadd.f32 %v1999, %v2311
      %v2313 = vpop.f32.mrb[0].mxu0
      %v2314 = vadd.f32 %v2001, %v2313
      %v2315 = vpop.f32.mrb[0].mxu0
      %v2316 = vadd.f32 %v2003, %v2315
      %2317 = vmatprep.mubr.bf16.mxu0 0
      %2318 = vmatmul.mubr.bf16.gmra.mrb[0].mxu0 %v1099
      %v2319 = vpop.f32.mrb[0].mxu0
      %v2320 = vadd.f32 %v2007, %v2319
      %v2321 = vpop.f32.mrb[0].mxu0
      %v2322 = vadd.f32 %v2009, %v2321
      %v2323 = vpop.f32.mrb[0].mxu0
      %v2324 = vadd.f32 %v2011, %v2323
      %v2325 = vpop.f32.mrb[0].mxu0
      %v2326 = vadd.f32 %v2013, %v2325
      %2327 = vmatprep.mubr.bf16.mxu0 0
      %2328 = vmatmul.mubr.bf16.gmra.mrb[0].mxu0 %v1106
      %v2329 = vpop.f32.mrb[0].mxu0
      %v2330 = vadd.f32 %v2017, %v2329
      %v2331 = vpop.f32.mrb[0].mxu0
      %v2332 = vadd.f32 %v2019, %v2331
      %v2333 = vpop.f32.mrb[0].mxu0
      %v2334 = vadd.f32 %v2021, %v2333
      %v2335 = vpop.f32.mrb[0].mxu0
      %v2336 = vadd.f32 %v2023, %v2335
      %2337 = vmatprep.mubr.bf16.mxu0 0
      %2338 = vmatmul.mubr.bf16.gmra.mrb[0].mxu0 %v1113
      %v2339 = vpop.f32.mrb[0].mxu0
      %v2340 = vadd.f32 %v2027, %v2339
      %v2341 = vpop.f32.mrb[0].mxu0
      %v2342 = vadd.f32 %v2029, %v2341
      %v2343 = vpop.f32.mrb[0].mxu0
      %v2344 = vadd.f32 %v2031, %v2343
      %v2345 = vpop.f32.mrb[0].mxu0
      %v2346 = vadd.f32 %v2033, %v2345
      %2347 = vmatprep.mubr.bf16.mxu0 0
      %2348 = vmatmul.mubr.bf16.gmra.mrb[0].mxu0 %v1120
      %v2349 = vpop.f32.mrb[0].mxu0
      %v2350 = vadd.f32 %v2037, %v2349
      %v2351 = vpop.f32.mrb[0].mxu0
      %v2352 = vadd.f32 %v2039, %v2351
      %v2353 = vpop.f32.mrb[0].mxu0
      %v2354 = vadd.f32 %v2041, %v2353
      %v2355 = vpop.f32.mrb[0].mxu0
      %v2356 = vadd.f32 %v2043, %v2355
      %2357 = vmatprep.mubr.bf16.mxu0 0
      %2358 = vmatmul.mubr.bf16.gmra.mrb[0].mxu0 %v1127
      %v2359 = vpop.f32.mrb[0].mxu0
      %v2360 = vadd.f32 %v2047, %v2359
      %v2361 = vpop.f32.mrb[0].mxu0
      %v2362 = vadd.f32 %v2049, %v2361
      %v2363 = vpop.f32.mrb[0].mxu0
      %v2364 = vadd.f32 %v2051, %v2363
      %v2365 = vpop.f32.mrb[0].mxu0
      %v2366 = vadd.f32 %v2053, %v2365
      %2367 = vmatprep.mubr.bf16.mxu0 0
      %2368 = vmatmul.mubr.bf16.gmra.mrb[0].mxu0 %v1134
      %v2369 = vpop.f32.mrb[0].mxu0
      %v2370 = vadd.f32 %v2057, %v2369
      %v2371 = vpop.f32.mrb[0].mxu0
      %v2372 = vadd.f32 %v2059, %v2371
      %v2373 = vpop.f32.mrb[0].mxu0
      %v2374 = vadd.f32 %v2061, %v2373
      %v2375 = vpop.f32.mrb[0].mxu0
      %v2376 = vadd.f32 %v2063, %v2375
      %2377 = vmatprep.mubr.bf16.mxu0 0
      %2378 = vmatmul.mubr.bf16.gmra.mrb[0].mxu0 %v1141
      %v2379 = vpop.f32.mrb[0].mxu0
      %v2380 = vadd.f32 %v2067, %v2379
      %v2381 = vpop.f32.mrb[0].mxu0
      %v2382 = vadd.f32 %v2069, %v2381
      %v2383 = vpop.f32.mrb[0].mxu0
      %v2384 = vadd.f32 %v2071, %v2383
      %v2385 = vpop.f32.mrb[0].mxu0
      %v2386 = vadd.f32 %v2073, %v2385
      %2387 = vmatprep.mubr.bf16.mxu0 0
      %2388 = vmatmul.mubr.bf16.gmra.mrb[0].mxu0 %v1148
      %v2389 = vpop.f32.mrb[0].mxu0
      %v2390 = vadd.f32 %v2077, %v2389
      %v2391 = vpop.f32.mrb[0].mxu0
      %v2392 = vadd.f32 %v2079, %v2391
      %v2393 = vpop.f32.mrb[0].mxu0
      %v2394 = vadd.f32 %v2081, %v2393
      %v2395 = vpop.f32.mrb[0].mxu0
      %v2396 = vadd.f32 %v2083, %v2395
      %2397 = vmatprep.mubr.bf16.mxu0 0
      %2398 = vmatmul.mubr.bf16.gmra.mrb[0].mxu0 %v1155
      %v2399 = vpop.f32.mrb[0].mxu0
      %v2400 = vadd.f32 %v2087, %v2399
      %v2401 = vpop.f32.mrb[0].mxu0
      %v2402 = vadd.f32 %v2089, %v2401
      %v2403 = vpop.f32.mrb[0].mxu0
      %v2404 = vadd.f32 %v2091, %v2403
      %v2405 = vpop.f32.mrb[0].mxu0
      %v2406 = vadd.f32 %v2093, %v2405
      %2407 = vdwg.mxu0
      %vm2408 = vcmask 556032
      %v2409 = vsel %vm2408, %v2132, 0.0
      %v2410 = vadd.f32 %v2130, %v2409
      %2411 = vadd.xlane.f32.xlu0 %v2410
      %v2412 = vpop.xlane.xlu0 %2411
      %v2413 = vsel %vm2408, %v2136, 0.0
      %v2414 = vadd.f32 %v2134, %v2413
      %2415 = vadd.xlane.f32.xlu0 %v2414
      %v2416 = vpop.xlane.xlu0 %2415
      %v2417 = vsel %vm2408, %v2142, 0.0
      %v2418 = vadd.f32 %v2140, %v2417
      %2419 = vadd.xlane.f32.xlu0 %v2418
      %v2420 = vpop.xlane.xlu0 %2419
      %v2421 = vsel %vm2408, %v2146, 0.0
      %v2422 = vadd.f32 %v2144, %v2421
      %2423 = vadd.xlane.f32.xlu0 %v2422
      %v2424 = vpop.xlane.xlu0 %2423
      %v2425 = vsel %vm2408, %v2152, 0.0
      %v2426 = vadd.f32 %v2150, %v2425
      %2427 = vadd.xlane.f32.xlu0 %v2426
      %v2428 = vpop.xlane.xlu0 %2427
      %v2429 = vsel %vm2408, %v2156, 0.0
      %v2430 = vadd.f32 %v2154, %v2429
      %2431 = vadd.xlane.f32.xlu0 %v2430
      %v2432 = vpop.xlane.xlu0 %2431
      %v2433 = vsel %vm2408, %v2162, 0.0
      %v2434 = vadd.f32 %v2160, %v2433
      %2435 = vadd.xlane.f32.xlu0 %v2434
      %v2436 = vpop.xlane.xlu0 %2435
      %v2437 = vsel %vm2408, %v2166, 0.0
      %v2438 = vadd.f32 %v2164, %v2437
      %2439 = vadd.xlane.f32.xlu0 %v2438
      %v2440 = vpop.xlane.xlu0 %2439
      %v2441 = vsel %vm2408, %v2172, 0.0
      %v2442 = vadd.f32 %v2170, %v2441
      %2443 = vadd.xlane.f32.xlu0 %v2442
      %v2444 = vpop.xlane.xlu0 %2443
      %v2445 = vsel %vm2408, %v2176, 0.0
      %v2446 = vadd.f32 %v2174, %v2445
      %2447 = vadd.xlane.f32.xlu0 %v2446
      %v2448 = vpop.xlane.xlu0 %2447
      %v2449 = vsel %vm2408, %v2182, 0.0
      %v2450 = vadd.f32 %v2180, %v2449
      %2451 = vadd.xlane.f32.xlu0 %v2450
      %v2452 = vpop.xlane.xlu0 %2451
      %v2453 = vsel %vm2408, %v2186, 0.0
      %v2454 = vadd.f32 %v2184, %v2453
      %2455 = vadd.xlane.f32.xlu0 %v2454
      %v2456 = vpop.xlane.xlu0 %2455
      %v2457 = vsel %vm2408, %v2192, 0.0
      %v2458 = vadd.f32 %v2190, %v2457
      %2459 = vadd.xlane.f32.xlu0 %v2458
      %v2460 = vpop.xlane.xlu0 %2459
      %v2461 = vsel %vm2408, %v2196, 0.0
      %v2462 = vadd.f32 %v2194, %v2461
      %2463 = vadd.xlane.f32.xlu0 %v2462
      %v2464 = vpop.xlane.xlu0 %2463
      %v2465 = vsel %vm2408, %v2202, 0.0
      %v2466 = vadd.f32 %v2200, %v2465
      %2467 = vadd.xlane.f32.xlu0 %v2466
      %v2468 = vpop.xlane.xlu0 %2467
      %v2469 = vsel %vm2408, %v2206, 0.0
      %v2470 = vadd.f32 %v2204, %v2469
      %2471 = vadd.xlane.f32.xlu0 %v2470
      %v2472 = vpop.xlane.xlu0 %2471
      %v2473 = vsel %vm2408, %v2212, 0.0
      %v2474 = vadd.f32 %v2210, %v2473
      %2475 = vadd.xlane.f32.xlu0 %v2474
      %v2476 = vpop.xlane.xlu0 %2475
      %v2477 = vsel %vm2408, %v2216, 0.0
      %v2478 = vadd.f32 %v2214, %v2477
      %2479 = vadd.xlane.f32.xlu0 %v2478
      %v2480 = vpop.xlane.xlu0 %2479
      %v2481 = vsel %vm2408, %v2222, 0.0
      %v2482 = vadd.f32 %v2220, %v2481
      %2483 = vadd.xlane.f32.xlu0 %v2482
      %v2484 = vpop.xlane.xlu0 %2483
      %v2485 = vsel %vm2408, %v2226, 0.0
      %v2486 = vadd.f32 %v2224, %v2485
      %2487 = vadd.xlane.f32.xlu0 %v2486
      %v2488 = vpop.xlane.xlu0 %2487
      %v2489 = vsel %vm2408, %v2232, 0.0
      %v2490 = vadd.f32 %v2230, %v2489
      %2491 = vadd.xlane.f32.xlu0 %v2490
      %v2492 = vpop.xlane.xlu0 %2491
      %v2493 = vsel %vm2408, %v2236, 0.0
      %v2494 = vadd.f32 %v2234, %v2493
      %2495 = vadd.xlane.f32.xlu0 %v2494
      %v2496 = vpop.xlane.xlu0 %2495
      %v2497 = vsel %vm2408, %v2242, 0.0
      %v2498 = vadd.f32 %v2240, %v2497
      %2499 = vadd.xlane.f32.xlu0 %v2498
      %v2500 = vpop.xlane.xlu0 %2499
      %v2501 = vsel %vm2408, %v2246, 0.0
      %v2502 = vadd.f32 %v2244, %v2501
      %2503 = vadd.xlane.f32.xlu0 %v2502
      %v2504 = vpop.xlane.xlu0 %2503
      %v2505 = vsel %vm2408, %v2252, 0.0
      %v2506 = vadd.f32 %v2250, %v2505
      %2507 = vadd.xlane.f32.xlu0 %v2506
      %v2508 = vpop.xlane.xlu0 %2507
      %v2509 = vsel %vm2408, %v2256, 0.0
      %v2510 = vadd.f32 %v2254, %v2509
      %2511 = vadd.xlane.f32.xlu0 %v2510
      %v2512 = vpop.xlane.xlu0 %2511
      %v2513 = vsel %vm2408, %v2262, 0.0
      %v2514 = vadd.f32 %v2260, %v2513
      %2515 = vadd.xlane.f32.xlu0 %v2514
      %v2516 = vpop.xlane.xlu0 %2515
      %v2517 = vsel %vm2408, %v2266, 0.0
      %v2518 = vadd.f32 %v2264, %v2517
      %2519 = vadd.xlane.f32.xlu0 %v2518
      %v2520 = vpop.xlane.xlu0 %2519
      %v2521 = vsel %vm2408, %v2272, 0.0
      %v2522 = vadd.f32 %v2270, %v2521
      %2523 = vadd.xlane.f32.xlu0 %v2522
      %v2524 = vpop.xlane.xlu0 %2523
      %v2525 = vsel %vm2408, %v2276, 0.0
      %v2526 = vadd.f32 %v2274, %v2525
      %2527 = vadd.xlane.f32.xlu0 %v2526
      %v2528 = vpop.xlane.xlu0 %2527
      %v2529 = vsel %vm2408, %v2282, 0.0
      %v2530 = vadd.f32 %v2280, %v2529
      %2531 = vadd.xlane.f32.xlu0 %v2530
      %v2532 = vpop.xlane.xlu0 %2531
      %v2533 = vsel %vm2408, %v2286, 0.0
      %v2534 = vadd.f32 %v2284, %v2533
      %2535 = vadd.xlane.f32.xlu0 %v2534
      %v2536 = vpop.xlane.xlu0 %2535
      %v2537 = vsel %vm2408, %v2292, 0.0
      %v2538 = vadd.f32 %v2290, %v2537
      %2539 = vadd.xlane.f32.xlu0 %v2538
      %v2540 = vpop.xlane.xlu0 %2539
      %v2541 = vsel %vm2408, %v2296, 0.0
      %v2542 = vadd.f32 %v2294, %v2541
      %2543 = vadd.xlane.f32.xlu0 %v2542
      %v2544 = vpop.xlane.xlu0 %2543
      %v2545 = vsel %vm2408, %v2302, 0.0
      %v2546 = vadd.f32 %v2300, %v2545
      %2547 = vadd.xlane.f32.xlu0 %v2546
      %v2548 = vpop.xlane.xlu0 %2547
      %v2549 = vsel %vm2408, %v2306, 0.0
      %v2550 = vadd.f32 %v2304, %v2549
      %2551 = vadd.xlane.f32.xlu0 %v2550
      %v2552 = vpop.xlane.xlu0 %2551
      %v2553 = vsel %vm2408, %v2312, 0.0
      %v2554 = vadd.f32 %v2310, %v2553
      %2555 = vadd.xlane.f32.xlu0 %v2554
      %v2556 = vpop.xlane.xlu0 %2555
      %v2557 = vsel %vm2408, %v2316, 0.0
      %v2558 = vadd.f32 %v2314, %v2557
      %2559 = vadd.xlane.f32.xlu0 %v2558
      %v2560 = vpop.xlane.xlu0 %2559
      %v2561 = vsel %vm2408, %v2322, 0.0
      %v2562 = vadd.f32 %v2320, %v2561
      %2563 = vadd.xlane.f32.xlu0 %v2562
      %v2564 = vpop.xlane.xlu0 %2563
      %v2565 = vsel %vm2408, %v2326, 0.0
      %v2566 = vadd.f32 %v2324, %v2565
      %2567 = vadd.xlane.f32.xlu0 %v2566
      %v2568 = vpop.xlane.xlu0 %2567
      %v2569 = vsel %vm2408, %v2332, 0.0
      %v2570 = vadd.f32 %v2330, %v2569
      %2571 = vadd.xlane.f32.xlu0 %v2570
      %v2572 = vpop.xlane.xlu0 %2571
      %v2573 = vsel %vm2408, %v2336, 0.0
      %v2574 = vadd.f32 %v2334, %v2573
      %2575 = vadd.xlane.f32.xlu0 %v2574
      %v2576 = vpop.xlane.xlu0 %2575
      %v2577 = vsel %vm2408, %v2342, 0.0
      %v2578 = vadd.f32 %v2340, %v2577
      %2579 = vadd.xlane.f32.xlu0 %v2578
      %v2580 = vpop.xlane.xlu0 %2579
      %v2581 = vsel %vm2408, %v2346, 0.0
      %v2582 = vadd.f32 %v2344, %v2581
      %2583 = vadd.xlane.f32.xlu0 %v2582
      %v2584 = vpop.xlane.xlu0 %2583
      %v2585 = vsel %vm2408, %v2352, 0.0
      %v2586 = vadd.f32 %v2350, %v2585
      %2587 = vadd.xlane.f32.xlu0 %v2586
      %v2588 = vpop.xlane.xlu0 %2587
      %v2589 = vsel %vm2408, %v2356, 0.0
      %v2590 = vadd.f32 %v2354, %v2589
      %2591 = vadd.xlane.f32.xlu0 %v2590
      %v2592 = vpop.xlane.xlu0 %2591
      %v2593 = vsel %vm2408, %v2362, 0.0
      %v2594 = vadd.f32 %v2360, %v2593
      %2595 = vadd.xlane.f32.xlu0 %v2594
      %v2596 = vpop.xlane.xlu0 %2595
      %v2597 = vsel %vm2408, %v2366, 0.0
      %v2598 = vadd.f32 %v2364, %v2597
      %2599 = vadd.xlane.f32.xlu0 %v2598
      %v2600 = vpop.xlane.xlu0 %2599
      %v2601 = vsel %vm2408, %v2372, 0.0
      %v2602 = vadd.f32 %v2370, %v2601
      %2603 = vadd.xlane.f32.xlu0 %v2602
      %v2604 = vpop.xlane.xlu0 %2603
      %v2605 = vsel %vm2408, %v2376, 0.0
      %v2606 = vadd.f32 %v2374, %v2605
      %2607 = vadd.xlane.f32.xlu0 %v2606
      %v2608 = vpop.xlane.xlu0 %2607
      %v2609 = vsel %vm2408, %v2382, 0.0
      %v2610 = vadd.f32 %v2380, %v2609
      %2611 = vadd.xlane.f32.xlu0 %v2610
      %v2612 = vpop.xlane.xlu0 %2611
      %v2613 = vsel %vm2408, %v2386, 0.0
      %v2614 = vadd.f32 %v2384, %v2613
      %2615 = vadd.xlane.f32.xlu0 %v2614
      %v2616 = vpop.xlane.xlu0 %2615
      %v2617 = vsel %vm2408, %v2392, 0.0
      %v2618 = vadd.f32 %v2390, %v2617
      %2619 = vadd.xlane.f32.xlu0 %v2618
      %v2620 = vpop.xlane.xlu0 %2619
      %v2621 = vsel %vm2408, %v2396, 0.0
      %v2622 = vadd.f32 %v2394, %v2621
      %2623 = vadd.xlane.f32.xlu0 %v2622
      %v2624 = vpop.xlane.xlu0 %2623
      %v2625 = vsel %vm2408, %v2402, 0.0
      %v2626 = vadd.f32 %v2400, %v2625
      %2627 = vadd.xlane.f32.xlu0 %v2626
      %v2628 = vpop.xlane.xlu0 %2627
      %v2629 = vsel %vm2408, %v2406, 0.0
      %v2630 = vadd.f32 %v2404, %v2629
      %2631 = vadd.xlane.f32.xlu0 %v2630
      %v2632 = vpop.xlane.xlu0 %2631
      %v2633 = vmul.f32 %v2412, 0.0051020407
      %v2634 = vmul.f32 %v2416, 0.0051020407
      %v2635 = vmul.f32 %v2420, 0.0051020407
      %v2636 = vmul.f32 %v2424, 0.0051020407
      %v2637 = vmul.f32 %v2428, 0.0051020407
      %v2638 = vmul.f32 %v2432, 0.0051020407
      %v2639 = vmul.f32 %v2436, 0.0051020407
      %v2640 = vmul.f32 %v2440, 0.0051020407
      %v2641 = vmul.f32 %v2444, 0.0051020407
      %v2642 = vmul.f32 %v2448, 0.0051020407
      %v2643 = vmul.f32 %v2452, 0.0051020407
      %v2644 = vmul.f32 %v2456, 0.0051020407
      %v2645 = vmul.f32 %v2460, 0.0051020407
      %v2646 = vmul.f32 %v2464, 0.0051020407
      %v2647 = vmul.f32 %v2468, 0.0051020407
      %v2648 = vmul.f32 %v2472, 0.0051020407
      %v2649 = vmul.f32 %v2476, 0.0051020407
      %v2650 = vmul.f32 %v2480, 0.0051020407
      %v2651 = vmul.f32 %v2484, 0.0051020407
      %v2652 = vmul.f32 %v2488, 0.0051020407
      %v2653 = vmul.f32 %v2492, 0.0051020407
      %v2654 = vmul.f32 %v2496, 0.0051020407
      %v2655 = vmul.f32 %v2500, 0.0051020407
      %v2656 = vmul.f32 %v2504, 0.0051020407
      %v2657 = vmul.f32 %v2508, 0.0051020407
      %v2658 = vmul.f32 %v2512, 0.0051020407
      %v2659 = vmul.f32 %v2516, 0.0051020407
      %v2660 = vmul.f32 %v2520, 0.0051020407
      %v2661 = vmul.f32 %v2524, 0.0051020407
      %v2662 = vmul.f32 %v2528, 0.0051020407
      %v2663 = vmul.f32 %v2532, 0.0051020407
      %v2664 = vmul.f32 %v2536, 0.0051020407
      %v2665 = vmul.f32 %v2540, 0.0051020407
      %v2666 = vmul.f32 %v2544, 0.0051020407
      %v2667 = vmul.f32 %v2548, 0.0051020407
      %v2668 = vmul.f32 %v2552, 0.0051020407
      %v2669 = vmul.f32 %v2556, 0.0051020407
      %v2670 = vmul.f32 %v2560, 0.0051020407
      %v2671 = vmul.f32 %v2564, 0.0051020407
      %v2672 = vmul.f32 %v2568, 0.0051020407
      %v2673 = vmul.f32 %v2572, 0.0051020407
      %v2674 = vmul.f32 %v2576, 0.0051020407
      %v2675 = vmul.f32 %v2580, 0.0051020407
      %v2676 = vmul.f32 %v2584, 0.0051020407
      %v2677 = vmul.f32 %v2588, 0.0051020407
      %v2678 = vmul.f32 %v2592, 0.0051020407
      %v2679 = vmul.f32 %v2596, 0.0051020407
      %v2680 = vmul.f32 %v2600, 0.0051020407
      %v2681 = vmul.f32 %v2604, 0.0051020407
      %v2682 = vmul.f32 %v2608, 0.0051020407
      %v2683 = vmul.f32 %v2612, 0.0051020407
      %v2684 = vmul.f32 %v2616, 0.0051020407
      %v2685 = vmul.f32 %v2620, 0.0051020407
      %v2686 = vmul.f32 %v2624, 0.0051020407
      %v2687 = vmul.f32 %v2628, 0.0051020407
      %v2688 = vmul.f32 %v2632, 0.0051020407
      %v2689 = vsub.f32 %v2130, %v2633
      %v2690 = vsub.f32 %v2132, %v2633
      %v2691 = vsub.f32 %v2134, %v2634
      %v2692 = vsub.f32 %v2136, %v2634
      %v2693 = vsub.f32 %v2140, %v2635
      %v2694 = vsub.f32 %v2142, %v2635
      %v2695 = vsub.f32 %v2144, %v2636
      %v2696 = vsub.f32 %v2146, %v2636
      %v2697 = vsub.f32 %v2150, %v2637
      %v2698 = vsub.f32 %v2152, %v2637
      %v2699 = vsub.f32 %v2154, %v2638
      %v2700 = vsub.f32 %v2156, %v2638
      %v2701 = vsub.f32 %v2160, %v2639
      %v2702 = vsub.f32 %v2162, %v2639
      %v2703 = vsub.f32 %v2164, %v2640
      %v2704 = vsub.f32 %v2166, %v2640
      %v2705 = vsub.f32 %v2170, %v2641
      %v2706 = vsub.f32 %v2172, %v2641
      %v2707 = vsub.f32 %v2174, %v2642
      %v2708 = vsub.f32 %v2176, %v2642
      %v2709 = vsub.f32 %v2180, %v2643
      %v2710 = vsub.f32 %v2182, %v2643
      %v2711 = vsub.f32 %v2184, %v2644
      %v2712 = vsub.f32 %v2186, %v2644
      %v2713 = vsub.f32 %v2190, %v2645
      %v2714 = vsub.f32 %v2192, %v2645
      %v2715 = vsub.f32 %v2194, %v2646
      %v2716 = vsub.f32 %v2196, %v2646
      %v2717 = vsub.f32 %v2200, %v2647
      %v2718 = vsub.f32 %v2202, %v2647
      %v2719 = vsub.f32 %v2204, %v2648
      %v2720 = vsub.f32 %v2206, %v2648
      %v2721 = vsub.f32 %v2210, %v2649
      %v2722 = vsub.f32 %v2212, %v2649
      %v2723 = vsub.f32 %v2214, %v2650
      %v2724 = vsub.f32 %v2216, %v2650
      %v2725 = vsub.f32 %v2220, %v2651
      %v2726 = vsub.f32 %v2222, %v2651
      %v2727 = vsub.f32 %v2224, %v2652
      %v2728 = vsub.f32 %v2226, %v2652
      %v2729 = vsub.f32 %v2230, %v2653
      %v2730 = vsub.f32 %v2232, %v2653
      %v2731 = vsub.f32 %v2234, %v2654
      %v2732 = vsub.f32 %v2236, %v2654
      %v2733 = vsub.f32 %v2240, %v2655
      %v2734 = vsub.f32 %v2242, %v2655
      %v2735 = vsub.f32 %v2244, %v2656
      %v2736 = vsub.f32 %v2246, %v2656
      %v2737 = vsub.f32 %v2250, %v2657
      %v2738 = vsub.f32 %v2252, %v2657
      %v2739 = vsub.f32 %v2254, %v2658
      %v2740 = vsub.f32 %v2256, %v2658
      %v2741 = vsub.f32 %v2260, %v2659
      %v2742 = vsub.f32 %v2262, %v2659
      %v2743 = vsub.f32 %v2264, %v2660
      %v2744 = vsub.f32 %v2266, %v2660
      %v2745 = vsub.f32 %v2270, %v2661
      %v2746 = vsub.f32 %v2272, %v2661
      %v2747 = vsub.f32 %v2274, %v2662
      %v2748 = vsub.f32 %v2276, %v2662
      %v2749 = vsub.f32 %v2280, %v2663
      %v2750 = vsub.f32 %v2282, %v2663
      %v2751 = vsub.f32 %v2284, %v2664
      %v2752 = vsub.f32 %v2286, %v2664
      %v2753 = vsub.f32 %v2290, %v2665
      %v2754 = vsub.f32 %v2292, %v2665
      %v2755 = vsub.f32 %v2294, %v2666
      %v2756 = vsub.f32 %v2296, %v2666
      %v2757 = vsub.f32 %v2300, %v2667
      %v2758 = vsub.f32 %v2302, %v2667
      %v2759 = vsub.f32 %v2304, %v2668
      %v2760 = vsub.f32 %v2306, %v2668
      %v2761 = vsub.f32 %v2310, %v2669
      %v2762 = vsub.f32 %v2312, %v2669
      %v2763 = vsub.f32 %v2314, %v2670
      %v2764 = vsub.f32 %v2316, %v2670
      %v2765 = vsub.f32 %v2320, %v2671
      %v2766 = vsub.f32 %v2322, %v2671
      %v2767 = vsub.f32 %v2324, %v2672
      %v2768 = vsub.f32 %v2326, %v2672
      %v2769 = vsub.f32 %v2330, %v2673
      %v2770 = vsub.f32 %v2332, %v2673
      %v2771 = vsub.f32 %v2334, %v2674
      %v2772 = vsub.f32 %v2336, %v2674
      %v2773 = vsub.f32 %v2340, %v2675
      %v2774 = vsub.f32 %v2342, %v2675
      %v2775 = vsub.f32 %v2344, %v2676
      %v2776 = vsub.f32 %v2346, %v2676
      %v2777 = vsub.f32 %v2350, %v2677
      %v2778 = vsub.f32 %v2352, %v2677
      %v2779 = vsub.f32 %v2354, %v2678
      %v2780 = vsub.f32 %v2356, %v2678
      %v2781 = vsub.f32 %v2360, %v2679
      %v2782 = vsub.f32 %v2362, %v2679
      %v2783 = vsub.f32 %v2364, %v2680
      %v2784 = vsub.f32 %v2366, %v2680
      %v2785 = vsub.f32 %v2370, %v2681
      %v2786 = vsub.f32 %v2372, %v2681
      %v2787 = vsub.f32 %v2374, %v2682
      %v2788 = vsub.f32 %v2376, %v2682
      %v2789 = vsub.f32 %v2380, %v2683
      %v2790 = vsub.f32 %v2382, %v2683
      %v2791 = vsub.f32 %v2384, %v2684
      %v2792 = vsub.f32 %v2386, %v2684
      %v2793 = vsub.f32 %v2390, %v2685
      %v2794 = vsub.f32 %v2392, %v2685
      %v2795 = vsub.f32 %v2394, %v2686
      %v2796 = vsub.f32 %v2396, %v2686
      %v2797 = vsub.f32 %v2400, %v2687
      %v2798 = vsub.f32 %v2402, %v2687
      %v2799 = vsub.f32 %v2404, %v2688
      %v2800 = vsub.f32 %v2406, %v2688
      %v2801 = vmul.f32 %v2689, %v2689
      %v2802 = vmul.f32 %v2690, %v2690
      %v2803 = vmul.f32 %v2691, %v2691
      %v2804 = vmul.f32 %v2692, %v2692
      %v2805 = vmul.f32 %v2693, %v2693
      %v2806 = vmul.f32 %v2694, %v2694
      %v2807 = vmul.f32 %v2695, %v2695
      %v2808 = vmul.f32 %v2696, %v2696
      %v2809 = vmul.f32 %v2697, %v2697
      %v2810 = vmul.f32 %v2698, %v2698
      %v2811 = vmul.f32 %v2699, %v2699
      %v2812 = vmul.f32 %v2700, %v2700
      %v2813 = vmul.f32 %v2701, %v2701
      %v2814 = vmul.f32 %v2702, %v2702
      %v2815 = vmul.f32 %v2703, %v2703
      %v2816 = vmul.f32 %v2704, %v2704
      %v2817 = vmul.f32 %v2705, %v2705
      %v2818 = vmul.f32 %v2706, %v2706
      %v2819 = vmul.f32 %v2707, %v2707
      %v2820 = vmul.f32 %v2708, %v2708
      %v2821 = vmul.f32 %v2709, %v2709
      %v2822 = vmul.f32 %v2710, %v2710
      %v2823 = vmul.f32 %v2711, %v2711
      %v2824 = vmul.f32 %v2712, %v2712
      %v2825 = vmul.f32 %v2713, %v2713
      %v2826 = vmul.f32 %v2714, %v2714
      %v2827 = vmul.f32 %v2715, %v2715
      %v2828 = vmul.f32 %v2716, %v2716
      %v2829 = vmul.f32 %v2717, %v2717
      %v2830 = vmul.f32 %v2718, %v2718
      %v2831 = vmul.f32 %v2719, %v2719
      %v2832 = vmul.f32 %v2720, %v2720
      %v2833 = vmul.f32 %v2721, %v2721
      %v2834 = vmul.f32 %v2722, %v2722
      %v2835 = vmul.f32 %v2723, %v2723
      %v2836 = vmul.f32 %v2724, %v2724
      %v2837 = vmul.f32 %v2725, %v2725
      %v2838 = vmul.f32 %v2726, %v2726
      %v2839 = vmul.f32 %v2727, %v2727
      %v2840 = vmul.f32 %v2728, %v2728
      %v2841 = vmul.f32 %v2729, %v2729
      %v2842 = vmul.f32 %v2730, %v2730
      %v2843 = vmul.f32 %v2731, %v2731
      %v2844 = vmul.f32 %v2732, %v2732
      %v2845 = vmul.f32 %v2733, %v2733
      %v2846 = vmul.f32 %v2734, %v2734
      %v2847 = vmul.f32 %v2735, %v2735
      %v2848 = vmul.f32 %v2736, %v2736
      %v2849 = vmul.f32 %v2737, %v2737
      %v2850 = vmul.f32 %v2738, %v2738
      %v2851 = vmul.f32 %v2739, %v2739
      %v2852 = vmul.f32 %v2740, %v2740
      %v2853 = vmul.f32 %v2741, %v2741
      %v2854 = vmul.f32 %v2742, %v2742
      %v2855 = vmul.f32 %v2743, %v2743
      %v2856 = vmul.f32 %v2744, %v2744
      %v2857 = vmul.f32 %v2745, %v2745
      %v2858 = vmul.f32 %v2746, %v2746
      %v2859 = vmul.f32 %v2747, %v2747
      %v2860 = vmul.f32 %v2748, %v2748
      %v2861 = vmul.f32 %v2749, %v2749
      %v2862 = vmul.f32 %v2750, %v2750
      %v2863 = vmul.f32 %v2751, %v2751
      %v2864 = vmul.f32 %v2752, %v2752
      %v2865 = vmul.f32 %v2753, %v2753
      %v2866 = vmul.f32 %v2754, %v2754
      %v2867 = vmul.f32 %v2755, %v2755
      %v2868 = vmul.f32 %v2756, %v2756
      %v2869 = vmul.f32 %v2757, %v2757
      %v2870 = vmul.f32 %v2758, %v2758
      %v2871 = vmul.f32 %v2759, %v2759
      %v2872 = vmul.f32 %v2760, %v2760
      %v2873 = vmul.f32 %v2761, %v2761
      %v2874 = vmul.f32 %v2762, %v2762
      %v2875 = vmul.f32 %v2763, %v2763
      %v2876 = vmul.f32 %v2764, %v2764
      %v2877 = vmul.f32 %v2765, %v2765
      %v2878 = vmul.f32 %v2766, %v2766
      %v2879 = vmul.f32 %v2767, %v2767
      %v2880 = vmul.f32 %v2768, %v2768
      %v2881 = vmul.f32 %v2769, %v2769
      %v2882 = vmul.f32 %v2770, %v2770
      %v2883 = vmul.f32 %v2771, %v2771
      %v2884 = vmul.f32 %v2772, %v2772
      %v2885 = vmul.f32 %v2773, %v2773
      %v2886 = vmul.f32 %v2774, %v2774
      %v2887 = vmul.f32 %v2775, %v2775
      %v2888 = vmul.f32 %v2776, %v2776
      %v2889 = vmul.f32 %v2777, %v2777
      %v2890 = vmul.f32 %v2778, %v2778
      %v2891 = vmul.f32 %v2779, %v2779
      %v2892 = vmul.f32 %v2780, %v2780
      %v2893 = vmul.f32 %v2781, %v2781
      %v2894 = vmul.f32 %v2782, %v2782
      %v2895 = vmul.f32 %v2783, %v2783
      %v2896 = vmul.f32 %v2784, %v2784
      %v2897 = vmul.f32 %v2785, %v2785
      %v2898 = vmul.f32 %v2786, %v2786
      %v2899 = vmul.f32 %v2787, %v2787
      %v2900 = vmul.f32 %v2788, %v2788
      %v2901 = vmul.f32 %v2789, %v2789
      %v2902 = vmul.f32 %v2790, %v2790
      %v2903 = vmul.f32 %v2791, %v2791
      %v2904 = vmul.f32 %v2792, %v2792
      %v2905 = vmul.f32 %v2793, %v2793
      %v2906 = vmul.f32 %v2794, %v2794
      %v2907 = vmul.f32 %v2795, %v2795
      %v2908 = vmul.f32 %v2796, %v2796
      %v2909 = vmul.f32 %v2797, %v2797
      %v2910 = vmul.f32 %v2798, %v2798
      %v2911 = vmul.f32 %v2799, %v2799
      %v2912 = vmul.f32 %v2800, %v2800
      %v2913 = vsel %vm2408, %v2802, 0.0
      %v2914 = vadd.f32 %v2801, %v2913
      %2915 = vadd.xlane.f32.xlu0 %v2914
      %v2916 = vpop.xlane.xlu0 %2915
      %v2917 = vsel %vm2408, %v2804, 0.0
      %v2918 = vadd.f32 %v2803, %v2917
      %2919 = vadd.xlane.f32.xlu0 %v2918
      %v2920 = vpop.xlane.xlu0 %2919
      %v2921 = vsel %vm2408, %v2806, 0.0
      %v2922 = vadd.f32 %v2805, %v2921
      %2923 = vadd.xlane.f32.xlu0 %v2922
      %v2924 = vpop.xlane.xlu0 %2923
      %v2925 = vsel %vm2408, %v2808, 0.0
      %v2926 = vadd.f32 %v2807, %v2925
      %2927 = vadd.xlane.f32.xlu0 %v2926
      %v2928 = vpop.xlane.xlu0 %2927
      %v2929 = vsel %vm2408, %v2810, 0.0
      %v2930 = vadd.f32 %v2809, %v2929
      %2931 = vadd.xlane.f32.xlu0 %v2930
      %v2932 = vpop.xlane.xlu0 %2931
      %v2933 = vsel %vm2408, %v2812, 0.0
      %v2934 = vadd.f32 %v2811, %v2933
      %2935 = vadd.xlane.f32.xlu0 %v2934
      %v2936 = vpop.xlane.xlu0 %2935
      %v2937 = vsel %vm2408, %v2814, 0.0
      %v2938 = vadd.f32 %v2813, %v2937
      %2939 = vadd.xlane.f32.xlu0 %v2938
      %v2940 = vpop.xlane.xlu0 %2939
      %v2941 = vsel %vm2408, %v2816, 0.0
      %v2942 = vadd.f32 %v2815, %v2941
      %2943 = vadd.xlane.f32.xlu0 %v2942
      %v2944 = vpop.xlane.xlu0 %2943
      %v2945 = vsel %vm2408, %v2818, 0.0
      %v2946 = vadd.f32 %v2817, %v2945
      %2947 = vadd.xlane.f32.xlu0 %v2946
      %v2948 = vpop.xlane.xlu0 %2947
      %v2949 = vsel %vm2408, %v2820, 0.0
      %v2950 = vadd.f32 %v2819, %v2949
      %2951 = vadd.xlane.f32.xlu0 %v2950
      %v2952 = vpop.xlane.xlu0 %2951
      %v2953 = vsel %vm2408, %v2822, 0.0
      %v2954 = vadd.f32 %v2821, %v2953
      %2955 = vadd.xlane.f32.xlu0 %v2954
      %v2956 = vpop.xlane.xlu0 %2955
      %v2957 = vsel %vm2408, %v2824, 0.0
      %v2958 = vadd.f32 %v2823, %v2957
      %2959 = vadd.xlane.f32.xlu0 %v2958
      %v2960 = vpop.xlane.xlu0 %2959
      %v2961 = vsel %vm2408, %v2826, 0.0
      %v2962 = vadd.f32 %v2825, %v2961
      %2963 = vadd.xlane.f32.xlu0 %v2962
      %v2964 = vpop.xlane.xlu0 %2963
      %v2965 = vsel %vm2408, %v2828, 0.0
      %v2966 = vadd.f32 %v2827, %v2965
      %2967 = vadd.xlane.f32.xlu0 %v2966
      %v2968 = vpop.xlane.xlu0 %2967
      %v2969 = vsel %vm2408, %v2830, 0.0
      %v2970 = vadd.f32 %v2829, %v2969
      %2971 = vadd.xlane.f32.xlu0 %v2970
      %v2972 = vpop.xlane.xlu0 %2971
      %v2973 = vsel %vm2408, %v2832, 0.0
      %v2974 = vadd.f32 %v2831, %v2973
      %2975 = vadd.xlane.f32.xlu0 %v2974
      %v2976 = vpop.xlane.xlu0 %2975
      %v2977 = vsel %vm2408, %v2834, 0.0
      %v2978 = vadd.f32 %v2833, %v2977
      %2979 = vadd.xlane.f32.xlu0 %v2978
      %v2980 = vpop.xlane.xlu0 %2979
      %v2981 = vsel %vm2408, %v2836, 0.0
      %v2982 = vadd.f32 %v2835, %v2981
      %2983 = vadd.xlane.f32.xlu0 %v2982
      %v2984 = vpop.xlane.xlu0 %2983
      %v2985 = vsel %vm2408, %v2838, 0.0
      %v2986 = vadd.f32 %v2837, %v2985
      %2987 = vadd.xlane.f32.xlu0 %v2986
      %v2988 = vpop.xlane.xlu0 %2987
      %v2989 = vsel %vm2408, %v2840, 0.0
      %v2990 = vadd.f32 %v2839, %v2989
      %2991 = vadd.xlane.f32.xlu0 %v2990
      %v2992 = vpop.xlane.xlu0 %2991
      %v2993 = vsel %vm2408, %v2842, 0.0
      %v2994 = vadd.f32 %v2841, %v2993
      %2995 = vadd.xlane.f32.xlu0 %v2994
      %v2996 = vpop.xlane.xlu0 %2995
      %v2997 = vsel %vm2408, %v2844, 0.0
      %v2998 = vadd.f32 %v2843, %v2997
      %2999 = vadd.xlane.f32.xlu0 %v2998
      %v3000 = vpop.xlane.xlu0 %2999
      %v3001 = vsel %vm2408, %v2846, 0.0
      %v3002 = vadd.f32 %v2845, %v3001
      %3003 = vadd.xlane.f32.xlu0 %v3002
      %v3004 = vpop.xlane.xlu0 %3003
      %v3005 = vsel %vm2408, %v2848, 0.0
      %v3006 = vadd.f32 %v2847, %v3005
      %3007 = vadd.xlane.f32.xlu0 %v3006
      %v3008 = vpop.xlane.xlu0 %3007
      %v3009 = vsel %vm2408, %v2850, 0.0
      %v3010 = vadd.f32 %v2849, %v3009
      %3011 = vadd.xlane.f32.xlu0 %v3010
      %v3012 = vpop.xlane.xlu0 %3011
      %v3013 = vsel %vm2408, %v2852, 0.0
      %v3014 = vadd.f32 %v2851, %v3013
      %3015 = vadd.xlane.f32.xlu0 %v3014
      %v3016 = vpop.xlane.xlu0 %3015
      %v3017 = vsel %vm2408, %v2854, 0.0
      %v3018 = vadd.f32 %v2853, %v3017
      %3019 = vadd.xlane.f32.xlu0 %v3018
      %v3020 = vpop.xlane.xlu0 %3019
      %v3021 = vsel %vm2408, %v2856, 0.0
      %v3022 = vadd.f32 %v2855, %v3021
      %3023 = vadd.xlane.f32.xlu0 %v3022
      %v3024 = vpop.xlane.xlu0 %3023
      %v3025 = vsel %vm2408, %v2858, 0.0
      %v3026 = vadd.f32 %v2857, %v3025
      %3027 = vadd.xlane.f32.xlu0 %v3026
      %v3028 = vpop.xlane.xlu0 %3027
      %v3029 = vsel %vm2408, %v2860, 0.0
      %v3030 = vadd.f32 %v2859, %v3029
      %3031 = vadd.xlane.f32.xlu0 %v3030
      %v3032 = vpop.xlane.xlu0 %3031
      %v3033 = vsel %vm2408, %v2862, 0.0
      %v3034 = vadd.f32 %v2861, %v3033
      %3035 = vadd.xlane.f32.xlu0 %v3034
      %v3036 = vpop.xlane.xlu0 %3035
      %v3037 = vsel %vm2408, %v2864, 0.0
      %v3038 = vadd.f32 %v2863, %v3037
      %3039 = vadd.xlane.f32.xlu0 %v3038
      %v3040 = vpop.xlane.xlu0 %3039
      %v3041 = vsel %vm2408, %v2866, 0.0
      %v3042 = vadd.f32 %v2865, %v3041
      %3043 = vadd.xlane.f32.xlu0 %v3042
      %v3044 = vpop.xlane.xlu0 %3043
      %v3045 = vsel %vm2408, %v2868, 0.0
      %v3046 = vadd.f32 %v2867, %v3045
      %3047 = vadd.xlane.f32.xlu0 %v3046
      %v3048 = vpop.xlane.xlu0 %3047
      %v3049 = vsel %vm2408, %v2870, 0.0
      %v3050 = vadd.f32 %v2869, %v3049
      %3051 = vadd.xlane.f32.xlu0 %v3050
      %v3052 = vpop.xlane.xlu0 %3051
      %v3053 = vsel %vm2408, %v2872, 0.0
      %v3054 = vadd.f32 %v2871, %v3053
      %3055 = vadd.xlane.f32.xlu0 %v3054
      %v3056 = vpop.xlane.xlu0 %3055
      %v3057 = vsel %vm2408, %v2874, 0.0
      %v3058 = vadd.f32 %v2873, %v3057
      %3059 = vadd.xlane.f32.xlu0 %v3058
      %v3060 = vpop.xlane.xlu0 %3059
      %v3061 = vsel %vm2408, %v2876, 0.0
      %v3062 = vadd.f32 %v2875, %v3061
      %3063 = vadd.xlane.f32.xlu0 %v3062
      %v3064 = vpop.xlane.xlu0 %3063
      %v3065 = vsel %vm2408, %v2878, 0.0
      %v3066 = vadd.f32 %v2877, %v3065
      %3067 = vadd.xlane.f32.xlu0 %v3066
      %v3068 = vpop.xlane.xlu0 %3067
      %v3069 = vsel %vm2408, %v2880, 0.0
      %v3070 = vadd.f32 %v2879, %v3069
      %3071 = vadd.xlane.f32.xlu0 %v3070
      %v3072 = vpop.xlane.xlu0 %3071
      %v3073 = vsel %vm2408, %v2882, 0.0
      %v3074 = vadd.f32 %v2881, %v3073
      %3075 = vadd.xlane.f32.xlu0 %v3074
      %v3076 = vpop.xlane.xlu0 %3075
      %v3077 = vsel %vm2408, %v2884, 0.0
      %v3078 = vadd.f32 %v2883, %v3077
      %3079 = vadd.xlane.f32.xlu0 %v3078
      %v3080 = vpop.xlane.xlu0 %3079
      %v3081 = vsel %vm2408, %v2886, 0.0
      %v3082 = vadd.f32 %v2885, %v3081
      %3083 = vadd.xlane.f32.xlu0 %v3082
      %v3084 = vpop.xlane.xlu0 %3083
      %v3085 = vsel %vm2408, %v2888, 0.0
      %v3086 = vadd.f32 %v2887, %v3085
      %3087 = vadd.xlane.f32.xlu0 %v3086
      %v3088 = vpop.xlane.xlu0 %3087
      %v3089 = vsel %vm2408, %v2890, 0.0
      %v3090 = vadd.f32 %v2889, %v3089
      %3091 = vadd.xlane.f32.xlu0 %v3090
      %v3092 = vpop.xlane.xlu0 %3091
      %v3093 = vsel %vm2408, %v2892, 0.0
      %v3094 = vadd.f32 %v2891, %v3093
      %3095 = vadd.xlane.f32.xlu0 %v3094
      %v3096 = vpop.xlane.xlu0 %3095
      %v3097 = vsel %vm2408, %v2894, 0.0
      %v3098 = vadd.f32 %v2893, %v3097
      %3099 = vadd.xlane.f32.xlu0 %v3098
      %v3100 = vpop.xlane.xlu0 %3099
      %v3101 = vsel %vm2408, %v2896, 0.0
      %v3102 = vadd.f32 %v2895, %v3101
      %3103 = vadd.xlane.f32.xlu0 %v3102
      %v3104 = vpop.xlane.xlu0 %3103
      %v3105 = vsel %vm2408, %v2898, 0.0
      %v3106 = vadd.f32 %v2897, %v3105
      %3107 = vadd.xlane.f32.xlu0 %v3106
      %v3108 = vpop.xlane.xlu0 %3107
      %v3109 = vsel %vm2408, %v2900, 0.0
      %v3110 = vadd.f32 %v2899, %v3109
      %3111 = vadd.xlane.f32.xlu0 %v3110
      %v3112 = vpop.xlane.xlu0 %3111
      %v3113 = vsel %vm2408, %v2902, 0.0
      %v3114 = vadd.f32 %v2901, %v3113
      %3115 = vadd.xlane.f32.xlu0 %v3114
      %v3116 = vpop.xlane.xlu0 %3115
      %v3117 = vsel %vm2408, %v2904, 0.0
      %v3118 = vadd.f32 %v2903, %v3117
      %3119 = vadd.xlane.f32.xlu0 %v3118
      %v3120 = vpop.xlane.xlu0 %3119
      %v3121 = vsel %vm2408, %v2906, 0.0
      %v3122 = vadd.f32 %v2905, %v3121
      %3123 = vadd.xlane.f32.xlu0 %v3122
      %v3124 = vpop.xlane.xlu0 %3123
      %v3125 = vsel %vm2408, %v2908, 0.0
      %v3126 = vadd.f32 %v2907, %v3125
      %3127 = vadd.xlane.f32.xlu0 %v3126
      %v3128 = vpop.xlane.xlu0 %3127
      %v3129 = vsel %vm2408, %v2910, 0.0
      %v3130 = vadd.f32 %v2909, %v3129
      %3131 = vadd.xlane.f32.xlu0 %v3130
      %v3132 = vpop.xlane.xlu0 %3131
      %v3133 = vsel %vm2408, %v2912, 0.0
      %v3134 = vadd.f32 %v2911, %v3133
      %3135 = vadd.xlane.f32.xlu0 %v3134
      %v3136 = vpop.xlane.xlu0 %3135
      %v3137 = vmul.f32 %v2916, 0.0051020407
      %v3138 = vmul.f32 %v2920, 0.0051020407
      %v3139 = vmul.f32 %v2924, 0.0051020407
      %v3140 = vmul.f32 %v2928, 0.0051020407
      %v3141 = vmul.f32 %v2932, 0.0051020407
      %v3142 = vmul.f32 %v2936, 0.0051020407
      %v3143 = vmul.f32 %v2940, 0.0051020407
      %v3144 = vmul.f32 %v2944, 0.0051020407
      %v3145 = vmul.f32 %v2948, 0.0051020407
      %v3146 = vmul.f32 %v2952, 0.0051020407
      %v3147 = vmul.f32 %v2956, 0.0051020407
      %v3148 = vmul.f32 %v2960, 0.0051020407
      %v3149 = vmul.f32 %v2964, 0.0051020407
      %v3150 = vmul.f32 %v2968, 0.0051020407
      %v3151 = vmul.f32 %v2972, 0.0051020407
      %v3152 = vmul.f32 %v2976, 0.0051020407
      %v3153 = vmul.f32 %v2980, 0.0051020407
      %v3154 = vmul.f32 %v2984, 0.0051020407
      %v3155 = vmul.f32 %v2988, 0.0051020407
      %v3156 = vmul.f32 %v2992, 0.0051020407
      %v3157 = vmul.f32 %v2996, 0.0051020407
      %v3158 = vmul.f32 %v3000, 0.0051020407
      %v3159 = vmul.f32 %v3004, 0.0051020407
      %v3160 = vmul.f32 %v3008, 0.0051020407
      %v3161 = vmul.f32 %v3012, 0.0051020407
      %v3162 = vmul.f32 %v3016, 0.0051020407
      %v3163 = vmul.f32 %v3020, 0.0051020407
      %v3164 = vmul.f32 %v3024, 0.0051020407
      %v3165 = vmul.f32 %v3028, 0.0051020407
      %v3166 = vmul.f32 %v3032, 0.0051020407
      %v3167 = vmul.f32 %v3036, 0.0051020407
      %v3168 = vmul.f32 %v3040, 0.0051020407
      %v3169 = vmul.f32 %v3044, 0.0051020407
      %v3170 = vmul.f32 %v3048, 0.0051020407
      %v3171 = vmul.f32 %v3052, 0.0051020407
      %v3172 = vmul.f32 %v3056, 0.0051020407
      %v3173 = vmul.f32 %v3060, 0.0051020407
      %v3174 = vmul.f32 %v3064, 0.0051020407
      %v3175 = vmul.f32 %v3068, 0.0051020407
      %v3176 = vmul.f32 %v3072, 0.0051020407
      %v3177 = vmul.f32 %v3076, 0.0051020407
      %v3178 = vmul.f32 %v3080, 0.0051020407
      %v3179 = vmul.f32 %v3084, 0.0051020407
      %v3180 = vmul.f32 %v3088, 0.0051020407
      %v3181 = vmul.f32 %v3092, 0.0051020407
      %v3182 = vmul.f32 %v3096, 0.0051020407
      %v3183 = vmul.f32 %v3100, 0.0051020407
      %v3184 = vmul.f32 %v3104, 0.0051020407
      %v3185 = vmul.f32 %v3108, 0.0051020407
      %v3186 = vmul.f32 %v3112, 0.0051020407
      %v3187 = vmul.f32 %v3116, 0.0051020407
      %v3188 = vmul.f32 %v3120, 0.0051020407
      %v3189 = vmul.f32 %v3124, 0.0051020407
      %v3190 = vmul.f32 %v3128, 0.0051020407
      %v3191 = vmul.f32 %v3132, 0.0051020407
      %v3192 = vmul.f32 %v3136, 0.0051020407
      %v3193 = vadd.f32 %v3137, 1e-05
      %v3194 = vadd.f32 %v3138, 1e-05
      %v3195 = vadd.f32 %v3139, 1e-05
      %v3196 = vadd.f32 %v3140, 1e-05
      %v3197 = vadd.f32 %v3141, 1e-05
      %v3198 = vadd.f32 %v3142, 1e-05
      %v3199 = vadd.f32 %v3143, 1e-05
      %v3200 = vadd.f32 %v3144, 1e-05
      %v3201 = vadd.f32 %v3145, 1e-05
      %v3202 = vadd.f32 %v3146, 1e-05
      %v3203 = vadd.f32 %v3147, 1e-05
      %v3204 = vadd.f32 %v3148, 1e-05
      %v3205 = vadd.f32 %v3149, 1e-05
      %v3206 = vadd.f32 %v3150, 1e-05
      %v3207 = vadd.f32 %v3151, 1e-05
      %v3208 = vadd.f32 %v3152, 1e-05
      %v3209 = vadd.f32 %v3153, 1e-05
      %v3210 = vadd.f32 %v3154, 1e-05
      %v3211 = vadd.f32 %v3155, 1e-05
      %v3212 = vadd.f32 %v3156, 1e-05
      %v3213 = vadd.f32 %v3157, 1e-05
      %v3214 = vadd.f32 %v3158, 1e-05
      %v3215 = vadd.f32 %v3159, 1e-05
      %v3216 = vadd.f32 %v3160, 1e-05
      %v3217 = vadd.f32 %v3161, 1e-05
      %v3218 = vadd.f32 %v3162, 1e-05
      %v3219 = vadd.f32 %v3163, 1e-05
      %v3220 = vadd.f32 %v3164, 1e-05
      %v3221 = vadd.f32 %v3165, 1e-05
      %v3222 = vadd.f32 %v3166, 1e-05
      %v3223 = vadd.f32 %v3167, 1e-05
      %v3224 = vadd.f32 %v3168, 1e-05
      %v3225 = vadd.f32 %v3169, 1e-05
      %v3226 = vadd.f32 %v3170, 1e-05
      %v3227 = vadd.f32 %v3171, 1e-05
      %v3228 = vadd.f32 %v3172, 1e-05
      %v3229 = vadd.f32 %v3173, 1e-05
      %v3230 = vadd.f32 %v3174, 1e-05
      %v3231 = vadd.f32 %v3175, 1e-05
      %v3232 = vadd.f32 %v3176, 1e-05
      %v3233 = vadd.f32 %v3177, 1e-05
      %v3234 = vadd.f32 %v3178, 1e-05
      %v3235 = vadd.f32 %v3179, 1e-05
      %v3236 = vadd.f32 %v3180, 1e-05
      %v3237 = vadd.f32 %v3181, 1e-05
      %v3238 = vadd.f32 %v3182, 1e-05
      %v3239 = vadd.f32 %v3183, 1e-05
      %v3240 = vadd.f32 %v3184, 1e-05
      %v3241 = vadd.f32 %v3185, 1e-05
      %v3242 = vadd.f32 %v3186, 1e-05
      %v3243 = vadd.f32 %v3187, 1e-05
      %v3244 = vadd.f32 %v3188, 1e-05
      %v3245 = vadd.f32 %v3189, 1e-05
      %v3246 = vadd.f32 %v3190, 1e-05
      %v3247 = vadd.f32 %v3191, 1e-05
      %v3248 = vadd.f32 %v3192, 1e-05
      %v3249 = vrsqrt.pop %v3193
      %v3250 = vrsqrt.pop %v3194
      %v3251 = vrsqrt.pop %v3195
      %v3252 = vrsqrt.pop %v3196
      %v3253 = vrsqrt.pop %v3197
      %v3254 = vrsqrt.pop %v3198
      %v3255 = vrsqrt.pop %v3199
      %v3256 = vrsqrt.pop %v3200
      %v3257 = vrsqrt.pop %v3201
      %v3258 = vrsqrt.pop %v3202
      %v3259 = vrsqrt.pop %v3203
      %v3260 = vrsqrt.pop %v3204
      %v3261 = vrsqrt.pop %v3205
      %v3262 = vrsqrt.pop %v3206
      %v3263 = vrsqrt.pop %v3207
      %v3264 = vrsqrt.pop %v3208
      %v3265 = vrsqrt.pop %v3209
      %v3266 = vrsqrt.pop %v3210
      %v3267 = vrsqrt.pop %v3211
      %v3268 = vrsqrt.pop %v3212
      %v3269 = vrsqrt.pop %v3213
      %v3270 = vrsqrt.pop %v3214
      %v3271 = vrsqrt.pop %v3215
      %v3272 = vrsqrt.pop %v3216
      %v3273 = vrsqrt.pop %v3217
      %v3274 = vrsqrt.pop %v3218
      %v3275 = vrsqrt.pop %v3219
      %v3276 = vrsqrt.pop %v3220
      %v3277 = vrsqrt.pop %v3221
      %v3278 = vrsqrt.pop %v3222
      %v3279 = vrsqrt.pop %v3223
      %v3280 = vrsqrt.pop %v3224
      %v3281 = vrsqrt.pop %v3225
      %v3282 = vrsqrt.pop %v3226
      %v3283 = vrsqrt.pop %v3227
      %v3284 = vrsqrt.pop %v3228
      %v3285 = vrsqrt.pop %v3229
      %v3286 = vrsqrt.pop %v3230
      %v3287 = vrsqrt.pop %v3231
      %v3288 = vrsqrt.pop %v3232
      %v3289 = vrsqrt.pop %v3233
      %v3290 = vrsqrt.pop %v3234
      %v3291 = vrsqrt.pop %v3235
      %v3292 = vrsqrt.pop %v3236
      %v3293 = vrsqrt.pop %v3237
      %v3294 = vrsqrt.pop %v3238
      %v3295 = vrsqrt.pop %v3239
      %v3296 = vrsqrt.pop %v3240
      %v3297 = vrsqrt.pop %v3241
      %v3298 = vrsqrt.pop %v3242
      %v3299 = vrsqrt.pop %v3243
      %v3300 = vrsqrt.pop %v3244
      %v3301 = vrsqrt.pop %v3245
      %v3302 = vrsqrt.pop %v3246
      %v3303 = vrsqrt.pop %v3247
      %v3304 = vrsqrt.pop %v3248
      %s3305 = smul.u32 %s15, 448
      %s3306 = scalar_lea.vmem %s3, %s3305
      %v3307 = vld [vmem:[%s3306] sm:$0xff]
      %v3308 = vld [vmem:[%s3306 + $0x8] sm:$0xff]
      %v3309 = vld [vmem:[%s3306 + $0x10] sm:$0xff]
      %v3310 = vld [vmem:[%s3306 + $0x18] sm:$0xff]
      %v3311 = vld [vmem:[%s3306 + $0x20] sm:$0xff]
      %v3312 = vld [vmem:[%s3306 + $0x28] sm:$0xff]
      %v3313 = vld [vmem:[%s3306 + $0x30] sm:$0xff]
      %v3314 = vld [vmem:[%s3306 + $0x38] sm:$0xff]
      %v3315 = vld [vmem:[%s3306 + $0x40] sm:$0xff]
      %v3316 = vld [vmem:[%s3306 + $0x48] sm:$0xff]
      %v3317 = vld [vmem:[%s3306 + $0x50] sm:$0xff]
      %v3318 = vld [vmem:[%s3306 + $0x58] sm:$0xff]
      %v3319 = vld [vmem:[%s3306 + $0x60] sm:$0xff]
      %v3320 = vld [vmem:[%s3306 + $0x68] sm:$0xff]
      %v3321 = vld [vmem:[%s3306 + $0x70] sm:$0xff]
      %v3322 = vld [vmem:[%s3306 + $0x78] sm:$0xff]
      %v3323 = vld [vmem:[%s3306 + $0x80] sm:$0xff]
      %v3324 = vld [vmem:[%s3306 + $0x88] sm:$0xff]
      %v3325 = vld [vmem:[%s3306 + $0x90] sm:$0xff]
      %v3326 = vld [vmem:[%s3306 + $0x98] sm:$0xff]
      %v3327 = vld [vmem:[%s3306 + $0xa0] sm:$0xff]
      %v3328 = vld [vmem:[%s3306 + $0xa8] sm:$0xff]
      %v3329 = vld [vmem:[%s3306 + $0xb0] sm:$0xff]
      %v3330 = vld [vmem:[%s3306 + $0xb8] sm:$0xff]
      %v3331 = vld [vmem:[%s3306 + $0xc0] sm:$0xff]
      %v3332 = vld [vmem:[%s3306 + $0xc8] sm:$0xff]
      %v3333 = vld [vmem:[%s3306 + $0xd0] sm:$0xff]
      %v3334 = vld [vmem:[%s3306 + $0xd8] sm:$0xff]
      %v3335 = vld [vmem:[%s3306 + $0xe0] sm:$0xff]
      %v3336 = vld [vmem:[%s3306 + $0xe8] sm:$0xff]
      %v3337 = vld [vmem:[%s3306 + $0xf0] sm:$0xff]
      %v3338 = vld [vmem:[%s3306 + $0xf8] sm:$0xff]
      %v3339 = vld [vmem:[%s3306 + $0x100] sm:$0xff]
      %v3340 = vld [vmem:[%s3306 + $0x108] sm:$0xff]
      %v3341 = vld [vmem:[%s3306 + $0x110] sm:$0xff]
      %v3342 = vld [vmem:[%s3306 + $0x118] sm:$0xff]
      %v3343 = vld [vmem:[%s3306 + $0x120] sm:$0xff]
      %v3344 = vld [vmem:[%s3306 + $0x128] sm:$0xff]
      %v3345 = vld [vmem:[%s3306 + $0x130] sm:$0xff]
      %v3346 = vld [vmem:[%s3306 + $0x138] sm:$0xff]
      %v3347 = vld [vmem:[%s3306 + $0x140] sm:$0xff]
      %v3348 = vld [vmem:[%s3306 + $0x148] sm:$0xff]
      %v3349 = vld [vmem:[%s3306 + $0x150] sm:$0xff]
      %v3350 = vld [vmem:[%s3306 + $0x158] sm:$0xff]
      %v3351 = vld [vmem:[%s3306 + $0x160] sm:$0xff]
      %v3352 = vld [vmem:[%s3306 + $0x168] sm:$0xff]
      %v3353 = vld [vmem:[%s3306 + $0x170] sm:$0xff]
      %v3354 = vld [vmem:[%s3306 + $0x178] sm:$0xff]
      %v3355 = vld [vmem:[%s3306 + $0x180] sm:$0xff]
      %v3356 = vld [vmem:[%s3306 + $0x188] sm:$0xff]
      %v3357 = vld [vmem:[%s3306 + $0x190] sm:$0xff]
      %v3358 = vld [vmem:[%s3306 + $0x198] sm:$0xff]
      %v3359 = vld [vmem:[%s3306 + $0x1a0] sm:$0xff]
      %v3360 = vld [vmem:[%s3306 + $0x1a8] sm:$0xff]
      %v3361 = vld [vmem:[%s3306 + $0x1b0] sm:$0xff]
      %v3362 = vld [vmem:[%s3306 + $0x1b8] sm:$0xff]
      %v3363 = vmul.f32 %v3307, %v3249
      %v3364 = vmul.f32 %v3308, %v3250
      %v3365 = vmul.f32 %v3309, %v3251
      %v3366 = vmul.f32 %v3310, %v3252
      %v3367 = vmul.f32 %v3311, %v3253
      %v3368 = vmul.f32 %v3312, %v3254
      %v3369 = vmul.f32 %v3313, %v3255
      %v3370 = vmul.f32 %v3314, %v3256
      %v3371 = vmul.f32 %v3315, %v3257
      %v3372 = vmul.f32 %v3316, %v3258
      %v3373 = vmul.f32 %v3317, %v3259
      %v3374 = vmul.f32 %v3318, %v3260
      %v3375 = vmul.f32 %v3319, %v3261
      %v3376 = vmul.f32 %v3320, %v3262
      %v3377 = vmul.f32 %v3321, %v3263
      %v3378 = vmul.f32 %v3322, %v3264
      %v3379 = vmul.f32 %v3323, %v3265
      %v3380 = vmul.f32 %v3324, %v3266
      %v3381 = vmul.f32 %v3325, %v3267
      %v3382 = vmul.f32 %v3326, %v3268
      %v3383 = vmul.f32 %v3327, %v3269
      %v3384 = vmul.f32 %v3328, %v3270
      %v3385 = vmul.f32 %v3329, %v3271
      %v3386 = vmul.f32 %v3330, %v3272
      %v3387 = vmul.f32 %v3331, %v3273
      %v3388 = vmul.f32 %v3332, %v3274
      %v3389 = vmul.f32 %v3333, %v3275
      %v3390 = vmul.f32 %v3334, %v3276
      %v3391 = vmul.f32 %v3335, %v3277
      %v3392 = vmul.f32 %v3336, %v3278
      %v3393 = vmul.f32 %v3337, %v3279
      %v3394 = vmul.f32 %v3338, %v3280
      %v3395 = vmul.f32 %v3339, %v3281
      %v3396 = vmul.f32 %v3340, %v3282
      %v3397 = vmul.f32 %v3341, %v3283
      %v3398 = vmul.f32 %v3342, %v3284
      %v3399 = vmul.f32 %v3343, %v3285
      %v3400 = vmul.f32 %v3344, %v3286
      %v3401 = vmul.f32 %v3345, %v3287
      %v3402 = vmul.f32 %v3346, %v3288
      %v3403 = vmul.f32 %v3347, %v3289
      %v3404 = vmul.f32 %v3348, %v3290
      %v3405 = vmul.f32 %v3349, %v3291
      %v3406 = vmul.f32 %v3350, %v3292
      %v3407 = vmul.f32 %v3351, %v3293
      %v3408 = vmul.f32 %v3352, %v3294
      %v3409 = vmul.f32 %v3353, %v3295
      %v3410 = vmul.f32 %v3354, %v3296
      %v3411 = vmul.f32 %v3355, %v3297
      %v3412 = vmul.f32 %v3356, %v3298
      %v3413 = vmul.f32 %v3357, %v3299
      %v3414 = vmul.f32 %v3358, %v3300
      %v3415 = vmul.f32 %v3359, %v3301
      %v3416 = vmul.f32 %v3360, %v3302
      %v3417 = vmul.f32 %v3361, %v3303
      %v3418 = vmul.f32 %v3362, %v3304
      %v3419 = vld [vmem:[%s222] sm:$0xff]
      %v3420 = vld [vmem:[%s222 + $0x8] sm:$0xff]
      %v3421 = vld [vmem:[%s222 + $0x10] sm:$0xff]
      %v3422 = vld [vmem:[%s222 + $0x18] sm:$0xff]
      %v3423 = vld [vmem:[%s222 + $0x20] sm:$0xff]
      %v3424 = vld [vmem:[%s222 + $0x28] sm:$0xff]
      %v3425 = vld [vmem:[%s222 + $0x30] sm:$0xff]
      %v3426 = vld [vmem:[%s222 + $0x38] sm:$0xff]
      %v3427 = vld [vmem:[%s222 + $0x40] sm:$0xff]
      %v3428 = vld [vmem:[%s222 + $0x48] sm:$0xff]
      %v3429 = vld [vmem:[%s222 + $0x50] sm:$0xff]
      %v3430 = vld [vmem:[%s222 + $0x58] sm:$0xff]
      %v3431 = vld [vmem:[%s222 + $0x60] sm:$0xff]
      %v3432 = vld [vmem:[%s222 + $0x68] sm:$0xff]
      %v3433 = vld [vmem:[%s222 + $0x70] sm:$0xff]
      %v3434 = vld [vmem:[%s222 + $0x78] sm:$0xff]
      %v3435 = vld [vmem:[%s222 + $0x80] sm:$0xff]
      %v3436 = vld [vmem:[%s222 + $0x88] sm:$0xff]
      %v3437 = vld [vmem:[%s222 + $0x90] sm:$0xff]
      %v3438 = vld [vmem:[%s222 + $0x98] sm:$0xff]
      %v3439 = vld [vmem:[%s222 + $0xa0] sm:$0xff]
      %v3440 = vld [vmem:[%s222 + $0xa8] sm:$0xff]
      %v3441 = vld [vmem:[%s222 + $0xb0] sm:$0xff]
      %v3442 = vld [vmem:[%s222 + $0xb8] sm:$0xff]
      %v3443 = vld [vmem:[%s222 + $0xc0] sm:$0xff]
      %v3444 = vld [vmem:[%s222 + $0xc8] sm:$0xff]
      %v3445 = vld [vmem:[%s222 + $0xd0] sm:$0xff]
      %v3446 = vld [vmem:[%s222 + $0xd8] sm:$0xff]
      %v3447 = vld [vmem:[%s222 + $0xe0] sm:$0xff]
      %v3448 = vld [vmem:[%s222 + $0xe8] sm:$0xff]
      %v3449 = vld [vmem:[%s222 + $0xf0] sm:$0xff]
      %v3450 = vld [vmem:[%s222 + $0xf8] sm:$0xff]
      %v3451 = vld [vmem:[%s222 + $0x100] sm:$0xff]
      %v3452 = vld [vmem:[%s222 + $0x108] sm:$0xff]
      %v3453 = vld [vmem:[%s222 + $0x110] sm:$0xff]
      %v3454 = vld [vmem:[%s222 + $0x118] sm:$0xff]
      %v3455 = vld [vmem:[%s222 + $0x120] sm:$0xff]
      %v3456 = vld [vmem:[%s222 + $0x128] sm:$0xff]
      %v3457 = vld [vmem:[%s222 + $0x130] sm:$0xff]
      %v3458 = vld [vmem:[%s222 + $0x138] sm:$0xff]
      %v3459 = vld [vmem:[%s222 + $0x140] sm:$0xff]
      %v3460 = vld [vmem:[%s222 + $0x148] sm:$0xff]
      %v3461 = vld [vmem:[%s222 + $0x150] sm:$0xff]
      %v3462 = vld [vmem:[%s222 + $0x158] sm:$0xff]
      %v3463 = vld [vmem:[%s222 + $0x160] sm:$0xff]
      %v3464 = vld [vmem:[%s222 + $0x168] sm:$0xff]
      %v3465 = vld [vmem:[%s222 + $0x170] sm:$0xff]
      %v3466 = vld [vmem:[%s222 + $0x178] sm:$0xff]
      %v3467 = vld [vmem:[%s222 + $0x180] sm:$0xff]
      %v3468 = vld [vmem:[%s222 + $0x188] sm:$0xff]
      %v3469 = vld [vmem:[%s222 + $0x190] sm:$0xff]
      %v3470 = vld [vmem:[%s222 + $0x198] sm:$0xff]
      %v3471 = vld [vmem:[%s222 + $0x1a0] sm:$0xff]
      %v3472 = vld [vmem:[%s222 + $0x1a8] sm:$0xff]
      %v3473 = vld [vmem:[%s222 + $0x1b0] sm:$0xff]
      %v3474 = vld [vmem:[%s222 + $0x1b8] sm:$0xff]
      %v3475 = vld [vmem:[%s222 + $0x1c0] sm:$0xff]
      %v3476 = vld [vmem:[%s222 + $0x1c8] sm:$0xff]
      %v3477 = vld [vmem:[%s222 + $0x1d0] sm:$0xff]
      %v3478 = vld [vmem:[%s222 + $0x1d8] sm:$0xff]
      %v3479 = vld [vmem:[%s222 + $0x1e0] sm:$0xff]
      %v3480 = vld [vmem:[%s222 + $0x1e8] sm:$0xff]
      %v3481 = vld [vmem:[%s222 + $0x1f0] sm:$0xff]
      %v3482 = vld [vmem:[%s222 + $0x1f8] sm:$0xff]
      %v3483 = vld [vmem:[%s222 + $0x200] sm:$0xff]
      %v3484 = vld [vmem:[%s222 + $0x208] sm:$0xff]
      %v3485 = vld [vmem:[%s222 + $0x210] sm:$0xff]
      %v3486 = vld [vmem:[%s222 + $0x218] sm:$0xff]
      %v3487 = vld [vmem:[%s222 + $0x220] sm:$0xff]
      %v3488 = vld [vmem:[%s222 + $0x228] sm:$0xff]
      %v3489 = vld [vmem:[%s222 + $0x230] sm:$0xff]
      %v3490 = vld [vmem:[%s222 + $0x238] sm:$0xff]
      %v3491 = vld [vmem:[%s222 + $0x240] sm:$0xff]
      %v3492 = vld [vmem:[%s222 + $0x248] sm:$0xff]
      %v3493 = vld [vmem:[%s222 + $0x250] sm:$0xff]
      %v3494 = vld [vmem:[%s222 + $0x258] sm:$0xff]
      %v3495 = vld [vmem:[%s222 + $0x260] sm:$0xff]
      %v3496 = vld [vmem:[%s222 + $0x268] sm:$0xff]
      %v3497 = vld [vmem:[%s222 + $0x270] sm:$0xff]
      %v3498 = vld [vmem:[%s222 + $0x278] sm:$0xff]
      %v3499 = vld [vmem:[%s222 + $0x280] sm:$0xff]
      %v3500 = vld [vmem:[%s222 + $0x288] sm:$0xff]
      %v3501 = vld [vmem:[%s222 + $0x290] sm:$0xff]
      %v3502 = vld [vmem:[%s222 + $0x298] sm:$0xff]
      %v3503 = vld [vmem:[%s222 + $0x2a0] sm:$0xff]
      %v3504 = vld [vmem:[%s222 + $0x2a8] sm:$0xff]
      %v3505 = vld [vmem:[%s222 + $0x2b0] sm:$0xff]
      %v3506 = vld [vmem:[%s222 + $0x2b8] sm:$0xff]
      %v3507 = vld [vmem:[%s222 + $0x2c0] sm:$0xff]
      %v3508 = vld [vmem:[%s222 + $0x2c8] sm:$0xff]
      %v3509 = vld [vmem:[%s222 + $0x2d0] sm:$0xff]
      %v3510 = vld [vmem:[%s222 + $0x2d8] sm:$0xff]
      %v3511 = vld [vmem:[%s222 + $0x2e0] sm:$0xff]
      %v3512 = vld [vmem:[%s222 + $0x2e8] sm:$0xff]
      %v3513 = vld [vmem:[%s222 + $0x2f0] sm:$0xff]
      %v3514 = vld [vmem:[%s222 + $0x2f8] sm:$0xff]
      %v3515 = vld [vmem:[%s222 + $0x300] sm:$0xff]
      %v3516 = vld [vmem:[%s222 + $0x308] sm:$0xff]
      %v3517 = vld [vmem:[%s222 + $0x310] sm:$0xff]
      %v3518 = vld [vmem:[%s222 + $0x318] sm:$0xff]
      %v3519 = vld [vmem:[%s222 + $0x320] sm:$0xff]
      %v3520 = vld [vmem:[%s222 + $0x328] sm:$0xff]
      %v3521 = vld [vmem:[%s222 + $0x330] sm:$0xff]
      %v3522 = vld [vmem:[%s222 + $0x338] sm:$0xff]
      %v3523 = vld [vmem:[%s222 + $0x340] sm:$0xff]
      %v3524 = vld [vmem:[%s222 + $0x348] sm:$0xff]
      %v3525 = vld [vmem:[%s222 + $0x350] sm:$0xff]
      %v3526 = vld [vmem:[%s222 + $0x358] sm:$0xff]
      %v3527 = vld [vmem:[%s222 + $0x360] sm:$0xff]
      %v3528 = vld [vmem:[%s222 + $0x368] sm:$0xff]
      %v3529 = vld [vmem:[%s222 + $0x370] sm:$0xff]
      %v3530 = vld [vmem:[%s222 + $0x378] sm:$0xff]
      %3532 = vset.pattern.permute.xlu0 0
      %3533 = vperm.xlu0 %3532, %v3363
      %v3534 = vpop.permute.xlu0 %3533
      %3537 = vset.pattern.permute.xlu0 0
      %3538 = vperm.xlu0 %3537, %v3364
      %v3539 = vpop.permute.xlu0 %3538
      %3542 = vset.pattern.permute.xlu0 0
      %3543 = vperm.xlu0 %3542, %v3365
      %v3544 = vpop.permute.xlu0 %3543
      %3547 = vset.pattern.permute.xlu0 0
      %3548 = vperm.xlu0 %3547, %v3366
      %v3549 = vpop.permute.xlu0 %3548
      %3552 = vset.pattern.permute.xlu0 0
      %3553 = vperm.xlu0 %3552, %v3367
      %v3554 = vpop.permute.xlu0 %3553
      %3557 = vset.pattern.permute.xlu0 0
      %3558 = vperm.xlu0 %3557, %v3368
      %v3559 = vpop.permute.xlu0 %3558
      %3562 = vset.pattern.permute.xlu0 0
      %3563 = vperm.xlu0 %3562, %v3369
      %v3564 = vpop.permute.xlu0 %3563
      %3567 = vset.pattern.permute.xlu0 0
      %3568 = vperm.xlu0 %3567, %v3370
      %v3569 = vpop.permute.xlu0 %3568
      %3572 = vset.pattern.permute.xlu0 0
      %3573 = vperm.xlu0 %3572, %v3371
      %v3574 = vpop.permute.xlu0 %3573
      %3577 = vset.pattern.permute.xlu0 0
      %3578 = vperm.xlu0 %3577, %v3372
      %v3579 = vpop.permute.xlu0 %3578
      %3582 = vset.pattern.permute.xlu0 0
      %3583 = vperm.xlu0 %3582, %v3373
      %v3584 = vpop.permute.xlu0 %3583
      %3587 = vset.pattern.permute.xlu0 0
      %3588 = vperm.xlu0 %3587, %v3374
      %v3589 = vpop.permute.xlu0 %3588
      %3592 = vset.pattern.permute.xlu0 0
      %3593 = vperm.xlu0 %3592, %v3375
      %v3594 = vpop.permute.xlu0 %3593
      %3597 = vset.pattern.permute.xlu0 0
      %3598 = vperm.xlu0 %3597, %v3376
      %v3599 = vpop.permute.xlu0 %3598
      %3602 = vset.pattern.permute.xlu0 0
      %3603 = vperm.xlu0 %3602, %v3377
      %v3604 = vpop.permute.xlu0 %3603
      %3607 = vset.pattern.permute.xlu0 0
      %3608 = vperm.xlu0 %3607, %v3378
      %v3609 = vpop.permute.xlu0 %3608
      %3612 = vset.pattern.permute.xlu0 0
      %3613 = vperm.xlu0 %3612, %v3379
      %v3614 = vpop.permute.xlu0 %3613
      %3617 = vset.pattern.permute.xlu0 0
      %3618 = vperm.xlu0 %3617, %v3380
      %v3619 = vpop.permute.xlu0 %3618
      %3622 = vset.pattern.permute.xlu0 0
      %3623 = vperm.xlu0 %3622, %v3381
      %v3624 = vpop.permute.xlu0 %3623
      %3627 = vset.pattern.permute.xlu0 0
      %3628 = vperm.xlu0 %3627, %v3382
      %v3629 = vpop.permute.xlu0 %3628
      %3632 = vset.pattern.permute.xlu0 0
      %3633 = vperm.xlu0 %3632, %v3383
      %v3634 = vpop.permute.xlu0 %3633
      %3637 = vset.pattern.permute.xlu0 0
      %3638 = vperm.xlu0 %3637, %v3384
      %v3639 = vpop.permute.xlu0 %3638
      %3642 = vset.pattern.permute.xlu0 0
      %3643 = vperm.xlu0 %3642, %v3385
      %v3644 = vpop.permute.xlu0 %3643
      %3647 = vset.pattern.permute.xlu0 0
      %3648 = vperm.xlu0 %3647, %v3386
      %v3649 = vpop.permute.xlu0 %3648
      %3652 = vset.pattern.permute.xlu0 0
      %3653 = vperm.xlu0 %3652, %v3387
      %v3654 = vpop.permute.xlu0 %3653
      %3657 = vset.pattern.permute.xlu0 0
      %3658 = vperm.xlu0 %3657, %v3388
      %v3659 = vpop.permute.xlu0 %3658
      %3662 = vset.pattern.permute.xlu0 0
      %3663 = vperm.xlu0 %3662, %v3389
      %v3664 = vpop.permute.xlu0 %3663
      %3667 = vset.pattern.permute.xlu0 0
      %3668 = vperm.xlu0 %3667, %v3390
      %v3669 = vpop.permute.xlu0 %3668
      %3672 = vset.pattern.permute.xlu0 0
      %3673 = vperm.xlu0 %3672, %v3391
      %v3674 = vpop.permute.xlu0 %3673
      %3677 = vset.pattern.permute.xlu0 0
      %3678 = vperm.xlu0 %3677, %v3392
      %v3679 = vpop.permute.xlu0 %3678
      %3682 = vset.pattern.permute.xlu0 0
      %3683 = vperm.xlu0 %3682, %v3393
      %v3684 = vpop.permute.xlu0 %3683
      %3687 = vset.pattern.permute.xlu0 0
      %3688 = vperm.xlu0 %3687, %v3394
      %v3689 = vpop.permute.xlu0 %3688
      %3692 = vset.pattern.permute.xlu0 0
      %3693 = vperm.xlu0 %3692, %v3395
      %v3694 = vpop.permute.xlu0 %3693
      %3697 = vset.pattern.permute.xlu0 0
      %3698 = vperm.xlu0 %3697, %v3396
      %v3699 = vpop.permute.xlu0 %3698
      %3702 = vset.pattern.permute.xlu0 0
      %3703 = vperm.xlu0 %3702, %v3397
      %v3704 = vpop.permute.xlu0 %3703
      %3707 = vset.pattern.permute.xlu0 0
      %3708 = vperm.xlu0 %3707, %v3398
      %v3709 = vpop.permute.xlu0 %3708
      %3712 = vset.pattern.permute.xlu0 0
      %3713 = vperm.xlu0 %3712, %v3399
      %v3714 = vpop.permute.xlu0 %3713
      %3717 = vset.pattern.permute.xlu0 0
      %3718 = vperm.xlu0 %3717, %v3400
      %v3719 = vpop.permute.xlu0 %3718
      %3722 = vset.pattern.permute.xlu0 0
      %3723 = vperm.xlu0 %3722, %v3401
      %v3724 = vpop.permute.xlu0 %3723
      %3727 = vset.pattern.permute.xlu0 0
      %3728 = vperm.xlu0 %3727, %v3402
      %v3729 = vpop.permute.xlu0 %3728
      %3732 = vset.pattern.permute.xlu0 0
      %3733 = vperm.xlu0 %3732, %v3403
      %v3734 = vpop.permute.xlu0 %3733
      %3737 = vset.pattern.permute.xlu0 0
      %3738 = vperm.xlu0 %3737, %v3404
      %v3739 = vpop.permute.xlu0 %3738
      %3742 = vset.pattern.permute.xlu0 0
      %3743 = vperm.xlu0 %3742, %v3405
      %v3744 = vpop.permute.xlu0 %3743
      %3747 = vset.pattern.permute.xlu0 0
      %3748 = vperm.xlu0 %3747, %v3406
      %v3749 = vpop.permute.xlu0 %3748
      %3752 = vset.pattern.permute.xlu0 0
      %3753 = vperm.xlu0 %3752, %v3407
      %v3754 = vpop.permute.xlu0 %3753
      %3757 = vset.pattern.permute.xlu0 0
      %3758 = vperm.xlu0 %3757, %v3408
      %v3759 = vpop.permute.xlu0 %3758
      %3762 = vset.pattern.permute.xlu0 0
      %3763 = vperm.xlu0 %3762, %v3409
      %v3764 = vpop.permute.xlu0 %3763
      %3767 = vset.pattern.permute.xlu0 0
      %3768 = vperm.xlu0 %3767, %v3410
      %v3769 = vpop.permute.xlu0 %3768
      %3772 = vset.pattern.permute.xlu0 0
      %3773 = vperm.xlu0 %3772, %v3411
      %v3774 = vpop.permute.xlu0 %3773
      %3777 = vset.pattern.permute.xlu0 0
      %3778 = vperm.xlu0 %3777, %v3412
      %v3779 = vpop.permute.xlu0 %3778
      %3782 = vset.pattern.permute.xlu0 0
      %3783 = vperm.xlu0 %3782, %v3413
      %v3784 = vpop.permute.xlu0 %3783
      %3787 = vset.pattern.permute.xlu0 0
      %3788 = vperm.xlu0 %3787, %v3414
      %v3789 = vpop.permute.xlu0 %3788
      %3792 = vset.pattern.permute.xlu0 0
      %3793 = vperm.xlu0 %3792, %v3415
      %v3794 = vpop.permute.xlu0 %3793
      %3797 = vset.pattern.permute.xlu0 0
      %3798 = vperm.xlu0 %3797, %v3416
      %v3799 = vpop.permute.xlu0 %3798
      %3802 = vset.pattern.permute.xlu0 0
      %3803 = vperm.xlu0 %3802, %v3417
      %v3804 = vpop.permute.xlu0 %3803
      %3807 = vset.pattern.permute.xlu0 0
      %3808 = vperm.xlu0 %3807, %v3418
      %v3809 = vpop.permute.xlu0 %3808
      %v3811 = vmul.f32 %v2689, %v3534
      %v3812 = vmul.f32 %v2690, %v3534
      %v3813 = vmul.f32 %v2691, %v3539
      %v3814 = vmul.f32 %v2692, %v3539
      %v3815 = vmul.f32 %v2693, %v3544
      %v3816 = vmul.f32 %v2694, %v3544
      %v3817 = vmul.f32 %v2695, %v3549
      %v3818 = vmul.f32 %v2696, %v3549
      %v3819 = vmul.f32 %v2697, %v3554
      %v3820 = vmul.f32 %v2698, %v3554
      %v3821 = vmul.f32 %v2699, %v3559
      %v3822 = vmul.f32 %v2700, %v3559
      %v3823 = vmul.f32 %v2701, %v3564
      %v3824 = vmul.f32 %v2702, %v3564
      %v3825 = vmul.f32 %v2703, %v3569
      %v3826 = vmul.f32 %v2704, %v3569
      %v3827 = vmul.f32 %v2705, %v3574
      %v3828 = vmul.f32 %v2706, %v3574
      %v3829 = vmul.f32 %v2707, %v3579
      %v3830 = vmul.f32 %v2708, %v3579
      %v3831 = vmul.f32 %v2709, %v3584
      %v3832 = vmul.f32 %v2710, %v3584
      %v3833 = vmul.f32 %v2711, %v3589
      %v3834 = vmul.f32 %v2712, %v3589
      %v3835 = vmul.f32 %v2713, %v3594
      %v3836 = vmul.f32 %v2714, %v3594
      %v3837 = vmul.f32 %v2715, %v3599
      %v3838 = vmul.f32 %v2716, %v3599
      %v3839 = vmul.f32 %v2717, %v3604
      %v3840 = vmul.f32 %v2718, %v3604
      %v3841 = vmul.f32 %v2719, %v3609
      %v3842 = vmul.f32 %v2720, %v3609
      %v3843 = vmul.f32 %v2721, %v3614
      %v3844 = vmul.f32 %v2722, %v3614
      %v3845 = vmul.f32 %v2723, %v3619
      %v3846 = vmul.f32 %v2724, %v3619
      %v3847 = vmul.f32 %v2725, %v3624
      %v3848 = vmul.f32 %v2726, %v3624
      %v3849 = vmul.f32 %v2727, %v3629
      %v3850 = vmul.f32 %v2728, %v3629
      %v3851 = vmul.f32 %v2729, %v3634
      %v3852 = vmul.f32 %v2730, %v3634
      %v3853 = vmul.f32 %v2731, %v3639
      %v3854 = vmul.f32 %v2732, %v3639
      %v3855 = vmul.f32 %v2733, %v3644
      %v3856 = vmul.f32 %v2734, %v3644
      %v3857 = vmul.f32 %v2735, %v3649
      %v3858 = vmul.f32 %v2736, %v3649
      %v3859 = vmul.f32 %v2737, %v3654
      %v3860 = vmul.f32 %v2738, %v3654
      %v3861 = vmul.f32 %v2739, %v3659
      %v3862 = vmul.f32 %v2740, %v3659
      %v3863 = vmul.f32 %v2741, %v3664
      %v3864 = vmul.f32 %v2742, %v3664
      %v3865 = vmul.f32 %v2743, %v3669
      %v3866 = vmul.f32 %v2744, %v3669
      %v3867 = vmul.f32 %v2745, %v3674
      %v3868 = vmul.f32 %v2746, %v3674
      %v3869 = vmul.f32 %v2747, %v3679
      %v3870 = vmul.f32 %v2748, %v3679
      %v3871 = vmul.f32 %v2749, %v3684
      %v3872 = vmul.f32 %v2750, %v3684
      %v3873 = vmul.f32 %v2751, %v3689
      %v3874 = vmul.f32 %v2752, %v3689
      %v3875 = vmul.f32 %v2753, %v3694
      %v3876 = vmul.f32 %v2754, %v3694
      %v3877 = vmul.f32 %v2755, %v3699
      %v3878 = vmul.f32 %v2756, %v3699
      %v3879 = vmul.f32 %v2757, %v3704
      %v3880 = vmul.f32 %v2758, %v3704
      %v3881 = vmul.f32 %v2759, %v3709
      %v3882 = vmul.f32 %v2760, %v3709
      %v3883 = vmul.f32 %v2761, %v3714
      %v3884 = vmul.f32 %v2762, %v3714
      %v3885 = vmul.f32 %v2763, %v3719
      %v3886 = vmul.f32 %v2764, %v3719
      %v3887 = vmul.f32 %v2765, %v3724
      %v3888 = vmul.f32 %v2766, %v3724
      %v3889 = vmul.f32 %v2767, %v3729
      %v3890 = vmul.f32 %v2768, %v3729
      %v3891 = vmul.f32 %v2769, %v3734
      %v3892 = vmul.f32 %v2770, %v3734
      %v3893 = vmul.f32 %v2771, %v3739
      %v3894 = vmul.f32 %v2772, %v3739
      %v3895 = vmul.f32 %v2773, %v3744
      %v3896 = vmul.f32 %v2774, %v3744
      %v3897 = vmul.f32 %v2775, %v3749
      %v3898 = vmul.f32 %v2776, %v3749
      %v3899 = vmul.f32 %v2777, %v3754
      %v3900 = vmul.f32 %v2778, %v3754
      %v3901 = vmul.f32 %v2779, %v3759
      %v3902 = vmul.f32 %v2780, %v3759
      %v3903 = vmul.f32 %v2781, %v3764
      %v3904 = vmul.f32 %v2782, %v3764
      %v3905 = vmul.f32 %v2783, %v3769
      %v3906 = vmul.f32 %v2784, %v3769
      %v3907 = vmul.f32 %v2785, %v3774
      %v3908 = vmul.f32 %v2786, %v3774
      %v3909 = vmul.f32 %v2787, %v3779
      %v3910 = vmul.f32 %v2788, %v3779
      %v3911 = vmul.f32 %v2789, %v3784
      %v3912 = vmul.f32 %v2790, %v3784
      %v3913 = vmul.f32 %v2791, %v3789
      %v3914 = vmul.f32 %v2792, %v3789
      %v3915 = vmul.f32 %v2793, %v3794
      %v3916 = vmul.f32 %v2794, %v3794
      %v3917 = vmul.f32 %v2795, %v3799
      %v3918 = vmul.f32 %v2796, %v3799
      %v3919 = vmul.f32 %v2797, %v3804
      %v3920 = vmul.f32 %v2798, %v3804
      %v3921 = vmul.f32 %v2799, %v3809
      %v3922 = vmul.f32 %v2800, %v3809
      %v3923 = vadd.f32 %v3419, %v3811
      %v3924 = vadd.f32 %v3420, %v3812
      %v3925 = vadd.f32 %v3421, %v3813
      %v3926 = vadd.f32 %v3422, %v3814
      %v3927 = vadd.f32 %v3423, %v3815
      %v3928 = vadd.f32 %v3424, %v3816
      %v3929 = vadd.f32 %v3425, %v3817
      %v3930 = vadd.f32 %v3426, %v3818
      %v3931 = vadd.f32 %v3427, %v3819
      %v3932 = vadd.f32 %v3428, %v3820
      %v3933 = vadd.f32 %v3429, %v3821
      %v3934 = vadd.f32 %v3430, %v3822
      %v3935 = vadd.f32 %v3431, %v3823
      %v3936 = vadd.f32 %v3432, %v3824
      %v3937 = vadd.f32 %v3433, %v3825
      %v3938 = vadd.f32 %v3434, %v3826
      %v3939 = vadd.f32 %v3435, %v3827
      %v3940 = vadd.f32 %v3436, %v3828
      %v3941 = vadd.f32 %v3437, %v3829
      %v3942 = vadd.f32 %v3438, %v3830
      %v3943 = vadd.f32 %v3439, %v3831
      %v3944 = vadd.f32 %v3440, %v3832
      %v3945 = vadd.f32 %v3441, %v3833
      %v3946 = vadd.f32 %v3442, %v3834
      %v3947 = vadd.f32 %v3443, %v3835
      %v3948 = vadd.f32 %v3444, %v3836
      %v3949 = vadd.f32 %v3445, %v3837
      %v3950 = vadd.f32 %v3446, %v3838
      %v3951 = vadd.f32 %v3447, %v3839
      %v3952 = vadd.f32 %v3448, %v3840
      %v3953 = vadd.f32 %v3449, %v3841
      %v3954 = vadd.f32 %v3450, %v3842
      %v3955 = vadd.f32 %v3451, %v3843
      %v3956 = vadd.f32 %v3452, %v3844
      %v3957 = vadd.f32 %v3453, %v3845
      %v3958 = vadd.f32 %v3454, %v3846
      %v3959 = vadd.f32 %v3455, %v3847
      %v3960 = vadd.f32 %v3456, %v3848
      %v3961 = vadd.f32 %v3457, %v3849
      %v3962 = vadd.f32 %v3458, %v3850
      %v3963 = vadd.f32 %v3459, %v3851
      %v3964 = vadd.f32 %v3460, %v3852
      %v3965 = vadd.f32 %v3461, %v3853
      %v3966 = vadd.f32 %v3462, %v3854
      %v3967 = vadd.f32 %v3463, %v3855
      %v3968 = vadd.f32 %v3464, %v3856
      %v3969 = vadd.f32 %v3465, %v3857
      %v3970 = vadd.f32 %v3466, %v3858
      %v3971 = vadd.f32 %v3467, %v3859
      %v3972 = vadd.f32 %v3468, %v3860
      %v3973 = vadd.f32 %v3469, %v3861
      %v3974 = vadd.f32 %v3470, %v3862
      %v3975 = vadd.f32 %v3471, %v3863
      %v3976 = vadd.f32 %v3472, %v3864
      %v3977 = vadd.f32 %v3473, %v3865
      %v3978 = vadd.f32 %v3474, %v3866
      %v3979 = vadd.f32 %v3475, %v3867
      %v3980 = vadd.f32 %v3476, %v3868
      %v3981 = vadd.f32 %v3477, %v3869
      %v3982 = vadd.f32 %v3478, %v3870
      %v3983 = vadd.f32 %v3479, %v3871
      %v3984 = vadd.f32 %v3480, %v3872
      %v3985 = vadd.f32 %v3481, %v3873
      %v3986 = vadd.f32 %v3482, %v3874
      %v3987 = vadd.f32 %v3483, %v3875
      %v3988 = vadd.f32 %v3484, %v3876
      %v3989 = vadd.f32 %v3485, %v3877
      %v3990 = vadd.f32 %v3486, %v3878
      %v3991 = vadd.f32 %v3487, %v3879
      %v3992 = vadd.f32 %v3488, %v3880
      %v3993 = vadd.f32 %v3489, %v3881
      %v3994 = vadd.f32 %v3490, %v3882
      %v3995 = vadd.f32 %v3491, %v3883
      %v3996 = vadd.f32 %v3492, %v3884
      %v3997 = vadd.f32 %v3493, %v3885
      %v3998 = vadd.f32 %v3494, %v3886
      %v3999 = vadd.f32 %v3495, %v3887
      %v4000 = vadd.f32 %v3496, %v3888
      %v4001 = vadd.f32 %v3497, %v3889
      %v4002 = vadd.f32 %v3498, %v3890
      %v4003 = vadd.f32 %v3499, %v3891
      %v4004 = vadd.f32 %v3500, %v3892
      %v4005 = vadd.f32 %v3501, %v3893
      %v4006 = vadd.f32 %v3502, %v3894
      %v4007 = vadd.f32 %v3503, %v3895
      %v4008 = vadd.f32 %v3504, %v3896
      %v4009 = vadd.f32 %v3505, %v3897
      %v4010 = vadd.f32 %v3506, %v3898
      %v4011 = vadd.f32 %v3507, %v3899
      %v4012 = vadd.f32 %v3508, %v3900
      %v4013 = vadd.f32 %v3509, %v3901
      %v4014 = vadd.f32 %v3510, %v3902
      %v4015 = vadd.f32 %v3511, %v3903
      %v4016 = vadd.f32 %v3512, %v3904
      %v4017 = vadd.f32 %v3513, %v3905
      %v4018 = vadd.f32 %v3514, %v3906
      %v4019 = vadd.f32 %v3515, %v3907
      %v4020 = vadd.f32 %v3516, %v3908
      %v4021 = vadd.f32 %v3517, %v3909
      %v4022 = vadd.f32 %v3518, %v3910
      %v4023 = vadd.f32 %v3519, %v3911
      %v4024 = vadd.f32 %v3520, %v3912
      %v4025 = vadd.f32 %v3521, %v3913
      %v4026 = vadd.f32 %v3522, %v3914
      %v4027 = vadd.f32 %v3523, %v3915
      %v4028 = vadd.f32 %v3524, %v3916
      %v4029 = vadd.f32 %v3525, %v3917
      %v4030 = vadd.f32 %v3526, %v3918
      %v4031 = vadd.f32 %v3527, %v3919
      %v4032 = vadd.f32 %v3528, %v3920
      %v4033 = vadd.f32 %v3529, %v3921
      %v4034 = vadd.f32 %v3530, %v3922
      %4036 = vset.pattern.permute.xlu0 1
      %4037 = vperm.xlu0 %4036, %v3307
      %v4038 = vpop.permute.xlu0 %4037
      %4041 = vset.pattern.permute.xlu0 1
      %4042 = vperm.xlu0 %4041, %v3308
      %v4043 = vpop.permute.xlu0 %4042
      %4046 = vset.pattern.permute.xlu0 1
      %4047 = vperm.xlu0 %4046, %v3309
      %v4048 = vpop.permute.xlu0 %4047
      %4051 = vset.pattern.permute.xlu0 1
      %4052 = vperm.xlu0 %4051, %v3310
      %v4053 = vpop.permute.xlu0 %4052
      %4056 = vset.pattern.permute.xlu0 1
      %4057 = vperm.xlu0 %4056, %v3311
      %v4058 = vpop.permute.xlu0 %4057
      %4061 = vset.pattern.permute.xlu0 1
      %4062 = vperm.xlu0 %4061, %v3312
      %v4063 = vpop.permute.xlu0 %4062
      %4066 = vset.pattern.permute.xlu0 1
      %4067 = vperm.xlu0 %4066, %v3313
      %v4068 = vpop.permute.xlu0 %4067
      %4071 = vset.pattern.permute.xlu0 1
      %4072 = vperm.xlu0 %4071, %v3314
      %v4073 = vpop.permute.xlu0 %4072
      %4076 = vset.pattern.permute.xlu0 1
      %4077 = vperm.xlu0 %4076, %v3315
      %v4078 = vpop.permute.xlu0 %4077
      %4081 = vset.pattern.permute.xlu0 1
      %4082 = vperm.xlu0 %4081, %v3316
      %v4083 = vpop.permute.xlu0 %4082
      %4086 = vset.pattern.permute.xlu0 1
      %4087 = vperm.xlu0 %4086, %v3317
      %v4088 = vpop.permute.xlu0 %4087
      %4091 = vset.pattern.permute.xlu0 1
      %4092 = vperm.xlu0 %4091, %v3318
      %v4093 = vpop.permute.xlu0 %4092
      %4096 = vset.pattern.permute.xlu0 1
      %4097 = vperm.xlu0 %4096, %v3319
      %v4098 = vpop.permute.xlu0 %4097
      %4101 = vset.pattern.permute.xlu0 1
      %4102 = vperm.xlu0 %4101, %v3320
      %v4103 = vpop.permute.xlu0 %4102
      %4106 = vset.pattern.permute.xlu0 1
      %4107 = vperm.xlu0 %4106, %v3321
      %v4108 = vpop.permute.xlu0 %4107
      %4111 = vset.pattern.permute.xlu0 1
      %4112 = vperm.xlu0 %4111, %v3322
      %v4113 = vpop.permute.xlu0 %4112
      %4116 = vset.pattern.permute.xlu0 1
      %4117 = vperm.xlu0 %4116, %v3323
      %v4118 = vpop.permute.xlu0 %4117
      %4121 = vset.pattern.permute.xlu0 1
      %4122 = vperm.xlu0 %4121, %v3324
      %v4123 = vpop.permute.xlu0 %4122
      %4126 = vset.pattern.permute.xlu0 1
      %4127 = vperm.xlu0 %4126, %v3325
      %v4128 = vpop.permute.xlu0 %4127
      %4131 = vset.pattern.permute.xlu0 1
      %4132 = vperm.xlu0 %4131, %v3326
      %v4133 = vpop.permute.xlu0 %4132
      %4136 = vset.pattern.permute.xlu0 1
      %4137 = vperm.xlu0 %4136, %v3327
      %v4138 = vpop.permute.xlu0 %4137
      %4141 = vset.pattern.permute.xlu0 1
      %4142 = vperm.xlu0 %4141, %v3328
      %v4143 = vpop.permute.xlu0 %4142
      %4146 = vset.pattern.permute.xlu0 1
      %4147 = vperm.xlu0 %4146, %v3329
      %v4148 = vpop.permute.xlu0 %4147
      %4151 = vset.pattern.permute.xlu0 1
      %4152 = vperm.xlu0 %4151, %v3330
      %v4153 = vpop.permute.xlu0 %4152
      %4156 = vset.pattern.permute.xlu0 1
      %4157 = vperm.xlu0 %4156, %v3331
      %v4158 = vpop.permute.xlu0 %4157
      %4161 = vset.pattern.permute.xlu0 1
      %4162 = vperm.xlu0 %4161, %v3332
      %v4163 = vpop.permute.xlu0 %4162
      %4166 = vset.pattern.permute.xlu0 1
      %4167 = vperm.xlu0 %4166, %v3333
      %v4168 = vpop.permute.xlu0 %4167
      %4171 = vset.pattern.permute.xlu0 1
      %4172 = vperm.xlu0 %4171, %v3334
      %v4173 = vpop.permute.xlu0 %4172
      %4176 = vset.pattern.permute.xlu0 1
      %4177 = vperm.xlu0 %4176, %v3335
      %v4178 = vpop.permute.xlu0 %4177
      %4181 = vset.pattern.permute.xlu0 1
      %4182 = vperm.xlu0 %4181, %v3336
      %v4183 = vpop.permute.xlu0 %4182
      %4186 = vset.pattern.permute.xlu0 1
      %4187 = vperm.xlu0 %4186, %v3337
      %v4188 = vpop.permute.xlu0 %4187
      %4191 = vset.pattern.permute.xlu0 1
      %4192 = vperm.xlu0 %4191, %v3338
      %v4193 = vpop.permute.xlu0 %4192
      %4196 = vset.pattern.permute.xlu0 1
      %4197 = vperm.xlu0 %4196, %v3339
      %v4198 = vpop.permute.xlu0 %4197
      %4201 = vset.pattern.permute.xlu0 1
      %4202 = vperm.xlu0 %4201, %v3340
      %v4203 = vpop.permute.xlu0 %4202
      %4206 = vset.pattern.permute.xlu0 1
      %4207 = vperm.xlu0 %4206, %v3341
      %v4208 = vpop.permute.xlu0 %4207
      %4211 = vset.pattern.permute.xlu0 1
      %4212 = vperm.xlu0 %4211, %v3342
      %v4213 = vpop.permute.xlu0 %4212
      %4216 = vset.pattern.permute.xlu0 1
      %4217 = vperm.xlu0 %4216, %v3343
      %v4218 = vpop.permute.xlu0 %4217
      %4221 = vset.pattern.permute.xlu0 1
      %4222 = vperm.xlu0 %4221, %v3344
      %v4223 = vpop.permute.xlu0 %4222
      %4226 = vset.pattern.permute.xlu0 1
      %4227 = vperm.xlu0 %4226, %v3345
      %v4228 = vpop.permute.xlu0 %4227
      %4231 = vset.pattern.permute.xlu0 1
      %4232 = vperm.xlu0 %4231, %v3346
      %v4233 = vpop.permute.xlu0 %4232
      %4236 = vset.pattern.permute.xlu0 1
      %4237 = vperm.xlu0 %4236, %v3347
      %v4238 = vpop.permute.xlu0 %4237
      %4241 = vset.pattern.permute.xlu0 1
      %4242 = vperm.xlu0 %4241, %v3348
      %v4243 = vpop.permute.xlu0 %4242
      %4246 = vset.pattern.permute.xlu0 1
      %4247 = vperm.xlu0 %4246, %v3349
      %v4248 = vpop.permute.xlu0 %4247
      %4251 = vset.pattern.permute.xlu0 1
      %4252 = vperm.xlu0 %4251, %v3350
      %v4253 = vpop.permute.xlu0 %4252
      %4256 = vset.pattern.permute.xlu0 1
      %4257 = vperm.xlu0 %4256, %v3351
      %v4258 = vpop.permute.xlu0 %4257
      %4261 = vset.pattern.permute.xlu0 1
      %4262 = vperm.xlu0 %4261, %v3352
      %v4263 = vpop.permute.xlu0 %4262
      %4266 = vset.pattern.permute.xlu0 1
      %4267 = vperm.xlu0 %4266, %v3353
      %v4268 = vpop.permute.xlu0 %4267
      %4271 = vset.pattern.permute.xlu0 1
      %4272 = vperm.xlu0 %4271, %v3354
      %v4273 = vpop.permute.xlu0 %4272
      %4276 = vset.pattern.permute.xlu0 1
      %4277 = vperm.xlu0 %4276, %v3355
      %v4278 = vpop.permute.xlu0 %4277
      %4281 = vset.pattern.permute.xlu0 1
      %4282 = vperm.xlu0 %4281, %v3356
      %v4283 = vpop.permute.xlu0 %4282
      %4286 = vset.pattern.permute.xlu0 1
      %4287 = vperm.xlu0 %4286, %v3357
      %v4288 = vpop.permute.xlu0 %4287
      %4291 = vset.pattern.permute.xlu0 1
      %4292 = vperm.xlu0 %4291, %v3358
      %v4293 = vpop.permute.xlu0 %4292
      %4296 = vset.pattern.permute.xlu0 1
      %4297 = vperm.xlu0 %4296, %v3359
      %v4298 = vpop.permute.xlu0 %4297
      %4301 = vset.pattern.permute.xlu0 1
      %4302 = vperm.xlu0 %4301, %v3360
      %v4303 = vpop.permute.xlu0 %4302
      %4306 = vset.pattern.permute.xlu0 1
      %4307 = vperm.xlu0 %4306, %v3361
      %v4308 = vpop.permute.xlu0 %4307
      %4311 = vset.pattern.permute.xlu0 1
      %4312 = vperm.xlu0 %4311, %v3362
      %v4313 = vpop.permute.xlu0 %4312
      %v4315 = vadd.f32 %v3923, %v4038
      %v4316 = vadd.f32 %v3924, %v4038
      %v4317 = vadd.f32 %v3925, %v4043
      %v4318 = vadd.f32 %v3926, %v4043
      %v4319 = vadd.f32 %v3927, %v4048
      %v4320 = vadd.f32 %v3928, %v4048
      %v4321 = vadd.f32 %v3929, %v4053
      %v4322 = vadd.f32 %v3930, %v4053
      %v4323 = vadd.f32 %v3931, %v4058
      %v4324 = vadd.f32 %v3932, %v4058
      %v4325 = vadd.f32 %v3933, %v4063
      %v4326 = vadd.f32 %v3934, %v4063
      %v4327 = vadd.f32 %v3935, %v4068
      %v4328 = vadd.f32 %v3936, %v4068
      %v4329 = vadd.f32 %v3937, %v4073
      %v4330 = vadd.f32 %v3938, %v4073
      %v4331 = vadd.f32 %v3939, %v4078
      %v4332 = vadd.f32 %v3940, %v4078
      %v4333 = vadd.f32 %v3941, %v4083
      %v4334 = vadd.f32 %v3942, %v4083
      %v4335 = vadd.f32 %v3943, %v4088
      %v4336 = vadd.f32 %v3944, %v4088
      %v4337 = vadd.f32 %v3945, %v4093
      %v4338 = vadd.f32 %v3946, %v4093
      %v4339 = vadd.f32 %v3947, %v4098
      %v4340 = vadd.f32 %v3948, %v4098
      %v4341 = vadd.f32 %v3949, %v4103
      %v4342 = vadd.f32 %v3950, %v4103
      %v4343 = vadd.f32 %v3951, %v4108
      %v4344 = vadd.f32 %v3952, %v4108
      %v4345 = vadd.f32 %v3953, %v4113
      %v4346 = vadd.f32 %v3954, %v4113
      %v4347 = vadd.f32 %v3955, %v4118
      %v4348 = vadd.f32 %v3956, %v4118
      %v4349 = vadd.f32 %v3957, %v4123
      %v4350 = vadd.f32 %v3958, %v4123
      %v4351 = vadd.f32 %v3959, %v4128
      %v4352 = vadd.f32 %v3960, %v4128
      %v4353 = vadd.f32 %v3961, %v4133
      %v4354 = vadd.f32 %v3962, %v4133
      %v4355 = vadd.f32 %v3963, %v4138
      %v4356 = vadd.f32 %v3964, %v4138
      %v4357 = vadd.f32 %v3965, %v4143
      %v4358 = vadd.f32 %v3966, %v4143
      %v4359 = vadd.f32 %v3967, %v4148
      %v4360 = vadd.f32 %v3968, %v4148
      %v4361 = vadd.f32 %v3969, %v4153
      %v4362 = vadd.f32 %v3970, %v4153
      %v4363 = vadd.f32 %v3971, %v4158
      %v4364 = vadd.f32 %v3972, %v4158
      %v4365 = vadd.f32 %v3973, %v4163
      %v4366 = vadd.f32 %v3974, %v4163
      %v4367 = vadd.f32 %v3975, %v4168
      %v4368 = vadd.f32 %v3976, %v4168
      %v4369 = vadd.f32 %v3977, %v4173
      %v4370 = vadd.f32 %v3978, %v4173
      %v4371 = vadd.f32 %v3979, %v4178
      %v4372 = vadd.f32 %v3980, %v4178
      %v4373 = vadd.f32 %v3981, %v4183
      %v4374 = vadd.f32 %v3982, %v4183
      %v4375 = vadd.f32 %v3983, %v4188
      %v4376 = vadd.f32 %v3984, %v4188
      %v4377 = vadd.f32 %v3985, %v4193
      %v4378 = vadd.f32 %v3986, %v4193
      %v4379 = vadd.f32 %v3987, %v4198
      %v4380 = vadd.f32 %v3988, %v4198
      %v4381 = vadd.f32 %v3989, %v4203
      %v4382 = vadd.f32 %v3990, %v4203
      %v4383 = vadd.f32 %v3991, %v4208
      %v4384 = vadd.f32 %v3992, %v4208
      %v4385 = vadd.f32 %v3993, %v4213
      %v4386 = vadd.f32 %v3994, %v4213
      %v4387 = vadd.f32 %v3995, %v4218
      %v4388 = vadd.f32 %v3996, %v4218
      %v4389 = vadd.f32 %v3997, %v4223
      %v4390 = vadd.f32 %v3998, %v4223
      %v4391 = vadd.f32 %v3999, %v4228
      %v4392 = vadd.f32 %v4000, %v4228
      %v4393 = vadd.f32 %v4001, %v4233
      %v4394 = vadd.f32 %v4002, %v4233
      %v4395 = vadd.f32 %v4003, %v4238
      %v4396 = vadd.f32 %v4004, %v4238
      %v4397 = vadd.f32 %v4005, %v4243
      %v4398 = vadd.f32 %v4006, %v4243
      %v4399 = vadd.f32 %v4007, %v4248
      %v4400 = vadd.f32 %v4008, %v4248
      %v4401 = vadd.f32 %v4009, %v4253
      %v4402 = vadd.f32 %v4010, %v4253
      %v4403 = vadd.f32 %v4011, %v4258
      %v4404 = vadd.f32 %v4012, %v4258
      %v4405 = vadd.f32 %v4013, %v4263
      %v4406 = vadd.f32 %v4014, %v4263
      %v4407 = vadd.f32 %v4015, %v4268
      %v4408 = vadd.f32 %v4016, %v4268
      %v4409 = vadd.f32 %v4017, %v4273
      %v4410 = vadd.f32 %v4018, %v4273
      %v4411 = vadd.f32 %v4019, %v4278
      %v4412 = vadd.f32 %v4020, %v4278
      %v4413 = vadd.f32 %v4021, %v4283
      %v4414 = vadd.f32 %v4022, %v4283
      %v4415 = vadd.f32 %v4023, %v4288
      %v4416 = vadd.f32 %v4024, %v4288
      %v4417 = vadd.f32 %v4025, %v4293
      %v4418 = vadd.f32 %v4026, %v4293
      %v4419 = vadd.f32 %v4027, %v4298
      %v4420 = vadd.f32 %v4028, %v4298
      %v4421 = vadd.f32 %v4029, %v4303
      %v4422 = vadd.f32 %v4030, %v4303
      %v4423 = vadd.f32 %v4031, %v4308
      %v4424 = vadd.f32 %v4032, %v4308
      %v4425 = vadd.f32 %v4033, %v4313
      %v4426 = vadd.f32 %v4034, %v4313
      %4427 = vst [vmem:[%s229] sm:$0xff] %v4315
      %4428 = vst.msk [vmem:[%s229 + $0x8] sm:$0xff] %vm2408, %v4316
      %4429 = vst [vmem:[%s229 + $0x10] sm:$0xff] %v4317
      %4430 = vst.msk [vmem:[%s229 + $0x18] sm:$0xff] %vm2408, %v4318
      %4431 = vst [vmem:[%s229 + $0x20] sm:$0xff] %v4319
      %4432 = vst.msk [vmem:[%s229 + $0x28] sm:$0xff] %vm2408, %v4320
      %4433 = vst [vmem:[%s229 + $0x30] sm:$0xff] %v4321
      %4434 = vst.msk [vmem:[%s229 + $0x38] sm:$0xff] %vm2408, %v4322
      %4435 = vst [vmem:[%s229 + $0x40] sm:$0xff] %v4323
      %4436 = vst.msk [vmem:[%s229 + $0x48] sm:$0xff] %vm2408, %v4324
      %4437 = vst [vmem:[%s229 + $0x50] sm:$0xff] %v4325
      %4438 = vst.msk [vmem:[%s229 + $0x58] sm:$0xff] %vm2408, %v4326
      %4439 = vst [vmem:[%s229 + $0x60] sm:$0xff] %v4327
      %4440 = vst.msk [vmem:[%s229 + $0x68] sm:$0xff] %vm2408, %v4328
      %4441 = vst [vmem:[%s229 + $0x70] sm:$0xff] %v4329
      %4442 = vst.msk [vmem:[%s229 + $0x78] sm:$0xff] %vm2408, %v4330
      %4443 = vst [vmem:[%s229 + $0x80] sm:$0xff] %v4331
      %4444 = vst.msk [vmem:[%s229 + $0x88] sm:$0xff] %vm2408, %v4332
      %4445 = vst [vmem:[%s229 + $0x90] sm:$0xff] %v4333
      %4446 = vst.msk [vmem:[%s229 + $0x98] sm:$0xff] %vm2408, %v4334
      %4447 = vst [vmem:[%s229 + $0xa0] sm:$0xff] %v4335
      %4448 = vst.msk [vmem:[%s229 + $0xa8] sm:$0xff] %vm2408, %v4336
      %4449 = vst [vmem:[%s229 + $0xb0] sm:$0xff] %v4337
      %4450 = vst.msk [vmem:[%s229 + $0xb8] sm:$0xff] %vm2408, %v4338
      %4451 = vst [vmem:[%s229 + $0xc0] sm:$0xff] %v4339
      %4452 = vst.msk [vmem:[%s229 + $0xc8] sm:$0xff] %vm2408, %v4340
      %4453 = vst [vmem:[%s229 + $0xd0] sm:$0xff] %v4341
      %4454 = vst.msk [vmem:[%s229 + $0xd8] sm:$0xff] %vm2408, %v4342
      %4455 = vst [vmem:[%s229 + $0xe0] sm:$0xff] %v4343
      %4456 = vst.msk [vmem:[%s229 + $0xe8] sm:$0xff] %vm2408, %v4344
      %4457 = vst [vmem:[%s229 + $0xf0] sm:$0xff] %v4345
      %4458 = vst.msk [vmem:[%s229 + $0xf8] sm:$0xff] %vm2408, %v4346
      %4459 = vst [vmem:[%s229 + $0x100] sm:$0xff] %v4347
      %4460 = vst.msk [vmem:[%s229 + $0x108] sm:$0xff] %vm2408, %v4348
      %4461 = vst [vmem:[%s229 + $0x110] sm:$0xff] %v4349
      %4462 = vst.msk [vmem:[%s229 + $0x118] sm:$0xff] %vm2408, %v4350
      %4463 = vst [vmem:[%s229 + $0x120] sm:$0xff] %v4351
      %4464 = vst.msk [vmem:[%s229 + $0x128] sm:$0xff] %vm2408, %v4352
      %4465 = vst [vmem:[%s229 + $0x130] sm:$0xff] %v4353
      %4466 = vst.msk [vmem:[%s229 + $0x138] sm:$0xff] %vm2408, %v4354
      %4467 = vst [vmem:[%s229 + $0x140] sm:$0xff] %v4355
      %4468 = vst.msk [vmem:[%s229 + $0x148] sm:$0xff] %vm2408, %v4356
      %4469 = vst [vmem:[%s229 + $0x150] sm:$0xff] %v4357
      %4470 = vst.msk [vmem:[%s229 + $0x158] sm:$0xff] %vm2408, %v4358
      %4471 = vst [vmem:[%s229 + $0x160] sm:$0xff] %v4359
      %4472 = vst.msk [vmem:[%s229 + $0x168] sm:$0xff] %vm2408, %v4360
      %4473 = vst [vmem:[%s229 + $0x170] sm:$0xff] %v4361
      %4474 = vst.msk [vmem:[%s229 + $0x178] sm:$0xff] %vm2408, %v4362
      %4475 = vst [vmem:[%s229 + $0x180] sm:$0xff] %v4363
      %4476 = vst.msk [vmem:[%s229 + $0x188] sm:$0xff] %vm2408, %v4364
      %4477 = vst [vmem:[%s229 + $0x190] sm:$0xff] %v4365
      %4478 = vst.msk [vmem:[%s229 + $0x198] sm:$0xff] %vm2408, %v4366
      %4479 = vst [vmem:[%s229 + $0x1a0] sm:$0xff] %v4367
      %4480 = vst.msk [vmem:[%s229 + $0x1a8] sm:$0xff] %vm2408, %v4368
      %4481 = vst [vmem:[%s229 + $0x1b0] sm:$0xff] %v4369
      %4482 = vst.msk [vmem:[%s229 + $0x1b8] sm:$0xff] %vm2408, %v4370
      %4483 = vst [vmem:[%s229 + $0x1c0] sm:$0xff] %v4371
      %4484 = vst.msk [vmem:[%s229 + $0x1c8] sm:$0xff] %vm2408, %v4372
      %4485 = vst [vmem:[%s229 + $0x1d0] sm:$0xff] %v4373
      %4486 = vst.msk [vmem:[%s229 + $0x1d8] sm:$0xff] %vm2408, %v4374
      %4487 = vst [vmem:[%s229 + $0x1e0] sm:$0xff] %v4375
      %4488 = vst.msk [vmem:[%s229 + $0x1e8] sm:$0xff] %vm2408, %v4376
      %4489 = vst [vmem:[%s229 + $0x1f0] sm:$0xff] %v4377
      %4490 = vst.msk [vmem:[%s229 + $0x1f8] sm:$0xff] %vm2408, %v4378
      %4491 = vst [vmem:[%s229 + $0x200] sm:$0xff] %v4379
      %4492 = vst.msk [vmem:[%s229 + $0x208] sm:$0xff] %vm2408, %v4380
      %4493 = vst [vmem:[%s229 + $0x210] sm:$0xff] %v4381
      %4494 = vst.msk [vmem:[%s229 + $0x218] sm:$0xff] %vm2408, %v4382
      %4495 = vst [vmem:[%s229 + $0x220] sm:$0xff] %v4383
      %4496 = vst.msk [vmem:[%s229 + $0x228] sm:$0xff] %vm2408, %v4384
      %4497 = vst [vmem:[%s229 + $0x230] sm:$0xff] %v4385
      %4498 = vst.msk [vmem:[%s229 + $0x238] sm:$0xff] %vm2408, %v4386
      %4499 = vst [vmem:[%s229 + $0x240] sm:$0xff] %v4387
      %4500 = vst.msk [vmem:[%s229 + $0x248] sm:$0xff] %vm2408, %v4388
      %4501 = vst [vmem:[%s229 + $0x250] sm:$0xff] %v4389
      %4502 = vst.msk [vmem:[%s229 + $0x258] sm:$0xff] %vm2408, %v4390
      %4503 = vst [vmem:[%s229 + $0x260] sm:$0xff] %v4391
      %4504 = vst.msk [vmem:[%s229 + $0x268] sm:$0xff] %vm2408, %v4392
      %4505 = vst [vmem:[%s229 + $0x270] sm:$0xff] %v4393
      %4506 = vst.msk [vmem:[%s229 + $0x278] sm:$0xff] %vm2408, %v4394
      %4507 = vst [vmem:[%s229 + $0x280] sm:$0xff] %v4395
      %4508 = vst.msk [vmem:[%s229 + $0x288] sm:$0xff] %vm2408, %v4396
      %4509 = vst [vmem:[%s229 + $0x290] sm:$0xff] %v4397
      %4510 = vst.msk [vmem:[%s229 + $0x298] sm:$0xff] %vm2408, %v4398
      %4511 = vst [vmem:[%s229 + $0x2a0] sm:$0xff] %v4399
      %4512 = vst.msk [vmem:[%s229 + $0x2a8] sm:$0xff] %vm2408, %v4400
      %4513 = vst [vmem:[%s229 + $0x2b0] sm:$0xff] %v4401
      %4514 = vst.msk [vmem:[%s229 + $0x2b8] sm:$0xff] %vm2408, %v4402
      %4515 = vst [vmem:[%s229 + $0x2c0] sm:$0xff] %v4403
      %4516 = vst.msk [vmem:[%s229 + $0x2c8] sm:$0xff] %vm2408, %v4404
      %4517 = vst [vmem:[%s229 + $0x2d0] sm:$0xff] %v4405
      %4518 = vst.msk [vmem:[%s229 + $0x2d8] sm:$0xff] %vm2408, %v4406
      %4519 = vst [vmem:[%s229 + $0x2e0] sm:$0xff] %v4407
      %4520 = vst.msk [vmem:[%s229 + $0x2e8] sm:$0xff] %vm2408, %v4408
      %4521 = vst [vmem:[%s229 + $0x2f0] sm:$0xff] %v4409
      %4522 = vst.msk [vmem:[%s229 + $0x2f8] sm:$0xff] %vm2408, %v4410
      %4523 = vst [vmem:[%s229 + $0x300] sm:$0xff] %v4411
      %4524 = vst.msk [vmem:[%s229 + $0x308] sm:$0xff] %vm2408, %v4412
      %4525 = vst [vmem:[%s229 + $0x310] sm:$0xff] %v4413
      %4526 = vst.msk [vmem:[%s229 + $0x318] sm:$0xff] %vm2408, %v4414
      %4527 = vst [vmem:[%s229 + $0x320] sm:$0xff] %v4415
      %4528 = vst.msk [vmem:[%s229 + $0x328] sm:$0xff] %vm2408, %v4416
      %4529 = vst [vmem:[%s229 + $0x330] sm:$0xff] %v4417
      %4530 = vst.msk [vmem:[%s229 + $0x338] sm:$0xff] %vm2408, %v4418
      %4531 = vst [vmem:[%s229 + $0x340] sm:$0xff] %v4419
      %4532 = vst.msk [vmem:[%s229 + $0x348] sm:$0xff] %vm2408, %v4420
      %4533 = vst [vmem:[%s229 + $0x350] sm:$0xff] %v4421
      %4534 = vst.msk [vmem:[%s229 + $0x358] sm:$0xff] %vm2408, %v4422
      %4535 = vst [vmem:[%s229 + $0x360] sm:$0xff] %v4423
      %4536 = vst.msk [vmem:[%s229 + $0x368] sm:$0xff] %vm2408, %v4424
      %4537 = vst [vmem:[%s229 + $0x370] sm:$0xff] %v4425
      %4538 = vst.msk [vmem:[%s229 + $0x378] sm:$0xff] %vm2408, %v4426
      %s4539 = smul.u32 56, %s15
      %p4540 = scmp.lt.s32.totalorder %s4539, 111
      %s4541 = scalar_select %p4540, %s4539, 111
      %s4542 = smul.addr %s4541, 2
      %s4543 = smul.addr %s4542, 8
      %s4544 = scalar_lea.vmem %s4, %s4543
      // Predicated region
      $region37: #{tpu_custom_call.1} parent=35 // pred_check
        %p4545 = pneg %p127
      $region38: #{tpu_custom_call.1} parent=35 // pred_check_branch
        %4547 = sbr.rel (%p4545) target = $region40
      $region39: #{tpu_custom_call.1} parent=35 // pred_region
        %s4548 = smul.u32 56, %s15
      $region40: #{tpu_custom_call.1} parent=35 // pred_fallthru
        _
    $region36: #{tpu_custom_call.1} parent=5 // pred_fallthru
      _
    %p4549 = scmp.le.s32.totalorder 2, %s10
    // Predicated region
    $region41: #{tpu_custom_call.1} parent=5 // pred_check
      %p4550 = pneg %p4549
    $region42: #{tpu_custom_call.1} parent=5 // pred_check_branch
      %4552 = sbr.rel (%p4550) target = $region44
    $region43: #{tpu_custom_call.1} parent=5 // pred_region
      %s4553 = ssub.s32 %s10, 2
      // Predicated region
      $region45: #{tpu_custom_call.1} parent=43 // pred_check
        %p4554 = pneg %p133
      $region46: #{tpu_custom_call.1} parent=43 // pred_check_branch
        %4556 = sbr.rel (%p4554) target = $region48
      $region47: #{tpu_custom_call.1} parent=43 // pred_region
        %s4557 = smul.u32 56, %s16
        %p4558 = scmp.lt.s32.totalorder %s4557, 111
        %s4559 = scalar_select %p4558, %s4557, 111
        %s4560 = smul.addr %s4559, 2
        %s4561 = smul.addr %s4560, 8
        %s4562 = scalar_lea.vmem %s4, %s4561
      $region48: #{tpu_custom_call.1} parent=43 // pred_fallthru
        _
    $region44: #{tpu_custom_call.1} parent=5 // pred_fallthru
      _
  $region6: #{tpu_custom_call.1} parent=0 // loop_footer
    %s14 = sadd.s32 1, %s10
  $region7: #{tpu_custom_call.1} parent=0 // loop_footer_branch
    %9 = sbr.rel target = $region3
  $region8: #{tpu_custom_call.1} parent=0 // loop_exit
    _

</llo_original>
